<compile_context>
chip_gen: v5e
topology: v5e:2x2
jax: 0.10.0
libtpu: 0.0.40
codegen_flags: <defaults>
</compile_context>

<pallas_src>
import functools

import numpy as np
import jax
import jax.numpy as jnp
from jax.experimental import pallas as pl
from jax.experimental.pallas import tpu as pltpu


def _round_up(x, m):
    return ((x + m - 1) // m) * m


# Worst-case per-call VMEM use below is ~16 MiB; 48 MiB is safe headroom on every
# generation including v7x (64 MiB physical per TensorCore).
_VMEM_LIMIT = 48 * 1024 * 1024


# ----------------------------------------------------------------------------
# Pallas kernels
# ----------------------------------------------------------------------------

def _mm_bias_relu_kernel(x_ref, w_ref, b_ref, o_ref):
    # x: (TM, K) bf16   w: (K, TN) bf16   b: (1, TN) f32   -> o: (TM, TN) bf16
    # bf16 operands on the MXU, f32 accumulation; bias add + ReLU stay in f32.
    y = jnp.dot(x_ref[...], w_ref[...], preferred_element_type=jnp.float32)
    y = y + b_ref[...]
    o_ref[...] = jnp.maximum(y, 0.0).astype(o_ref.dtype)


def _max3x3_valid_kernel(x_ref, o_ref):
    # 3x3 stride-1 VALID max pool, separable: column max then row max (4 terms
    # instead of 8 shifted whole-map copies).  Whole map resident in VMEM.
    x = x_ref[...]
    OH, OW = o_ref.shape[1], o_ref.shape[2]
    col = jnp.maximum(jnp.maximum(x[:, :, 0:OW, :], x[:, :, 1:OW + 1, :]),
                      x[:, :, 2:OW + 2, :])
    o_ref[...] = jnp.maximum(jnp.maximum(col[:, 0:OH, :, :], col[:, 1:OH + 1, :, :]),
                             col[:, 2:OH + 2, :, :])


def _avg3x3_valid_kernel(x_ref, o_ref):
    # 3x3 stride-1 VALID avg pool (input already zero padded; dividing by 9 matches
    # F.avg_pool2d's count_include_pad=True).  Separable sum, f32 accumulation.
    x = x_ref[...].astype(jnp.float32)
    OH, OW = o_ref.shape[1], o_ref.shape[2]
    col = x[:, :, 0:OW, :] + x[:, :, 1:OW + 1, :] + x[:, :, 2:OW + 2, :]
    acc = col[:, 0:OH, :, :] + col[:, 1:OH + 1, :, :] + col[:, 2:OH + 2, :, :]
    o_ref[...] = (acc * (1.0 / 9.0)).astype(o_ref.dtype)


def _head_kernel(x_ref, w_ref, b_ref, o_ref):
    # x: (N, 64, 2048) bf16.  avg_pool2d(8) over an 8x8 map == mean over HW.
    # pos2 / qtn2 are fused into one (2048, 128)-padded weight; outputs stay f32.
    f = jnp.mean(x_ref[...].astype(jnp.float32), axis=1)          # (N, 2048) f32
    y = jnp.dot(f.astype(jnp.bfloat16), w_ref[...],
                preferred_element_type=jnp.float32)
    o_ref[...] = y + b_ref[...]


# ----------------------------------------------------------------------------
# Pallas wrappers
# ----------------------------------------------------------------------------

def _matmul_tiling(M, K, Cout):
    """Pick (tm, tn, nm, nn): big M tiles (16-multiples for bf16 packing), 256-wide
    N tiles for the v6e/v7x MXU when Cout divides, and >=2 grid blocks whenever
    possible so both v7x TensorCores get work."""
    if K <= 640:
        tm = 4096
    elif K <= 1344:
        tm = 2048
    elif K <= 2688:
        tm = 1024
    else:
        tm = 512
    tm = min(tm, _round_up(M, 16))

    if Cout > 256 and Cout % 256 == 0:
        tn = 256                        # full MXU column width on v6e/v7x
    elif Cout > 128 and Cout % 128 == 0 and M > 512:
        tn = 128
    else:
        tn = Cout                       # tiny-M or non-dividing Cout: one lane block

    nm = -(-M // tm)
    nn = Cout // tn
    if nm == 1 and nn == 1 and M >= 32:
        # Guarantee >=2 parallel grid blocks so the second v7x TensorCore isn't idle.
        tm = _round_up(-(-M // 2), 16)
        nm = -(-M // tm)
    return tm, tn, nm, nn


def _pallas_matmul_bias_relu(patches, w, b):
    """(M, K)bf16 @ (K, Cout)bf16 + b(f32), then ReLU, tiled over (M, N) on the MXU."""
    M, K = patches.shape
    _, Cout = w.shape
    tm, tn, nm, nn = _matmul_tiling(M, K, Cout)
    cost = pl.CostEstimate(
        flops=2 * M * K * Cout,
        transcendentals=0,
        bytes_accessed=M * K * 2 + nm * K * Cout * 2 + M * Cout * 2 + 4 * Cout,
    )
    return pl.pallas_call(
        _mm_bias_relu_kernel,
        out_shape=jax.ShapeDtypeStruct((M, Cout), jnp.bfloat16),
        grid=(nm, nn),
        in_specs=[
            pl.BlockSpec((tm, K), lambda i, j: (i, 0)),     # K kept resident (full)
            pl.BlockSpec((K, tn), lambda i, j: (0, j)),
            pl.BlockSpec((1, tn), lambda i, j: (0, j)),
        ],
        out_specs=pl.BlockSpec((tm, tn), lambda i, j: (i, j)),
        compiler_params=pltpu.CompilerParams(
            dimension_semantics=("parallel", "parallel"),
            vmem_limit_bytes=_VMEM_LIMIT),
        cost_estimate=cost,
    )(patches, w, b)


@functools.partial(jax.jit, static_argnames=("kh", "kw", "sh", "sw", "ph", "pw"))
def _conv_bn_relu(x, w, b, *, kh, kw, sh, sw, ph, pw):
    """BasicConv2d (conv + folded BN + ReLU). x is NHWC bf16, output NHWC bf16."""
    N, H, W, C = x.shape
    OH = (H + 2 * ph - kh) // sh + 1
    OW = (W + 2 * pw - kw) // sw + 1
    if kh == 1 and kw == 1 and sh == 1 and sw == 1 and ph == 0 and pw == 0:
        # 1x1 conv: the NHWC activation *is* the patch matrix -> zero-copy reshape.
        patches = x.reshape(N * H * W, C)
    else:
        # TODO(synk): fully fusing patch extraction into the matmul kernel (halo reads
        # + in-kernel tap loop) would remove this single im2col materialization too.
        xpad = jnp.pad(x, ((0, 0), (ph, ph), (pw, pw), (0, 0)))
        cols = [xpad[:, i:i + sh * OH:sh, j:j + sw * OW:sw, :]
                for i in range(kh) for j in range(kw)]
        # patch feature ordering = (kh, kw, cin), matching the weight matrix layout;
        # no extra pad of the patch matrix (ragged grid handles uneven M).
        patches = jnp.stack(cols, axis=3).reshape(N * OH * OW, kh * kw * C)
    y = _pallas_matmul_bias_relu(patches, w, b)
    return y.reshape(N, OH, OW, -1)


def conv(x, p, stride=(1, 1), pad=(0, 0)):
    kh, kw = p["k"]
    return _conv_bn_relu(x, p["w"], p["b"], kh=kh, kw=kw,
                         sh=stride[0], sw=stride[1], ph=pad[0], pw=pad[1])


@jax.jit
def _avg_pool_3x3_s1_p1(x):
    """3x3 avg pool, stride 1, padding 1 (count_include_pad=True), fused in VMEM."""
    N, H, W, C = x.shape
    xpad = jnp.pad(x, ((0, 0), (1, 1), (1, 1), (0, 0)))
    return pl.pallas_call(
        _avg3x3_valid_kernel,
        out_shape=jax.ShapeDtypeStruct((N, H, W, C), x.dtype),
        compiler_params=pltpu.CompilerParams(vmem_limit_bytes=_VMEM_LIMIT),
    )(xpad)


@jax.jit
def _max_pool_3x3_s2(x):
    """3x3 max pool, stride 2, no padding == stride-1 valid max pool + subsample."""
    N, H, W, C = x.shape
    y = pl.pallas_call(
        _max3x3_valid_kernel,
        out_shape=jax.ShapeDtypeStruct((N, H - 2, W - 2, C), x.dtype),
        compiler_params=pltpu.CompilerParams(vmem_limit_bytes=_VMEM_LIMIT),
    )(x)
    return y[:, ::2, ::2, :]


@jax.jit
def _head(x, w, b):
    """avg_pool2d(8) + flatten + fused pos2/qtn2 Linear layers in one kernel."""
    N = x.shape[0]
    xf = x.reshape(N, 64, 2048)
    out = pl.pallas_call(
        _head_kernel,
        out_shape=jax.ShapeDtypeStruct((N, 128), jnp.float32),
        compiler_params=pltpu.CompilerParams(vmem_limit_bytes=_VMEM_LIMIT),
    )(xf, w, b)
    return out[:, :3], out[:, 3:7]


# ----------------------------------------------------------------------------
# Deterministic parameter construction (synthetic, BN folded to eval-mode affine)
# ----------------------------------------------------------------------------

class _KeyGen:
    def __init__(self, key):
        self._key = key

    def __call__(self):
        self._key, k = jax.random.split(self._key)
        return k


def _make_conv_params(key, cin, cout, kh, kw):
    kw_, kg_, kbeta_, km_, kv_ = jax.random.split(key, 5)
    fan_in = cin * kh * kw
    w = jax.random.normal(kw_, (kh, kw, cin, cout), jnp.float32) * np.sqrt(2.0 / fan_in)
    gamma = 1.0 + 0.1 * jax.random.normal(kg_, (cout,), jnp.float32)
    beta = 0.1 * jax.random.normal(kbeta_, (cout,), jnp.float32)
    mean = 0.05 * jax.random.normal(km_, (cout,), jnp.float32)
    var = 1.0 + 0.1 * jax.random.uniform(kv_, (cout,), jnp.float32)
    scale = gamma / jnp.sqrt(var + 1e-3)          # BatchNorm2d eps=0.001 (Inception V3)
    bias = (beta - mean * scale).reshape(1, cout)                     # pre-shaped f32
    wmat = (w * scale).reshape(kh * kw * cin, cout).astype(jnp.bfloat16)   # BN folded
    return {"w": wmat, "b": bias, "k": (kh, kw)}


def _fuse_1x1(parts):
    """Concatenate several BN-folded 1x1 convs (same input) along Cout -> one matmul."""
    return {"w": jnp.concatenate([p["w"] for p in parts], axis=1),
            "b": jnp.concatenate([p["b"] for p in parts], axis=1),
            "k": (1, 1)}


def _make_inception_a(kg, cin, pool_features):
    b1 = _make_conv_params(kg(), cin, 64, 1, 1)
    b5_1 = _make_conv_params(kg(), cin, 48, 1, 1)
    b3_1 = _make_conv_params(kg(), cin, 64, 1, 1)
    return {
        "in1x1": _fuse_1x1([b1, b5_1, b3_1]),   # fused branch-entry 1x1 convs
        "split": (64, 112),                      # b1 | b5 | b3 channel offsets
        "b5_2": _make_conv_params(kg(), 48, 64, 5, 5),
        "b3_2": _make_conv_params(kg(), 64, 96, 3, 3),
        "b3_3": _make_conv_params(kg(), 96, 96, 3, 3),
        "bp":   _make_conv_params(kg(), cin, pool_features, 1, 1),
    }


def _make_inception_b(kg, cin):
    return {
        "b3":    _make_conv_params(kg(), cin, 384, 3, 3),
        "b3d_1": _make_conv_params(kg(), cin, 64, 1, 1),
        "b3d_2": _make_conv_params(kg(), 64, 96, 3, 3),
        "b3d_3": _make_conv_params(kg(), 96, 96, 3, 3),
    }


def _make_inception_c(kg, cin, c7):
    b1 = _make_conv_params(kg(), cin, 192, 1, 1)
    b7_1 = _make_conv_params(kg(), cin, c7, 1, 1)
    b7d_1 = _make_conv_params(kg(), cin, c7, 1, 1)
    return {
        "in1x1": _fuse_1x1([b1, b7_1, b7d_1]),
        "split": (192, 192 + c7),
        "b7_2":  _make_conv_params(kg(), c7, c7, 1, 7),
        "b7_3":  _make_conv_params(kg(), c7, 192, 7, 1),
        "b7d_2": _make_conv_params(kg(), c7, c7, 7, 1),
        "b7d_3": _make_conv_params(kg(), c7, c7, 1, 7),
        "b7d_4": _make_conv_params(kg(), c7, c7, 7, 1),
        "b7d_5": _make_conv_params(kg(), c7, 192, 1, 7),
        "bp":    _make_conv_params(kg(), cin, 192, 1, 1),
    }


def _make_inception_d(kg, cin):
    b3_1 = _make_conv_params(kg(), cin, 192, 1, 1)
    b7_1 = _make_conv_params(kg(), cin, 192, 1, 1)
    return {
        "in1x1": _fuse_1x1([b3_1, b7_1]),
        "split": (192,),
        "b3_2": _make_conv_params(kg(), 192, 320, 3, 3),
        "b7_2": _make_conv_params(kg(), 192, 192, 1, 7),
        "b7_3": _make_conv_params(kg(), 192, 192, 7, 1),
        "b7_4": _make_conv_params(kg(), 192, 192, 3, 3),
    }


def _make_inception_e(kg, cin):
    b1 = _make_conv_params(kg(), cin, 320, 1, 1)
    b3_1 = _make_conv_params(kg(), cin, 384, 1, 1)
    b3d_1 = _make_conv_params(kg(), cin, 448, 1, 1)
    return {
        "in1x1": _fuse_1x1([b1, b3_1, b3d_1]),
        "split": (320, 704),
        "b3_2a":  _make_conv_params(kg(), 384, 384, 1, 3),
        "b3_2b":  _make_conv_params(kg(), 384, 384, 3, 1),
        "b3d_2":  _make_conv_params(kg(), 448, 384, 3, 3),
        "b3d_3a": _make_conv_params(kg(), 384, 384, 1, 3),
        "b3d_3b": _make_conv_params(kg(), 384, 384, 3, 1),
        "bp":     _make_conv_params(kg(), cin, 192, 1, 1),
    }


def init_googlenet_params(key):
    kg = _KeyGen(key)
    P = {}
    P["c1a"] = _make_conv_params(kg(), 3, 32, 3, 3)
    P["c2a"] = _make_conv_params(kg(), 32, 32, 3, 3)
    P["c2b"] = _make_conv_params(kg(), 32, 64, 3, 3)
    P["c3b"] = _make_conv_params(kg(), 64, 80, 1, 1)
    P["c4a"] = _make_conv_params(kg(), 80, 192, 3, 3)
    P["m5b"] = _make_inception_a(kg, 192, 32)
    P["m5c"] = _make_inception_a(kg, 256, 64)
    P["m5d"] = _make_inception_a(kg, 288, 64)
    P["m6a"] = _make_inception_b(kg, 288)
    P["m6b"] = _make_inception_c(kg, 768, 128)
    P["m6c"] = _make_inception_c(kg, 768, 160)
    P["m6d"] = _make_inception_c(kg, 768, 160)
    P["m6e"] = _make_inception_c(kg, 768, 192)
    P["m7a"] = _make_inception_d(kg, 768)
    P["m7b"] = _make_inception_e(kg, 1280)
    P["m7c"] = _make_inception_e(kg, 2048)
    # pos2 = Linear(2048, 3), qtn2 = Linear(2048, 4); fused into one head weight,
    # padded once at init to one 128-lane tile (no per-forward padding).
    pos_w = jax.random.normal(kg(), (2048, 3), jnp.float32) / np.sqrt(2048.0)
    pos_b = 0.01 * jax.random.normal(kg(), (3,), jnp.float32)
    qtn_w = jax.random.normal(kg(), (2048, 4), jnp.float32) / np.sqrt(2048.0)
    qtn_b = 0.01 * jax.random.normal(kg(), (4,), jnp.float32)
    head_w = jnp.pad(jnp.concatenate([pos_w, qtn_w], axis=1), ((0, 0), (0, 121)))
    head_b = jnp.pad(jnp.concatenate([pos_b, qtn_b], axis=0), (0, 121)).reshape(1, 128)
    P["head_w"] = head_w.astype(jnp.bfloat16)
    P["head_b"] = head_b
    return P


# ----------------------------------------------------------------------------
# Forward pass (mirrors GoogleNet.forward over the Inception-V3 trunk)
# ----------------------------------------------------------------------------

def _inception_a(x, P):
    f = conv(x, P["in1x1"])                       # fused b1 / b5_1 / b3_1 1x1 convs
    s0, s1 = P["split"]
    b1 = f[..., :s0]
    b5 = conv(f[..., s0:s1], P["b5_2"], pad=(2, 2))
    b3 = conv(f[..., s1:], P["b3_2"], pad=(1, 1))
    b3 = conv(b3, P["b3_3"], pad=(1, 1))
    bp = conv(_avg_pool_3x3_s1_p1(x), P["bp"])
    return jnp.concatenate([b1, b5, b3, bp], axis=-1)


def _inception_b(x, P):
    b3 = conv(x, P["b3"], stride=(2, 2))
    bd = conv(x, P["b3d_1"])
    bd = conv(bd, P["b3d_2"], pad=(1, 1))
    bd = conv(bd, P["b3d_3"], stride=(2, 2))
    bp = _max_pool_3x3_s2(x)
    return jnp.concatenate([b3, bd, bp], axis=-1)


def _inception_c(x, P):
    f = conv(x, P["in1x1"])                       # fused b1 / b7_1 / b7d_1 1x1 convs
    s0, s1 = P["split"]
    b1 = f[..., :s0]
    b7 = conv(f[..., s0:s1], P["b7_2"], pad=(0, 3))
    b7 = conv(b7, P["b7_3"], pad=(3, 0))
    bd = f[..., s1:]
    bd = conv(bd, P["b7d_2"], pad=(3, 0))
    bd = conv(bd, P["b7d_3"], pad=(0, 3))
    bd = conv(bd, P["b7d_4"], pad=(3, 0))
    bd = conv(bd, P["b7d_5"], pad=(0, 3))
    bp = conv(_avg_pool_3x3_s1_p1(x), P["bp"])
    return jnp.concatenate([b1, b7, bd, bp], axis=-1)


def _inception_d(x, P):
    f = conv(x, P["in1x1"])                       # fused b3_1 / b7_1 1x1 convs
    s0 = P["split"][0]
    b3 = conv(f[..., :s0], P["b3_2"], stride=(2, 2))
    b7 = conv(f[..., s0:], P["b7_2"], pad=(0, 3))
    b7 = conv(b7, P["b7_3"], pad=(3, 0))
    b7 = conv(b7, P["b7_4"], stride=(2, 2))
    bp = _max_pool_3x3_s2(x)
    return jnp.concatenate([b3, b7, bp], axis=-1)


def _inception_e(x, P):
    f = conv(x, P["in1x1"])                       # fused b1 / b3_1 / b3d_1 1x1 convs
    s0, s1 = P["split"]
    b1 = f[..., :s0]
    b3in = f[..., s0:s1]
    b3 = jnp.concatenate([conv(b3in, P["b3_2a"], pad=(0, 1)),
                          conv(b3in, P["b3_2b"], pad=(1, 0))], axis=-1)
    bd = conv(f[..., s1:], P["b3d_2"], pad=(1, 1))
    bd = jnp.concatenate([conv(bd, P["b3d_3a"], pad=(0, 1)),
                          conv(bd, P["b3d_3b"], pad=(1, 0))], axis=-1)
    bp = conv(_avg_pool_3x3_s1_p1(x), P["bp"])
    return jnp.concatenate([b1, b3, bd, bp], axis=-1)


def googlenet_forward(x_nchw, P, dropout_rate=0.0):
    # layout: input NCHW (PyTorch convention) -> NHWC bf16 internally.
    x = jnp.transpose(x_nchw, (0, 2, 3, 1)).astype(jnp.bfloat16)
    x = conv(x, P["c1a"], stride=(2, 2))                     # Conv2d_1a_3x3
    x = conv(x, P["c2a"])                                    # Conv2d_2a_3x3
    x = conv(x, P["c2b"], pad=(1, 1))                        # Conv2d_2b_3x3
    x = _max_pool_3x3_s2(x)                                  # MaxPool2d(3, 2)
    x = conv(x, P["c3b"])                                    # Conv2d_3b_1x1
    x = conv(x, P["c4a"])                                    # Conv2d_4a_3x3
    x = _max_pool_3x3_s2(x)                                  # MaxPool2d(3, 2)
    x = _inception_a(x, P["m5b"])
    x = _inception_a(x, P["m5c"])
    x = _inception_a(x, P["m5d"])
    x = _inception_b(x, P["m6a"])
    x = _inception_c(x, P["m6b"])
    x = _inception_c(x, P["m6c"])
    x = _inception_c(x, P["m6d"])
    x = _inception_c(x, P["m6e"])
    x = _inception_d(x, P["m7a"])
    x = _inception_e(x, P["m7b"])
    x = _inception_e(x, P["m7c"])                            # -> (N, 8, 8, 2048)
    # F.avg_pool2d(x, 8) + F.dropout(p=0 -> identity) + flatten + pos2/qtn2, fused.
    # TODO(synk): dropout with p>0 and training-mode BatchNorm statistics are not modeled.
    pos, qtn = _head(x, P["head_w"], P["head_b"])
    return pos, qtn


if __name__ == "__main__":
    root = jax.random.PRNGKey(0)
    kp, kx = jax.random.split(root)
    params = init_googlenet_params(kp)
    # 299x299 is the smallest spatial size consistent with the module (2048x8x8
    # features are required by avg_pool2d(8) + Linear(2048, .)).  batch=1 keeps it small.
    x = jax.random.normal(kx, (1, 3, 299, 299), jnp.float32)
    pos, qtn = googlenet_forward(x, params)
    jax.block_until_ready((pos, qtn))
    assert pos.shape == (1, 3) and qtn.shape == (1, 4)
    assert bool(jnp.all(jnp.isfinite(pos))) and bool(jnp.all(jnp.isfinite(qtn)))
    print("KERNEL_OK")
</pallas_src>

<mosaic_0001>
module attributes {stable_mosaic.version = 11 : i64} {
  func.func @_mm_bias_relu_kernel(%arg0: i32, %arg1: i32, %arg2: memref<4096x27xbf16, #tpu.memory_space<vmem>>, %arg3: memref<27x32xbf16, #tpu.memory_space<vmem>>, %arg4: memref<1x32xf32, #tpu.memory_space<vmem>>, %arg5: memref<4096x32xbf16, #tpu.memory_space<vmem>>) attributes {dimension_semantics = [#tpu.dimension_semantics<parallel>, #tpu.dimension_semantics<parallel>], iteration_bounds = array<i64: 6, 1>, scalar_prefetch = 0 : i64, scratch_operands = 0 : i64, tpu.core_type = #tpu.core_type<tc>, window_params = [{transform_indices = @transform_0, window_bounds = array<i64: 4096, 27>}, {transform_indices = @transform_1, window_bounds = array<i64: 27, 32>}, {transform_indices = @transform_2, window_bounds = array<i64: 1, 32>}, {transform_indices = @transform_3, window_bounds = array<i64: 4096, 32>}]} {
    %c0 = arith.constant 0 : index
    %c0_0 = arith.constant 0 : index
    %0 = vector.load %arg2[%c0, %c0_0] : memref<4096x27xbf16, #tpu.memory_space<vmem>>, vector<4096x27xbf16>
    %c0_1 = arith.constant 0 : index
    %c0_2 = arith.constant 0 : index
    %1 = vector.load %arg3[%c0_1, %c0_2] : memref<27x32xbf16, #tpu.memory_space<vmem>>, vector<27x32xbf16>
    %cst = arith.constant dense<0.000000e+00> : vector<4096x32xf32>
    %2 = tpu.matmul %0, %1, %cst {dimension_numbers = #tpu.dot_dimension_numbers<[1], [0], [0], [1], [0, 0, 1, 1], [], []>} : vector<4096x27xbf16>, vector<27x32xbf16>, vector<4096x32xf32> -> vector<4096x32xf32>
    %c0_3 = arith.constant 0 : index
    %c0_4 = arith.constant 0 : index
    %3 = vector.load %arg4[%c0_3, %c0_4] : memref<1x32xf32, #tpu.memory_space<vmem>>, vector<1x32xf32>
    %4 = vector.broadcast %3 : vector<1x32xf32> to vector<4096x32xf32>
    %5 = arith.addf %2, %4 : vector<4096x32xf32>
    %cst_5 = arith.constant 0.000000e+00 : f32
    %6 = vector.broadcast %cst_5 : f32 to vector<4096x32xf32>
    %7 = arith.maximumf %5, %6 : vector<4096x32xf32>
    %8 = arith.truncf %7 : vector<4096x32xf32> to vector<4096x32xbf16>
    %c0_6 = arith.constant 0 : index
    %c0_7 = arith.constant 0 : index
    %9 = vector.load %arg5[%c0_6, %c0_7] : memref<4096x32xbf16, #tpu.memory_space<vmem>>, vector<4096x32xbf16>
    tpu.vector_store %arg5[%c0_6, %c0_7], %8 {strides = array<i32>} : memref<4096x32xbf16, #tpu.memory_space<vmem>>, vector<4096x32xbf16>,
    return
  }
  func.func @transform_0(%arg0: i32, %arg1: i32) -> (i32, i32) {
    %c0_i32 = arith.constant 0 : i32
    %c0_i32_0 = arith.constant 0 : i32
    return %arg0, %c0_i32 : i32, i32
  }
  func.func @transform_1(%arg0: i32, %arg1: i32) -> (i32, i32) {
    %c0_i32 = arith.constant 0 : i32
    %c0_i32_0 = arith.constant 0 : i32
    return %c0_i32, %arg1 : i32, i32
  }
  func.func @transform_2(%arg0: i32, %arg1: i32) -> (i32, i32) {
    %c0_i32 = arith.constant 0 : i32
    %c0_i32_0 = arith.constant 0 : i32
    return %c0_i32, %arg1 : i32, i32
  }
  func.func @transform_3(%arg0: i32, %arg1: i32) -> (i32, i32) {
    %c0_i32 = arith.constant 0 : i32
    return %arg0, %arg1 : i32, i32
  }
}

</mosaic_0001>

<llo_original>
// kernel: _conv_bn_relu.1
$region0: #{_conv_bn_relu.1}
  #allocation0 [shape = 'u32[]', space=smem, size = 0x4, offset = 0x4, fixed_abs, tag = 'smem constant byte address 0x4 - core index']
  #allocation1 [shape = 'u32[72,128]{1,0:T(1,128)}', space=vmem, size = 0x9000, scoped, tag = 'internal scratch']
  %s0 = inlined_call_operand.vmem [shape: bf16[22201,27], index: 0, kind: input, shape index: {}]
  %s1 = inlined_call_operand.vmem [shape: bf16[27,32], index: 1, kind: input, shape index: {}]
  %s2 = inlined_call_operand.vmem [shape: f32[1,32], index: 2, kind: input, shape index: {}]
  %s3 = inlined_call_operand.vmem [shape: bf16[22201,32], index: 3, kind: output, shape index: {}]
  %s4 = sld [smem:[#allocation0]]
  $region89: #{_conv_bn_relu.1} parent=0
    _
  %s6 = ssub.s32 1, %s4
  %s7 = scalar_select 0, %s6, %s4
  $region1: #{_conv_bn_relu.1} parent=0
    #allocation2 [shape = 'u8[2097152]{0}', space=vmem, size = 0x200000, scoped, tag = 'output window, operand 0']
    loop: start=0, step=1, limit=8
    $region2: #{_conv_bn_relu.1} parent=1 // loop_pre_header
      _
    $region3: #{_conv_bn_relu.1} parent=1 // loop_header
      %s9 = sphi 0, %s13
      %p10 = scmp.ge.s32.totalorder %s9, 8
      %s16 = sphi 0, %s28
      %s17 = sphi 0, %s24
      %s18 = sphi 0, %s16
      %s19 = sphi 0, %s17
      %s20 = sphi 0, %s18
      %s21 = sphi 0, %s19
      %s31 = sphi 0, %s33
      %s34 = sphi 0, %s31
      %s35 = sphi 0, %s34
      %s51 = sphi 0, %s35
      %s57 = sphi 0, %s59
      %s60 = sphi 0, %s57
      %s61 = sphi 0, %s60
      %s77 = sphi 0, %s61
      %s83 = sphi 0, %s85
      %s86 = sphi 0, %s83
      %s87 = sphi 0, %s86
      %s103 = sphi 0, %s87
      %s111 = sphi 0, %s113
      %s114 = sphi 0, %s111
      %s115 = sphi 0, %s114
      %s131 = sphi 0, %s115
    $region4: #{_conv_bn_relu.1} parent=1 // loop_header_branch
      %12 = sbr.rel (%p10) target = $region8
    $region5: #{_conv_bn_relu.1} parent=1 // loop_body
      %s14 = ssub.s32 %s9, 1
      %s15 = ssub.s32 %s9, 2
      %s22 = sadd.s32 1, %s17
      %p23 = scmp.ge.s32.totalorder %s22, 1
      %s24 = scalar_select %p23, 0, %s22
      %s25 = sadd.s32 1, %s16
      %s26 = scalar_select %p23, %s25, %s16
      %p27 = scmp.ge.s32.totalorder %s26, 6
      %s28 = scalar_select %p27, 0, %s26
      %s29 = ssub.s32 %s16, %s28
      %p30 = scmp.eq.s32.totalorder %s29, 0
      %s32 = sadd.s32 %s31, 1
      %s33 = scalar_select %p30, %s31, %s32
      %p36 = pneg %p30
      %p37 = scmp.eq.s32.totalorder %s9, 5
      %p38 = por %p36, %p37
      %p39 = scmp.ne.s32.totalorder %s31, %s34
      %p40 = scmp.eq.s32.totalorder %s9, 0
      %p41 = por %p39, %p40
      %p42 = scmp.ne.s32.totalorder %s31, %s34
      %p43 = scmp.eq.s32.totalorder %s14, 5
      %p44 = por %p42, %p43
      %p45 = scmp.ne.s32.totalorder %s34, %s35
      %p46 = scmp.eq.s32.totalorder %s14, 0
      %p47 = por %p45, %p46
      %p48 = scmp.ne.s32.totalorder %s34, %s35
      %p49 = scmp.eq.s32.totalorder %s15, 5
      %p50 = por %p48, %p49
      %p52 = scmp.ne.s32.totalorder %s35, %s51
      %p53 = scmp.eq.s32.totalorder %s15, 0
      %p54 = por %p52, %p53
      %s55 = ssub.s32 %s17, %s24
      %p56 = scmp.eq.s32.totalorder %s55, 0
      %s58 = sadd.s32 %s57, 1
      %s59 = scalar_select %p56, %s57, %s58
      %p62 = pneg %p56
      %p63 = scmp.eq.s32.totalorder %s9, 5
      %p64 = por %p62, %p63
      %p65 = scmp.ne.s32.totalorder %s57, %s60
      %p66 = scmp.eq.s32.totalorder %s9, 0
      %p67 = por %p65, %p66
      %p68 = scmp.ne.s32.totalorder %s57, %s60
      %p69 = scmp.eq.s32.totalorder %s14, 5
      %p70 = por %p68, %p69
      %p71 = scmp.ne.s32.totalorder %s60, %s61
      %p72 = scmp.eq.s32.totalorder %s14, 0
      %p73 = por %p71, %p72
      %p74 = scmp.ne.s32.totalorder %s60, %s61
      %p75 = scmp.eq.s32.totalorder %s15, 5
      %p76 = por %p74, %p75
      %p78 = scmp.ne.s32.totalorder %s61, %s77
      %p79 = scmp.eq.s32.totalorder %s15, 0
      %p80 = por %p78, %p79
      %s81 = ssub.s32 %s17, %s24
      %p82 = scmp.eq.s32.totalorder %s81, 0
      %s84 = sadd.s32 %s83, 1
      %s85 = scalar_select %p82, %s83, %s84
      %p88 = pneg %p82
      %p89 = scmp.eq.s32.totalorder %s9, 5
      %p90 = por %p88, %p89
      %p91 = scmp.ne.s32.totalorder %s83, %s86
      %p92 = scmp.eq.s32.totalorder %s9, 0
      %p93 = por %p91, %p92
      %p94 = scmp.ne.s32.totalorder %s83, %s86
      %p95 = scmp.eq.s32.totalorder %s14, 5
      %p96 = por %p94, %p95
      %p97 = scmp.ne.s32.totalorder %s86, %s87
      %p98 = scmp.eq.s32.totalorder %s14, 0
      %p99 = por %p97, %p98
      %p100 = scmp.ne.s32.totalorder %s86, %s87
      %p101 = scmp.eq.s32.totalorder %s15, 5
      %p102 = por %p100, %p101
      %p104 = scmp.ne.s32.totalorder %s87, %s103
      %p105 = scmp.eq.s32.totalorder %s15, 0
      %p106 = por %p104, %p105
      %s107 = ssub.s32 %s16, %s28
      %s108 = ssub.s32 %s17, %s24
      %s109 = sor.u32 %s107, %s108
      %p110 = scmp.eq.s32.totalorder %s109, 0
      %s112 = sadd.s32 %s111, 1
      %s113 = scalar_select %p110, %s111, %s112
      %p116 = pneg %p110
      %p117 = scmp.eq.s32.totalorder %s9, 5
      %p118 = por %p116, %p117
      %p119 = scmp.ne.s32.totalorder %s111, %s114
      %p120 = scmp.eq.s32.totalorder %s9, 0
      %p121 = por %p119, %p120
      %p122 = scmp.ne.s32.totalorder %s111, %s114
      %p123 = scmp.eq.s32.totalorder %s14, 5
      %p124 = por %p122, %p123
      %p125 = scmp.ne.s32.totalorder %s114, %s115
      %p126 = scmp.eq.s32.totalorder %s14, 0
      %p127 = por %p125, %p126
      %p128 = scmp.ne.s32.totalorder %s114, %s115
      %p129 = scmp.eq.s32.totalorder %s15, 5
      %p130 = por %p128, %p129
      %p132 = scmp.ne.s32.totalorder %s115, %s131
      %p133 = scmp.eq.s32.totalorder %s15, 0
      %p134 = por %p132, %p133
      %p135 = scmp.le.s32.totalorder 1, %s9
      %p136 = scmp.lt.s32.totalorder %s9, 7
      %p137 = pnand %p135, %p136
      %p138 = pneg %p137
      // Predicated region
      $region9: #{_conv_bn_relu.1} parent=5 // pred_check
        _
      $region10: #{_conv_bn_relu.1} parent=5 // pred_check_branch
        %140 = sbr.rel (%p137) target = $region12
      $region11: #{_conv_bn_relu.1} parent=5 // pred_region
        %s141 = ssub.s32 %s9, 1
        // Predicated region
        $region13: #{_conv_bn_relu.1} parent=11 // pred_check
          %p142 = pneg %p73
        $region14: #{_conv_bn_relu.1} parent=11 // pred_check_branch
          %144 = sbr.rel (%p142) target = $region16
        $region15: #{_conv_bn_relu.1} parent=11 // pred_region
          %p145 = scmp.lt.s32.totalorder %s19, 0
          %s146 = scalar_select %p145, %s19, 0
          %s147 = smul.addr %s146, 4
          %s148 = scalar_lea.vmem %s1, %s147
        $region16: #{_conv_bn_relu.1} parent=11 // pred_fallthru
          _
        // Predicated region
        $region17: #{_conv_bn_relu.1} parent=11 // pred_check
          %p149 = pneg %p99
        $region18: #{_conv_bn_relu.1} parent=11 // pred_check_branch
          %151 = sbr.rel (%p149) target = $region20
        $region19: #{_conv_bn_relu.1} parent=11 // pred_region
          %p152 = scmp.lt.s32.totalorder %s19, 0
          %s153 = scalar_select %p152, %s19, 0
          %s154 = scalar_lea.vmem %s2, %s153
        $region20: #{_conv_bn_relu.1} parent=11 // pred_fallthru
          _
      $region12: #{_conv_bn_relu.1} parent=5 // pred_fallthru
        _
      %p155 = scmp.lt.s32.totalorder %s9, 6
      // Predicated region
      $region21: #{_conv_bn_relu.1} parent=5 // pred_check
        %p156 = pneg %p155
      $region22: #{_conv_bn_relu.1} parent=5 // pred_check_branch
        %158 = sbr.rel (%p156) target = $region24
      $region23: #{_conv_bn_relu.1} parent=5 // pred_region
        // Predicated region
        $region25: #{_conv_bn_relu.1} parent=23 // pred_check
          %p159 = pneg %p41
        $region26: #{_conv_bn_relu.1} parent=23 // pred_check_branch
          %161 = sbr.rel (%p159) target = $region28
        $region27: #{_conv_bn_relu.1} parent=23 // pred_region
          %s162 = smul.u32 512, %s16
          %s163 = ssub.s32 2776, %s162
          %p164 = scmp.lt.s32.totalorder %s163, 512
          %s165 = scalar_select %p164, %s163, 512
          %s166 = smul.u32 4, %s165
          %p167 = scmp.lt.s32.totalorder %s162, 2775
          %s168 = scalar_select %p167, %s162, 2775
          %s169 = smul.addr %s168, 4
          %s170 = scalar_lea.vmem %s0, %s169
          %s171 = smul.u32 512, %s16
          %s172 = ssub.s32 2776, %s171
          %p173 = scmp.lt.s32.totalorder %s172, 512
          %s174 = scalar_select %p173, %s172, 512
          %s175 = smul.u32 4, %s174
        $region28: #{_conv_bn_relu.1} parent=23 // pred_fallthru
          _
      $region24: #{_conv_bn_relu.1} parent=5 // pred_fallthru
        _
      %p176 = scmp.le.s32.totalorder 1, %s9
      %p177 = scmp.lt.s32.totalorder %s9, 7
      %p178 = pnand %p176, %p177
      %p179 = pneg %p178
      // Predicated region
      $region29: #{_conv_bn_relu.1} parent=5 // pred_check
        _
      $region30: #{_conv_bn_relu.1} parent=5 // pred_check_branch
        %181 = sbr.rel (%p178) target = $region32
      $region31: #{_conv_bn_relu.1} parent=5 // pred_region
        %s182 = ssub.s32 %s9, 1
        %s183 = smul.u32 512, %s18
        %s184 = ssub.s32 2776, %s183
        %p185 = scmp.lt.s32.totalorder %s184, 512
        %s186 = scalar_select %p185, %s184, 512
        %s187 = smul.u32 4, %s186
        %p188 = scmp.lt.s32.totalorder %s183, 2775
        %s189 = scalar_select %p188, %s183, 2775
        %s190 = smul.addr %s189, 4
        %s191 = scalar_lea.vmem %s0, %s190
        %p192 = pneg %p47
        %p193 = pneg %p44
        %p194 = scmp.lt.s32.totalorder %s19, 0
        %s195 = scalar_select %p194, %s19, 0
        %s196 = smul.addr %s195, 4
        %s197 = scalar_lea.vmem %s1, %s196
        %p198 = pneg %p73
        %p199 = pneg %p70
        %p200 = scmp.lt.s32.totalorder %s19, 0
        %s201 = scalar_select %p200, %s19, 0
        %s202 = scalar_lea.vmem %s2, %s201
        %p203 = pneg %p99
        %p204 = pneg %p96
        %p205 = pneg %p127
        %p206 = pneg %p124
        %s207 = sand.u32 %s114, 1
        %s208 = sand.u32 %s114, 1
        %s209 = smul.addr %s208, 2048
        %s210 = scalar_lea.vmem [#allocation2], %s209
        %s211 = smul.u32 512, %s18
        %s212 = ssub.s32 2776, %s211
        %p213 = scmp.lt.s32.totalorder %s212, 512
        %s214 = scalar_select %p213, %s212, 512
        %s215 = smul.u32 4, %s214
        %p216 = scmp.lt.s32.totalorder %s211, 2775
        %s217 = scalar_select %p216, %s211, 2775
        %s218 = smul.addr %s217, 4
        %s219 = scalar_lea.vmem %s0, %s218
        %s220 = smul.u32 512, %s18
        %s221 = ssub.s32 2776, %s220
        %p222 = scmp.lt.s32.totalorder %s221, 512
        %s223 = scalar_select %p222, %s221, 512
        %s224 = smul.u32 4, %s223
        %p225 = scmp.lt.s32.totalorder %s19, 0
        %s226 = scalar_select %p225, %s19, 0
        %s227 = smul.addr %s226, 4
        %s228 = scalar_lea.vmem %s1, %s227
        %p229 = scmp.lt.s32.totalorder %s19, 0
        %s230 = scalar_select %p229, %s19, 0
        %s231 = scalar_lea.vmem %s2, %s230
        %s232 = smul.u32 512, %s18
        %s233 = ssub.s32 2776, %s232
        %p234 = scmp.lt.s32.totalorder %s233, 512
        %s235 = scalar_select %p234, %s233, 512
        %s236 = smul.u32 4, %s235
        %v238 = vld [vmem:[%s219] sm:$0xf]
        %v239 = vld [vmem:[%s219 + $0x4] sm:$0xf]
        %v240 = vld [vmem:[%s219 + $0x8] sm:$0xf]
        %v241 = vld [vmem:[%s219 + $0xc] sm:$0xf]
        %v242 = vld [vmem:[%s219 + $0x10] sm:$0xf]
        %v243 = vld [vmem:[%s219 + $0x14] sm:$0xf]
        %v244 = vld [vmem:[%s219 + $0x18] sm:$0xf]
        %v245 = vld [vmem:[%s219 + $0x1c] sm:$0xf]
        %v246 = vld [vmem:[%s219 + $0x20] sm:$0xf]
        %v247 = vld [vmem:[%s219 + $0x24] sm:$0xf]
        %v248 = vld [vmem:[%s219 + $0x28] sm:$0xf]
        %v249 = vld [vmem:[%s219 + $0x2c] sm:$0xf]
        %v250 = vld [vmem:[%s219 + $0x30] sm:$0xf]
        %v251 = vld [vmem:[%s219 + $0x34] sm:$0xf]
        %v252 = vld [vmem:[%s219 + $0x38] sm:$0xf]
        %v253 = vld [vmem:[%s219 + $0x3c] sm:$0xf]
        %v254 = vld [vmem:[%s219 + $0x40] sm:$0xf]
        %v255 = vld [vmem:[%s219 + $0x44] sm:$0xf]
        %v256 = vld [vmem:[%s219 + $0x48] sm:$0xf]
        %v257 = vld [vmem:[%s219 + $0x4c] sm:$0xf]
        %v258 = vld [vmem:[%s219 + $0x50] sm:$0xf]
        %v259 = vld [vmem:[%s219 + $0x54] sm:$0xf]
        %v260 = vld [vmem:[%s219 + $0x58] sm:$0xf]
        %v261 = vld [vmem:[%s219 + $0x5c] sm:$0xf]
        %v262 = vld [vmem:[%s219 + $0x60] sm:$0xf]
        %v263 = vld [vmem:[%s219 + $0x64] sm:$0xf]
        %v264 = vld [vmem:[%s219 + $0x68] sm:$0xf]
        %v265 = vld [vmem:[%s219 + $0x6c] sm:$0xf]
        %v266 = vld [vmem:[%s219 + $0x70] sm:$0xf]
        %v267 = vld [vmem:[%s219 + $0x74] sm:$0xf]
        %v268 = vld [vmem:[%s219 + $0x78] sm:$0xf]
        %v269 = vld [vmem:[%s219 + $0x7c] sm:$0xf]
        %v270 = vld [vmem:[%s219 + $0x80] sm:$0xf]
        %v271 = vld [vmem:[%s219 + $0x84] sm:$0xf]
        %v272 = vld [vmem:[%s219 + $0x88] sm:$0xf]
        %v273 = vld [vmem:[%s219 + $0x8c] sm:$0xf]
        %v274 = vld [vmem:[%s219 + $0x90] sm:$0xf]
        %v275 = vld [vmem:[%s219 + $0x94] sm:$0xf]
        %v276 = vld [vmem:[%s219 + $0x98] sm:$0xf]
        %v277 = vld [vmem:[%s219 + $0x9c] sm:$0xf]
        %v278 = vld [vmem:[%s219 + $0xa0] sm:$0xf]
        %v279 = vld [vmem:[%s219 + $0xa4] sm:$0xf]
        %v280 = vld [vmem:[%s219 + $0xa8] sm:$0xf]
        %v281 = vld [vmem:[%s219 + $0xac] sm:$0xf]
        %v282 = vld [vmem:[%s219 + $0xb0] sm:$0xf]
        %v283 = vld [vmem:[%s219 + $0xb4] sm:$0xf]
        %v284 = vld [vmem:[%s219 + $0xb8] sm:$0xf]
        %v285 = vld [vmem:[%s219 + $0xbc] sm:$0xf]
        %v286 = vld [vmem:[%s219 + $0xc0] sm:$0xf]
        %v287 = vld [vmem:[%s219 + $0xc4] sm:$0xf]
        %v288 = vld [vmem:[%s219 + $0xc8] sm:$0xf]
        %v289 = vld [vmem:[%s219 + $0xcc] sm:$0xf]
        %v290 = vld [vmem:[%s219 + $0xd0] sm:$0xf]
        %v291 = vld [vmem:[%s219 + $0xd4] sm:$0xf]
        %v292 = vld [vmem:[%s219 + $0xd8] sm:$0xf]
        %v293 = vld [vmem:[%s219 + $0xdc] sm:$0xf]
        %v294 = vld [vmem:[%s219 + $0xe0] sm:$0xf]
        %v295 = vld [vmem:[%s219 + $0xe4] sm:$0xf]
        %v296 = vld [vmem:[%s219 + $0xe8] sm:$0xf]
        %v297 = vld [vmem:[%s219 + $0xec] sm:$0xf]
        %v298 = vld [vmem:[%s219 + $0xf0] sm:$0xf]
        %v299 = vld [vmem:[%s219 + $0xf4] sm:$0xf]
        %v300 = vld [vmem:[%s219 + $0xf8] sm:$0xf]
        %v301 = vld [vmem:[%s219 + $0xfc] sm:$0xf]
        %v302 = vld [vmem:[%s219 + $0x100] sm:$0xf]
        %v303 = vld [vmem:[%s219 + $0x104] sm:$0xf]
        %v304 = vld [vmem:[%s219 + $0x108] sm:$0xf]
        %v305 = vld [vmem:[%s219 + $0x10c] sm:$0xf]
        %v306 = vld [vmem:[%s219 + $0x110] sm:$0xf]
        %v307 = vld [vmem:[%s219 + $0x114] sm:$0xf]
        %v308 = vld [vmem:[%s219 + $0x118] sm:$0xf]
        %v309 = vld [vmem:[%s219 + $0x11c] sm:$0xf]
        %v310 = vld [vmem:[%s219 + $0x120] sm:$0xf]
        %v311 = vld [vmem:[%s219 + $0x124] sm:$0xf]
        %v312 = vld [vmem:[%s219 + $0x128] sm:$0xf]
        %v313 = vld [vmem:[%s219 + $0x12c] sm:$0xf]
        %v314 = vld [vmem:[%s219 + $0x130] sm:$0xf]
        %v315 = vld [vmem:[%s219 + $0x134] sm:$0xf]
        %v316 = vld [vmem:[%s219 + $0x138] sm:$0xf]
        %v317 = vld [vmem:[%s219 + $0x13c] sm:$0xf]
        %v318 = vld [vmem:[%s219 + $0x140] sm:$0xf]
        %v319 = vld [vmem:[%s219 + $0x144] sm:$0xf]
        %v320 = vld [vmem:[%s219 + $0x148] sm:$0xf]
        %v321 = vld [vmem:[%s219 + $0x14c] sm:$0xf]
        %v322 = vld [vmem:[%s219 + $0x150] sm:$0xf]
        %v323 = vld [vmem:[%s219 + $0x154] sm:$0xf]
        %v324 = vld [vmem:[%s219 + $0x158] sm:$0xf]
        %v325 = vld [vmem:[%s219 + $0x15c] sm:$0xf]
        %v326 = vld [vmem:[%s219 + $0x160] sm:$0xf]
        %v327 = vld [vmem:[%s219 + $0x164] sm:$0xf]
        %v328 = vld [vmem:[%s219 + $0x168] sm:$0xf]
        %v329 = vld [vmem:[%s219 + $0x16c] sm:$0xf]
        %v330 = vld [vmem:[%s219 + $0x170] sm:$0xf]
        %v331 = vld [vmem:[%s219 + $0x174] sm:$0xf]
        %v332 = vld [vmem:[%s219 + $0x178] sm:$0xf]
        %v333 = vld [vmem:[%s219 + $0x17c] sm:$0xf]
        %v334 = vld [vmem:[%s219 + $0x180] sm:$0xf]
        %v335 = vld [vmem:[%s219 + $0x184] sm:$0xf]
        %v336 = vld [vmem:[%s219 + $0x188] sm:$0xf]
        %v337 = vld [vmem:[%s219 + $0x18c] sm:$0xf]
        %v338 = vld [vmem:[%s219 + $0x190] sm:$0xf]
        %v339 = vld [vmem:[%s219 + $0x194] sm:$0xf]
        %v340 = vld [vmem:[%s219 + $0x198] sm:$0xf]
        %v341 = vld [vmem:[%s219 + $0x19c] sm:$0xf]
        %v342 = vld [vmem:[%s219 + $0x1a0] sm:$0xf]
        %v343 = vld [vmem:[%s219 + $0x1a4] sm:$0xf]
        %v344 = vld [vmem:[%s219 + $0x1a8] sm:$0xf]
        %v345 = vld [vmem:[%s219 + $0x1ac] sm:$0xf]
        %v346 = vld [vmem:[%s219 + $0x1b0] sm:$0xf]
        %v347 = vld [vmem:[%s219 + $0x1b4] sm:$0xf]
        %v348 = vld [vmem:[%s219 + $0x1b8] sm:$0xf]
        %v349 = vld [vmem:[%s219 + $0x1bc] sm:$0xf]
        %v350 = vld [vmem:[%s219 + $0x1c0] sm:$0xf]
        %v351 = vld [vmem:[%s219 + $0x1c4] sm:$0xf]
        %v352 = vld [vmem:[%s219 + $0x1c8] sm:$0xf]
        %v353 = vld [vmem:[%s219 + $0x1cc] sm:$0xf]
        %v354 = vld [vmem:[%s219 + $0x1d0] sm:$0xf]
        %v355 = vld [vmem:[%s219 + $0x1d4] sm:$0xf]
        %v356 = vld [vmem:[%s219 + $0x1d8] sm:$0xf]
        %v357 = vld [vmem:[%s219 + $0x1dc] sm:$0xf]
        %v358 = vld [vmem:[%s219 + $0x1e0] sm:$0xf]
        %v359 = vld [vmem:[%s219 + $0x1e4] sm:$0xf]
        %v360 = vld [vmem:[%s219 + $0x1e8] sm:$0xf]
        %v361 = vld [vmem:[%s219 + $0x1ec] sm:$0xf]
        %v362 = vld [vmem:[%s219 + $0x1f0] sm:$0xf]
        %v363 = vld [vmem:[%s219 + $0x1f4] sm:$0xf]
        %v364 = vld [vmem:[%s219 + $0x1f8] sm:$0xf]
        %v365 = vld [vmem:[%s219 + $0x1fc] sm:$0xf]
        %v366 = vld [vmem:[%s219 + $0x200] sm:$0xf]
        %v367 = vld [vmem:[%s219 + $0x204] sm:$0xf]
        %v368 = vld [vmem:[%s219 + $0x208] sm:$0xf]
        %v369 = vld [vmem:[%s219 + $0x20c] sm:$0xf]
        %v370 = vld [vmem:[%s219 + $0x210] sm:$0xf]
        %v371 = vld [vmem:[%s219 + $0x214] sm:$0xf]
        %v372 = vld [vmem:[%s219 + $0x218] sm:$0xf]
        %v373 = vld [vmem:[%s219 + $0x21c] sm:$0xf]
        %v374 = vld [vmem:[%s219 + $0x220] sm:$0xf]
        %v375 = vld [vmem:[%s219 + $0x224] sm:$0xf]
        %v376 = vld [vmem:[%s219 + $0x228] sm:$0xf]
        %v377 = vld [vmem:[%s219 + $0x22c] sm:$0xf]
        %v378 = vld [vmem:[%s219 + $0x230] sm:$0xf]
        %v379 = vld [vmem:[%s219 + $0x234] sm:$0xf]
        %v380 = vld [vmem:[%s219 + $0x238] sm:$0xf]
        %v381 = vld [vmem:[%s219 + $0x23c] sm:$0xf]
        %v382 = vld [vmem:[%s219 + $0x240] sm:$0xf]
        %v383 = vld [vmem:[%s219 + $0x244] sm:$0xf]
        %v384 = vld [vmem:[%s219 + $0x248] sm:$0xf]
        %v385 = vld [vmem:[%s219 + $0x24c] sm:$0xf]
        %v386 = vld [vmem:[%s219 + $0x250] sm:$0xf]
        %v387 = vld [vmem:[%s219 + $0x254] sm:$0xf]
        %v388 = vld [vmem:[%s219 + $0x258] sm:$0xf]
        %v389 = vld [vmem:[%s219 + $0x25c] sm:$0xf]
        %v390 = vld [vmem:[%s219 + $0x260] sm:$0xf]
        %v391 = vld [vmem:[%s219 + $0x264] sm:$0xf]
        %v392 = vld [vmem:[%s219 + $0x268] sm:$0xf]
        %v393 = vld [vmem:[%s219 + $0x26c] sm:$0xf]
        %v394 = vld [vmem:[%s219 + $0x270] sm:$0xf]
        %v395 = vld [vmem:[%s219 + $0x274] sm:$0xf]
        %v396 = vld [vmem:[%s219 + $0x278] sm:$0xf]
        %v397 = vld [vmem:[%s219 + $0x27c] sm:$0xf]
        %v398 = vld [vmem:[%s219 + $0x280] sm:$0xf]
        %v399 = vld [vmem:[%s219 + $0x284] sm:$0xf]
        %v400 = vld [vmem:[%s219 + $0x288] sm:$0xf]
        %v401 = vld [vmem:[%s219 + $0x28c] sm:$0xf]
        %v402 = vld [vmem:[%s219 + $0x290] sm:$0xf]
        %v403 = vld [vmem:[%s219 + $0x294] sm:$0xf]
        %v404 = vld [vmem:[%s219 + $0x298] sm:$0xf]
        %v405 = vld [vmem:[%s219 + $0x29c] sm:$0xf]
        %v406 = vld [vmem:[%s219 + $0x2a0] sm:$0xf]
        %v407 = vld [vmem:[%s219 + $0x2a4] sm:$0xf]
        %v408 = vld [vmem:[%s219 + $0x2a8] sm:$0xf]
        %v409 = vld [vmem:[%s219 + $0x2ac] sm:$0xf]
        %v410 = vld [vmem:[%s219 + $0x2b0] sm:$0xf]
        %v411 = vld [vmem:[%s219 + $0x2b4] sm:$0xf]
        %v412 = vld [vmem:[%s219 + $0x2b8] sm:$0xf]
        %v413 = vld [vmem:[%s219 + $0x2bc] sm:$0xf]
        %v414 = vld [vmem:[%s219 + $0x2c0] sm:$0xf]
        %v415 = vld [vmem:[%s219 + $0x2c4] sm:$0xf]
        %v416 = vld [vmem:[%s219 + $0x2c8] sm:$0xf]
        %v417 = vld [vmem:[%s219 + $0x2cc] sm:$0xf]
        %v418 = vld [vmem:[%s219 + $0x2d0] sm:$0xf]
        %v419 = vld [vmem:[%s219 + $0x2d4] sm:$0xf]
        %v420 = vld [vmem:[%s219 + $0x2d8] sm:$0xf]
        %v421 = vld [vmem:[%s219 + $0x2dc] sm:$0xf]
        %v422 = vld [vmem:[%s219 + $0x2e0] sm:$0xf]
        %v423 = vld [vmem:[%s219 + $0x2e4] sm:$0xf]
        %v424 = vld [vmem:[%s219 + $0x2e8] sm:$0xf]
        %v425 = vld [vmem:[%s219 + $0x2ec] sm:$0xf]
        %v426 = vld [vmem:[%s219 + $0x2f0] sm:$0xf]
        %v427 = vld [vmem:[%s219 + $0x2f4] sm:$0xf]
        %v428 = vld [vmem:[%s219 + $0x2f8] sm:$0xf]
        %v429 = vld [vmem:[%s219 + $0x2fc] sm:$0xf]
        %v430 = vld [vmem:[%s219 + $0x300] sm:$0xf]
        %v431 = vld [vmem:[%s219 + $0x304] sm:$0xf]
        %v432 = vld [vmem:[%s219 + $0x308] sm:$0xf]
        %v433 = vld [vmem:[%s219 + $0x30c] sm:$0xf]
        %v434 = vld [vmem:[%s219 + $0x310] sm:$0xf]
        %v435 = vld [vmem:[%s219 + $0x314] sm:$0xf]
        %v436 = vld [vmem:[%s219 + $0x318] sm:$0xf]
        %v437 = vld [vmem:[%s219 + $0x31c] sm:$0xf]
        %v438 = vld [vmem:[%s219 + $0x320] sm:$0xf]
        %v439 = vld [vmem:[%s219 + $0x324] sm:$0xf]
        %v440 = vld [vmem:[%s219 + $0x328] sm:$0xf]
        %v441 = vld [vmem:[%s219 + $0x32c] sm:$0xf]
        %v442 = vld [vmem:[%s219 + $0x330] sm:$0xf]
        %v443 = vld [vmem:[%s219 + $0x334] sm:$0xf]
        %v444 = vld [vmem:[%s219 + $0x338] sm:$0xf]
        %v445 = vld [vmem:[%s219 + $0x33c] sm:$0xf]
        %v446 = vld [vmem:[%s219 + $0x340] sm:$0xf]
        %v447 = vld [vmem:[%s219 + $0x344] sm:$0xf]
        %v448 = vld [vmem:[%s219 + $0x348] sm:$0xf]
        %v449 = vld [vmem:[%s219 + $0x34c] sm:$0xf]
        %v450 = vld [vmem:[%s219 + $0x350] sm:$0xf]
        %v451 = vld [vmem:[%s219 + $0x354] sm:$0xf]
        %v452 = vld [vmem:[%s219 + $0x358] sm:$0xf]
        %v453 = vld [vmem:[%s219 + $0x35c] sm:$0xf]
        %v454 = vld [vmem:[%s219 + $0x360] sm:$0xf]
        %v455 = vld [vmem:[%s219 + $0x364] sm:$0xf]
        %v456 = vld [vmem:[%s219 + $0x368] sm:$0xf]
        %v457 = vld [vmem:[%s219 + $0x36c] sm:$0xf]
        %v458 = vld [vmem:[%s219 + $0x370] sm:$0xf]
        %v459 = vld [vmem:[%s219 + $0x374] sm:$0xf]
        %v460 = vld [vmem:[%s219 + $0x378] sm:$0xf]
        %v461 = vld [vmem:[%s219 + $0x37c] sm:$0xf]
        %v462 = vld [vmem:[%s219 + $0x380] sm:$0xf]
        %v463 = vld [vmem:[%s219 + $0x384] sm:$0xf]
        %v464 = vld [vmem:[%s219 + $0x388] sm:$0xf]
        %v465 = vld [vmem:[%s219 + $0x38c] sm:$0xf]
        %v466 = vld [vmem:[%s219 + $0x390] sm:$0xf]
        %v467 = vld [vmem:[%s219 + $0x394] sm:$0xf]
        %v468 = vld [vmem:[%s219 + $0x398] sm:$0xf]
        %v469 = vld [vmem:[%s219 + $0x39c] sm:$0xf]
        %v470 = vld [vmem:[%s219 + $0x3a0] sm:$0xf]
        %v471 = vld [vmem:[%s219 + $0x3a4] sm:$0xf]
        %v472 = vld [vmem:[%s219 + $0x3a8] sm:$0xf]
        %v473 = vld [vmem:[%s219 + $0x3ac] sm:$0xf]
        %v474 = vld [vmem:[%s219 + $0x3b0] sm:$0xf]
        %v475 = vld [vmem:[%s219 + $0x3b4] sm:$0xf]
        %v476 = vld [vmem:[%s219 + $0x3b8] sm:$0xf]
        %v477 = vld [vmem:[%s219 + $0x3bc] sm:$0xf]
        %v478 = vld [vmem:[%s219 + $0x3c0] sm:$0xf]
        %v479 = vld [vmem:[%s219 + $0x3c4] sm:$0xf]
        %v480 = vld [vmem:[%s219 + $0x3c8] sm:$0xf]
        %v481 = vld [vmem:[%s219 + $0x3cc] sm:$0xf]
        %v482 = vld [vmem:[%s219 + $0x3d0] sm:$0xf]
        %v483 = vld [vmem:[%s219 + $0x3d4] sm:$0xf]
        %v484 = vld [vmem:[%s219 + $0x3d8] sm:$0xf]
        %v485 = vld [vmem:[%s219 + $0x3dc] sm:$0xf]
        %v486 = vld [vmem:[%s219 + $0x3e0] sm:$0xf]
        %v487 = vld [vmem:[%s219 + $0x3e4] sm:$0xf]
        %v488 = vld [vmem:[%s219 + $0x3e8] sm:$0xf]
        %v489 = vld [vmem:[%s219 + $0x3ec] sm:$0xf]
        %v490 = vld [vmem:[%s219 + $0x3f0] sm:$0xf]
        %v491 = vld [vmem:[%s219 + $0x3f4] sm:$0xf]
        %v492 = vld [vmem:[%s219 + $0x3f8] sm:$0xf]
        %v493 = vld [vmem:[%s219 + $0x3fc] sm:$0xf]
        %v494 = vld [vmem:[%s219 + $0x400] sm:$0xf]
        %v495 = vld [vmem:[%s219 + $0x404] sm:$0xf]
        %v496 = vld [vmem:[%s219 + $0x408] sm:$0xf]
        %v497 = vld [vmem:[%s219 + $0x40c] sm:$0xf]
        %v498 = vld [vmem:[%s219 + $0x410] sm:$0xf]
        %v499 = vld [vmem:[%s219 + $0x414] sm:$0xf]
        %v500 = vld [vmem:[%s219 + $0x418] sm:$0xf]
        %v501 = vld [vmem:[%s219 + $0x41c] sm:$0xf]
        %v502 = vld [vmem:[%s219 + $0x420] sm:$0xf]
        %v503 = vld [vmem:[%s219 + $0x424] sm:$0xf]
        %v504 = vld [vmem:[%s219 + $0x428] sm:$0xf]
        %v505 = vld [vmem:[%s219 + $0x42c] sm:$0xf]
        %v506 = vld [vmem:[%s219 + $0x430] sm:$0xf]
        %v507 = vld [vmem:[%s219 + $0x434] sm:$0xf]
        %v508 = vld [vmem:[%s219 + $0x438] sm:$0xf]
        %v509 = vld [vmem:[%s219 + $0x43c] sm:$0xf]
        %v510 = vld [vmem:[%s219 + $0x440] sm:$0xf]
        %v511 = vld [vmem:[%s219 + $0x444] sm:$0xf]
        %v512 = vld [vmem:[%s219 + $0x448] sm:$0xf]
        %v513 = vld [vmem:[%s219 + $0x44c] sm:$0xf]
        %v514 = vld [vmem:[%s219 + $0x450] sm:$0xf]
        %v515 = vld [vmem:[%s219 + $0x454] sm:$0xf]
        %v516 = vld [vmem:[%s219 + $0x458] sm:$0xf]
        %v517 = vld [vmem:[%s219 + $0x45c] sm:$0xf]
        %v518 = vld [vmem:[%s219 + $0x460] sm:$0xf]
        %v519 = vld [vmem:[%s219 + $0x464] sm:$0xf]
        %v520 = vld [vmem:[%s219 + $0x468] sm:$0xf]
        %v521 = vld [vmem:[%s219 + $0x46c] sm:$0xf]
        %v522 = vld [vmem:[%s219 + $0x470] sm:$0xf]
        %v523 = vld [vmem:[%s219 + $0x474] sm:$0xf]
        %v524 = vld [vmem:[%s219 + $0x478] sm:$0xf]
        %v525 = vld [vmem:[%s219 + $0x47c] sm:$0xf]
        %v526 = vld [vmem:[%s219 + $0x480] sm:$0xf]
        %v527 = vld [vmem:[%s219 + $0x484] sm:$0xf]
        %v528 = vld [vmem:[%s219 + $0x488] sm:$0xf]
        %v529 = vld [vmem:[%s219 + $0x48c] sm:$0xf]
        %v530 = vld [vmem:[%s219 + $0x490] sm:$0xf]
        %v531 = vld [vmem:[%s219 + $0x494] sm:$0xf]
        %v532 = vld [vmem:[%s219 + $0x498] sm:$0xf]
        %v533 = vld [vmem:[%s219 + $0x49c] sm:$0xf]
        %v534 = vld [vmem:[%s219 + $0x4a0] sm:$0xf]
        %v535 = vld [vmem:[%s219 + $0x4a4] sm:$0xf]
        %v536 = vld [vmem:[%s219 + $0x4a8] sm:$0xf]
        %v537 = vld [vmem:[%s219 + $0x4ac] sm:$0xf]
        %v538 = vld [vmem:[%s219 + $0x4b0] sm:$0xf]
        %v539 = vld [vmem:[%s219 + $0x4b4] sm:$0xf]
        %v540 = vld [vmem:[%s219 + $0x4b8] sm:$0xf]
        %v541 = vld [vmem:[%s219 + $0x4bc] sm:$0xf]
        %v542 = vld [vmem:[%s219 + $0x4c0] sm:$0xf]
        %v543 = vld [vmem:[%s219 + $0x4c4] sm:$0xf]
        %v544 = vld [vmem:[%s219 + $0x4c8] sm:$0xf]
        %v545 = vld [vmem:[%s219 + $0x4cc] sm:$0xf]
        %v546 = vld [vmem:[%s219 + $0x4d0] sm:$0xf]
        %v547 = vld [vmem:[%s219 + $0x4d4] sm:$0xf]
        %v548 = vld [vmem:[%s219 + $0x4d8] sm:$0xf]
        %v549 = vld [vmem:[%s219 + $0x4dc] sm:$0xf]
        %v550 = vld [vmem:[%s219 + $0x4e0] sm:$0xf]
        %v551 = vld [vmem:[%s219 + $0x4e4] sm:$0xf]
        %v552 = vld [vmem:[%s219 + $0x4e8] sm:$0xf]
        %v553 = vld [vmem:[%s219 + $0x4ec] sm:$0xf]
        %v554 = vld [vmem:[%s219 + $0x4f0] sm:$0xf]
        %v555 = vld [vmem:[%s219 + $0x4f4] sm:$0xf]
        %v556 = vld [vmem:[%s219 + $0x4f8] sm:$0xf]
        %v557 = vld [vmem:[%s219 + $0x4fc] sm:$0xf]
        %v558 = vld [vmem:[%s219 + $0x500] sm:$0xf]
        %v559 = vld [vmem:[%s219 + $0x504] sm:$0xf]
        %v560 = vld [vmem:[%s219 + $0x508] sm:$0xf]
        %v561 = vld [vmem:[%s219 + $0x50c] sm:$0xf]
        %v562 = vld [vmem:[%s219 + $0x510] sm:$0xf]
        %v563 = vld [vmem:[%s219 + $0x514] sm:$0xf]
        %v564 = vld [vmem:[%s219 + $0x518] sm:$0xf]
        %v565 = vld [vmem:[%s219 + $0x51c] sm:$0xf]
        %v566 = vld [vmem:[%s219 + $0x520] sm:$0xf]
        %v567 = vld [vmem:[%s219 + $0x524] sm:$0xf]
        %v568 = vld [vmem:[%s219 + $0x528] sm:$0xf]
        %v569 = vld [vmem:[%s219 + $0x52c] sm:$0xf]
        %v570 = vld [vmem:[%s219 + $0x530] sm:$0xf]
        %v571 = vld [vmem:[%s219 + $0x534] sm:$0xf]
        %v572 = vld [vmem:[%s219 + $0x538] sm:$0xf]
        %v573 = vld [vmem:[%s219 + $0x53c] sm:$0xf]
        %v574 = vld [vmem:[%s219 + $0x540] sm:$0xf]
        %v575 = vld [vmem:[%s219 + $0x544] sm:$0xf]
        %v576 = vld [vmem:[%s219 + $0x548] sm:$0xf]
        %v577 = vld [vmem:[%s219 + $0x54c] sm:$0xf]
        %v578 = vld [vmem:[%s219 + $0x550] sm:$0xf]
        %v579 = vld [vmem:[%s219 + $0x554] sm:$0xf]
        %v580 = vld [vmem:[%s219 + $0x558] sm:$0xf]
        %v581 = vld [vmem:[%s219 + $0x55c] sm:$0xf]
        %v582 = vld [vmem:[%s219 + $0x560] sm:$0xf]
        %v583 = vld [vmem:[%s219 + $0x564] sm:$0xf]
        %v584 = vld [vmem:[%s219 + $0x568] sm:$0xf]
        %v585 = vld [vmem:[%s219 + $0x56c] sm:$0xf]
        %v586 = vld [vmem:[%s219 + $0x570] sm:$0xf]
        %v587 = vld [vmem:[%s219 + $0x574] sm:$0xf]
        %v588 = vld [vmem:[%s219 + $0x578] sm:$0xf]
        %v589 = vld [vmem:[%s219 + $0x57c] sm:$0xf]
        %v590 = vld [vmem:[%s219 + $0x580] sm:$0xf]
        %v591 = vld [vmem:[%s219 + $0x584] sm:$0xf]
        %v592 = vld [vmem:[%s219 + $0x588] sm:$0xf]
        %v593 = vld [vmem:[%s219 + $0x58c] sm:$0xf]
        %v594 = vld [vmem:[%s219 + $0x590] sm:$0xf]
        %v595 = vld [vmem:[%s219 + $0x594] sm:$0xf]
        %v596 = vld [vmem:[%s219 + $0x598] sm:$0xf]
        %v597 = vld [vmem:[%s219 + $0x59c] sm:$0xf]
        %v598 = vld [vmem:[%s219 + $0x5a0] sm:$0xf]
        %v599 = vld [vmem:[%s219 + $0x5a4] sm:$0xf]
        %v600 = vld [vmem:[%s219 + $0x5a8] sm:$0xf]
        %v601 = vld [vmem:[%s219 + $0x5ac] sm:$0xf]
        %v602 = vld [vmem:[%s219 + $0x5b0] sm:$0xf]
        %v603 = vld [vmem:[%s219 + $0x5b4] sm:$0xf]
        %v604 = vld [vmem:[%s219 + $0x5b8] sm:$0xf]
        %v605 = vld [vmem:[%s219 + $0x5bc] sm:$0xf]
        %v606 = vld [vmem:[%s219 + $0x5c0] sm:$0xf]
        %v607 = vld [vmem:[%s219 + $0x5c4] sm:$0xf]
        %v608 = vld [vmem:[%s219 + $0x5c8] sm:$0xf]
        %v609 = vld [vmem:[%s219 + $0x5cc] sm:$0xf]
        %v610 = vld [vmem:[%s219 + $0x5d0] sm:$0xf]
        %v611 = vld [vmem:[%s219 + $0x5d4] sm:$0xf]
        %v612 = vld [vmem:[%s219 + $0x5d8] sm:$0xf]
        %v613 = vld [vmem:[%s219 + $0x5dc] sm:$0xf]
        %v614 = vld [vmem:[%s219 + $0x5e0] sm:$0xf]
        %v615 = vld [vmem:[%s219 + $0x5e4] sm:$0xf]
        %v616 = vld [vmem:[%s219 + $0x5e8] sm:$0xf]
        %v617 = vld [vmem:[%s219 + $0x5ec] sm:$0xf]
        %v618 = vld [vmem:[%s219 + $0x5f0] sm:$0xf]
        %v619 = vld [vmem:[%s219 + $0x5f4] sm:$0xf]
        %v620 = vld [vmem:[%s219 + $0x5f8] sm:$0xf]
        %v621 = vld [vmem:[%s219 + $0x5fc] sm:$0xf]
        %v622 = vld [vmem:[%s219 + $0x600] sm:$0xf]
        %v623 = vld [vmem:[%s219 + $0x604] sm:$0xf]
        %v624 = vld [vmem:[%s219 + $0x608] sm:$0xf]
        %v625 = vld [vmem:[%s219 + $0x60c] sm:$0xf]
        %v626 = vld [vmem:[%s219 + $0x610] sm:$0xf]
        %v627 = vld [vmem:[%s219 + $0x614] sm:$0xf]
        %v628 = vld [vmem:[%s219 + $0x618] sm:$0xf]
        %v629 = vld [vmem:[%s219 + $0x61c] sm:$0xf]
        %v630 = vld [vmem:[%s219 + $0x620] sm:$0xf]
        %v631 = vld [vmem:[%s219 + $0x624] sm:$0xf]
        %v632 = vld [vmem:[%s219 + $0x628] sm:$0xf]
        %v633 = vld [vmem:[%s219 + $0x62c] sm:$0xf]
        %v634 = vld [vmem:[%s219 + $0x630] sm:$0xf]
        %v635 = vld [vmem:[%s219 + $0x634] sm:$0xf]
        %v636 = vld [vmem:[%s219 + $0x638] sm:$0xf]
        %v637 = vld [vmem:[%s219 + $0x63c] sm:$0xf]
        %v638 = vld [vmem:[%s219 + $0x640] sm:$0xf]
        %v639 = vld [vmem:[%s219 + $0x644] sm:$0xf]
        %v640 = vld [vmem:[%s219 + $0x648] sm:$0xf]
        %v641 = vld [vmem:[%s219 + $0x64c] sm:$0xf]
        %v642 = vld [vmem:[%s219 + $0x650] sm:$0xf]
        %v643 = vld [vmem:[%s219 + $0x654] sm:$0xf]
        %v644 = vld [vmem:[%s219 + $0x658] sm:$0xf]
        %v645 = vld [vmem:[%s219 + $0x65c] sm:$0xf]
        %v646 = vld [vmem:[%s219 + $0x660] sm:$0xf]
        %v647 = vld [vmem:[%s219 + $0x664] sm:$0xf]
        %v648 = vld [vmem:[%s219 + $0x668] sm:$0xf]
        %v649 = vld [vmem:[%s219 + $0x66c] sm:$0xf]
        %v650 = vld [vmem:[%s219 + $0x670] sm:$0xf]
        %v651 = vld [vmem:[%s219 + $0x674] sm:$0xf]
        %v652 = vld [vmem:[%s219 + $0x678] sm:$0xf]
        %v653 = vld [vmem:[%s219 + $0x67c] sm:$0xf]
        %v654 = vld [vmem:[%s219 + $0x680] sm:$0xf]
        %v655 = vld [vmem:[%s219 + $0x684] sm:$0xf]
        %v656 = vld [vmem:[%s219 + $0x688] sm:$0xf]
        %v657 = vld [vmem:[%s219 + $0x68c] sm:$0xf]
        %v658 = vld [vmem:[%s219 + $0x690] sm:$0xf]
        %v659 = vld [vmem:[%s219 + $0x694] sm:$0xf]
        %v660 = vld [vmem:[%s219 + $0x698] sm:$0xf]
        %v661 = vld [vmem:[%s219 + $0x69c] sm:$0xf]
        %v662 = vld [vmem:[%s219 + $0x6a0] sm:$0xf]
        %v663 = vld [vmem:[%s219 + $0x6a4] sm:$0xf]
        %v664 = vld [vmem:[%s219 + $0x6a8] sm:$0xf]
        %v665 = vld [vmem:[%s219 + $0x6ac] sm:$0xf]
        %v666 = vld [vmem:[%s219 + $0x6b0] sm:$0xf]
        %v667 = vld [vmem:[%s219 + $0x6b4] sm:$0xf]
        %v668 = vld [vmem:[%s219 + $0x6b8] sm:$0xf]
        %v669 = vld [vmem:[%s219 + $0x6bc] sm:$0xf]
        %v670 = vld [vmem:[%s219 + $0x6c0] sm:$0xf]
        %v671 = vld [vmem:[%s219 + $0x6c4] sm:$0xf]
        %v672 = vld [vmem:[%s219 + $0x6c8] sm:$0xf]
        %v673 = vld [vmem:[%s219 + $0x6cc] sm:$0xf]
        %v674 = vld [vmem:[%s219 + $0x6d0] sm:$0xf]
        %v675 = vld [vmem:[%s219 + $0x6d4] sm:$0xf]
        %v676 = vld [vmem:[%s219 + $0x6d8] sm:$0xf]
        %v677 = vld [vmem:[%s219 + $0x6dc] sm:$0xf]
        %v678 = vld [vmem:[%s219 + $0x6e0] sm:$0xf]
        %v679 = vld [vmem:[%s219 + $0x6e4] sm:$0xf]
        %v680 = vld [vmem:[%s219 + $0x6e8] sm:$0xf]
        %v681 = vld [vmem:[%s219 + $0x6ec] sm:$0xf]
        %v682 = vld [vmem:[%s219 + $0x6f0] sm:$0xf]
        %v683 = vld [vmem:[%s219 + $0x6f4] sm:$0xf]
        %v684 = vld [vmem:[%s219 + $0x6f8] sm:$0xf]
        %v685 = vld [vmem:[%s219 + $0x6fc] sm:$0xf]
        %v686 = vld [vmem:[%s219 + $0x700] sm:$0xf]
        %v687 = vld [vmem:[%s219 + $0x704] sm:$0xf]
        %v688 = vld [vmem:[%s219 + $0x708] sm:$0xf]
        %v689 = vld [vmem:[%s219 + $0x70c] sm:$0xf]
        %v690 = vld [vmem:[%s219 + $0x710] sm:$0xf]
        %v691 = vld [vmem:[%s219 + $0x714] sm:$0xf]
        %v692 = vld [vmem:[%s219 + $0x718] sm:$0xf]
        %v693 = vld [vmem:[%s219 + $0x71c] sm:$0xf]
        %v694 = vld [vmem:[%s219 + $0x720] sm:$0xf]
        %v695 = vld [vmem:[%s219 + $0x724] sm:$0xf]
        %v696 = vld [vmem:[%s219 + $0x728] sm:$0xf]
        %v697 = vld [vmem:[%s219 + $0x72c] sm:$0xf]
        %v698 = vld [vmem:[%s219 + $0x730] sm:$0xf]
        %v699 = vld [vmem:[%s219 + $0x734] sm:$0xf]
        %v700 = vld [vmem:[%s219 + $0x738] sm:$0xf]
        %v701 = vld [vmem:[%s219 + $0x73c] sm:$0xf]
        %v702 = vld [vmem:[%s219 + $0x740] sm:$0xf]
        %v703 = vld [vmem:[%s219 + $0x744] sm:$0xf]
        %v704 = vld [vmem:[%s219 + $0x748] sm:$0xf]
        %v705 = vld [vmem:[%s219 + $0x74c] sm:$0xf]
        %v706 = vld [vmem:[%s219 + $0x750] sm:$0xf]
        %v707 = vld [vmem:[%s219 + $0x754] sm:$0xf]
        %v708 = vld [vmem:[%s219 + $0x758] sm:$0xf]
        %v709 = vld [vmem:[%s219 + $0x75c] sm:$0xf]
        %v710 = vld [vmem:[%s219 + $0x760] sm:$0xf]
        %v711 = vld [vmem:[%s219 + $0x764] sm:$0xf]
        %v712 = vld [vmem:[%s219 + $0x768] sm:$0xf]
        %v713 = vld [vmem:[%s219 + $0x76c] sm:$0xf]
        %v714 = vld [vmem:[%s219 + $0x770] sm:$0xf]
        %v715 = vld [vmem:[%s219 + $0x774] sm:$0xf]
        %v716 = vld [vmem:[%s219 + $0x778] sm:$0xf]
        %v717 = vld [vmem:[%s219 + $0x77c] sm:$0xf]
        %v718 = vld [vmem:[%s219 + $0x780] sm:$0xf]
        %v719 = vld [vmem:[%s219 + $0x784] sm:$0xf]
        %v720 = vld [vmem:[%s219 + $0x788] sm:$0xf]
        %v721 = vld [vmem:[%s219 + $0x78c] sm:$0xf]
        %v722 = vld [vmem:[%s219 + $0x790] sm:$0xf]
        %v723 = vld [vmem:[%s219 + $0x794] sm:$0xf]
        %v724 = vld [vmem:[%s219 + $0x798] sm:$0xf]
        %v725 = vld [vmem:[%s219 + $0x79c] sm:$0xf]
        %v726 = vld [vmem:[%s219 + $0x7a0] sm:$0xf]
        %v727 = vld [vmem:[%s219 + $0x7a4] sm:$0xf]
        %v728 = vld [vmem:[%s219 + $0x7a8] sm:$0xf]
        %v729 = vld [vmem:[%s219 + $0x7ac] sm:$0xf]
        %v730 = vld [vmem:[%s219 + $0x7b0] sm:$0xf]
        %v731 = vld [vmem:[%s219 + $0x7b4] sm:$0xf]
        %v732 = vld [vmem:[%s219 + $0x7b8] sm:$0xf]
        %v733 = vld [vmem:[%s219 + $0x7bc] sm:$0xf]
        %v734 = vld [vmem:[%s219 + $0x7c0] sm:$0xf]
        %v735 = vld [vmem:[%s219 + $0x7c4] sm:$0xf]
        %v736 = vld [vmem:[%s219 + $0x7c8] sm:$0xf]
        %v737 = vld [vmem:[%s219 + $0x7cc] sm:$0xf]
        %v738 = vld [vmem:[%s219 + $0x7d0] sm:$0xf]
        %v739 = vld [vmem:[%s219 + $0x7d4] sm:$0xf]
        %v740 = vld [vmem:[%s219 + $0x7d8] sm:$0xf]
        %v741 = vld [vmem:[%s219 + $0x7dc] sm:$0xf]
        %v742 = vld [vmem:[%s219 + $0x7e0] sm:$0xf]
        %v743 = vld [vmem:[%s219 + $0x7e4] sm:$0xf]
        %v744 = vld [vmem:[%s219 + $0x7e8] sm:$0xf]
        %v745 = vld [vmem:[%s219 + $0x7ec] sm:$0xf]
        %v746 = vld [vmem:[%s219 + $0x7f0] sm:$0xf]
        %v747 = vld [vmem:[%s219 + $0x7f4] sm:$0xf]
        %v748 = vld [vmem:[%s219 + $0x7f8] sm:$0xf]
        %v749 = vld [vmem:[%s219 + $0x7fc] sm:$0xf]
        %v750 = vld [vmem:[%s228] sm:$0xf]
        %v751 = vld [vmem:[%s228 + $0x4] sm:$0xf]
        %v752 = vld [vmem:[%s228 + $0x8] sm:$0xf]
        %v753 = vld [vmem:[%s228 + $0xc] sm:$0x3]
        %v754 = vld [vmem:[%s231] sm:$0x1]
        %v756 = vperm.slane %v754, 0
        %v1270 = vunpack.c.l.b16 %v238
        %v1271 = vunpack.c.l.b16 %v239
        %v1272 = vunpack.c.l.b16 %v240
        %v1273 = vunpack.c.l.b16 %v241
        %v1274 = vunpack.c.l.b16 %v242
        %v1275 = vunpack.c.l.b16 %v243
        %v1276 = vunpack.c.l.b16 %v244
        %v1277 = vunpack.c.l.b16 %v245
        %v1278 = vunpack.c.l.b16 %v246
        %v1279 = vunpack.c.l.b16 %v247
        %v1280 = vunpack.c.l.b16 %v248
        %v1281 = vunpack.c.l.b16 %v249
        %v1282 = vunpack.c.l.b16 %v250
        %v1283 = vunpack.c.l.b16 %v251
        %v1284 = vunpack.c.l.b16 %v252
        %v1285 = vunpack.c.l.b16 %v253
        %v1286 = vunpack.c.l.b16 %v254
        %v1287 = vunpack.c.l.b16 %v255
        %v1288 = vunpack.c.l.b16 %v256
        %v1289 = vunpack.c.l.b16 %v257
        %v1290 = vunpack.c.l.b16 %v258
        %v1291 = vunpack.c.l.b16 %v259
        %v1292 = vunpack.c.l.b16 %v260
        %v1293 = vunpack.c.l.b16 %v261
        %v1294 = vunpack.c.l.b16 %v262
        %v1295 = vunpack.c.l.b16 %v263
        %v1296 = vunpack.c.l.b16 %v264
        %v1297 = vunpack.c.l.b16 %v265
        %v1298 = vunpack.c.l.b16 %v266
        %v1299 = vunpack.c.l.b16 %v267
        %v1300 = vunpack.c.l.b16 %v268
        %v1301 = vunpack.c.l.b16 %v269
        %v1302 = vunpack.c.l.b16 %v270
        %v1303 = vunpack.c.l.b16 %v271
        %v1304 = vunpack.c.l.b16 %v272
        %v1305 = vunpack.c.l.b16 %v273
        %v1306 = vunpack.c.l.b16 %v274
        %v1307 = vunpack.c.l.b16 %v275
        %v1308 = vunpack.c.l.b16 %v276
        %v1309 = vunpack.c.l.b16 %v277
        %v1310 = vunpack.c.l.b16 %v278
        %v1311 = vunpack.c.l.b16 %v279
        %v1312 = vunpack.c.l.b16 %v280
        %v1313 = vunpack.c.l.b16 %v281
        %v1314 = vunpack.c.l.b16 %v282
        %v1315 = vunpack.c.l.b16 %v283
        %v1316 = vunpack.c.l.b16 %v284
        %v1317 = vunpack.c.l.b16 %v285
        %v1318 = vunpack.c.l.b16 %v286
        %v1319 = vunpack.c.l.b16 %v287
        %v1320 = vunpack.c.l.b16 %v288
        %v1321 = vunpack.c.l.b16 %v289
        %v1322 = vunpack.c.l.b16 %v290
        %v1323 = vunpack.c.l.b16 %v291
        %v1324 = vunpack.c.l.b16 %v292
        %v1325 = vunpack.c.l.b16 %v293
        %v1326 = vunpack.c.l.b16 %v294
        %v1327 = vunpack.c.l.b16 %v295
        %v1328 = vunpack.c.l.b16 %v296
        %v1329 = vunpack.c.l.b16 %v297
        %v1330 = vunpack.c.l.b16 %v298
        %v1331 = vunpack.c.l.b16 %v299
        %v1332 = vunpack.c.l.b16 %v300
        %v1333 = vunpack.c.l.b16 %v301
        %v1334 = vunpack.c.l.b16 %v302
        %v1335 = vunpack.c.l.b16 %v303
        %v1336 = vunpack.c.l.b16 %v304
        %v1337 = vunpack.c.l.b16 %v305
        %v1338 = vunpack.c.l.b16 %v306
        %v1339 = vunpack.c.l.b16 %v307
        %v1340 = vunpack.c.l.b16 %v308
        %v1341 = vunpack.c.l.b16 %v309
        %v1342 = vunpack.c.l.b16 %v310
        %v1343 = vunpack.c.l.b16 %v311
        %v1344 = vunpack.c.l.b16 %v312
        %v1345 = vunpack.c.l.b16 %v313
        %v1346 = vunpack.c.l.b16 %v314
        %v1347 = vunpack.c.l.b16 %v315
        %v1348 = vunpack.c.l.b16 %v316
        %v1349 = vunpack.c.l.b16 %v317
        %v1350 = vunpack.c.l.b16 %v318
        %v1351 = vunpack.c.l.b16 %v319
        %v1352 = vunpack.c.l.b16 %v320
        %v1353 = vunpack.c.l.b16 %v321
        %v1354 = vunpack.c.l.b16 %v322
        %v1355 = vunpack.c.l.b16 %v323
        %v1356 = vunpack.c.l.b16 %v324
        %v1357 = vunpack.c.l.b16 %v325
        %v1358 = vunpack.c.l.b16 %v326
        %v1359 = vunpack.c.l.b16 %v327
        %v1360 = vunpack.c.l.b16 %v328
        %v1361 = vunpack.c.l.b16 %v329
        %v1362 = vunpack.c.l.b16 %v330
        %v1363 = vunpack.c.l.b16 %v331
        %v1364 = vunpack.c.l.b16 %v332
        %v1365 = vunpack.c.l.b16 %v333
        %v1366 = vunpack.c.l.b16 %v334
        %v1367 = vunpack.c.l.b16 %v335
        %v1368 = vunpack.c.l.b16 %v336
        %v1369 = vunpack.c.l.b16 %v337
        %v1370 = vunpack.c.l.b16 %v338
        %v1371 = vunpack.c.l.b16 %v339
        %v1372 = vunpack.c.l.b16 %v340
        %v1373 = vunpack.c.l.b16 %v341
        %v1374 = vunpack.c.l.b16 %v342
        %v1375 = vunpack.c.l.b16 %v343
        %v1376 = vunpack.c.l.b16 %v344
        %v1377 = vunpack.c.l.b16 %v345
        %v1378 = vunpack.c.l.b16 %v346
        %v1379 = vunpack.c.l.b16 %v347
        %v1380 = vunpack.c.l.b16 %v348
        %v1381 = vunpack.c.l.b16 %v349
        %v1382 = vunpack.c.l.b16 %v350
        %v1383 = vunpack.c.l.b16 %v351
        %v1384 = vunpack.c.l.b16 %v352
        %v1385 = vunpack.c.l.b16 %v353
        %v1386 = vunpack.c.l.b16 %v354
        %v1387 = vunpack.c.l.b16 %v355
        %v1388 = vunpack.c.l.b16 %v356
        %v1389 = vunpack.c.l.b16 %v357
        %v1390 = vunpack.c.l.b16 %v358
        %v1391 = vunpack.c.l.b16 %v359
        %v1392 = vunpack.c.l.b16 %v360
        %v1393 = vunpack.c.l.b16 %v361
        %v1394 = vunpack.c.l.b16 %v362
        %v1395 = vunpack.c.l.b16 %v363
        %v1396 = vunpack.c.l.b16 %v364
        %v1397 = vunpack.c.l.b16 %v365
        %v1398 = vunpack.c.l.b16 %v366
        %v1399 = vunpack.c.l.b16 %v367
        %v1400 = vunpack.c.l.b16 %v368
        %v1401 = vunpack.c.l.b16 %v369
        %v1402 = vunpack.c.l.b16 %v370
        %v1403 = vunpack.c.l.b16 %v371
        %v1404 = vunpack.c.l.b16 %v372
        %v1405 = vunpack.c.l.b16 %v373
        %v1406 = vunpack.c.l.b16 %v374
        %v1407 = vunpack.c.l.b16 %v375
        %v1408 = vunpack.c.l.b16 %v376
        %v1409 = vunpack.c.l.b16 %v377
        %v1410 = vunpack.c.l.b16 %v378
        %v1411 = vunpack.c.l.b16 %v379
        %v1412 = vunpack.c.l.b16 %v380
        %v1413 = vunpack.c.l.b16 %v381
        %v1414 = vunpack.c.l.b16 %v382
        %v1415 = vunpack.c.l.b16 %v383
        %v1416 = vunpack.c.l.b16 %v384
        %v1417 = vunpack.c.l.b16 %v385
        %v1418 = vunpack.c.l.b16 %v386
        %v1419 = vunpack.c.l.b16 %v387
        %v1420 = vunpack.c.l.b16 %v388
        %v1421 = vunpack.c.l.b16 %v389
        %v1422 = vunpack.c.l.b16 %v390
        %v1423 = vunpack.c.l.b16 %v391
        %v1424 = vunpack.c.l.b16 %v392
        %v1425 = vunpack.c.l.b16 %v393
        %v1426 = vunpack.c.l.b16 %v394
        %v1427 = vunpack.c.l.b16 %v395
        %v1428 = vunpack.c.l.b16 %v396
        %v1429 = vunpack.c.l.b16 %v397
        %v1430 = vunpack.c.l.b16 %v398
        %v1431 = vunpack.c.l.b16 %v399
        %v1432 = vunpack.c.l.b16 %v400
        %v1433 = vunpack.c.l.b16 %v401
        %v1434 = vunpack.c.l.b16 %v402
        %v1435 = vunpack.c.l.b16 %v403
        %v1436 = vunpack.c.l.b16 %v404
        %v1437 = vunpack.c.l.b16 %v405
        %v1438 = vunpack.c.l.b16 %v406
        %v1439 = vunpack.c.l.b16 %v407
        %v1440 = vunpack.c.l.b16 %v408
        %v1441 = vunpack.c.l.b16 %v409
        %v1442 = vunpack.c.l.b16 %v410
        %v1443 = vunpack.c.l.b16 %v411
        %v1444 = vunpack.c.l.b16 %v412
        %v1445 = vunpack.c.l.b16 %v413
        %v1446 = vunpack.c.l.b16 %v414
        %v1447 = vunpack.c.l.b16 %v415
        %v1448 = vunpack.c.l.b16 %v416
        %v1449 = vunpack.c.l.b16 %v417
        %v1450 = vunpack.c.l.b16 %v418
        %v1451 = vunpack.c.l.b16 %v419
        %v1452 = vunpack.c.l.b16 %v420
        %v1453 = vunpack.c.l.b16 %v421
        %v1454 = vunpack.c.l.b16 %v422
        %v1455 = vunpack.c.l.b16 %v423
        %v1456 = vunpack.c.l.b16 %v424
        %v1457 = vunpack.c.l.b16 %v425
        %v1458 = vunpack.c.l.b16 %v426
        %v1459 = vunpack.c.l.b16 %v427
        %v1460 = vunpack.c.l.b16 %v428
        %v1461 = vunpack.c.l.b16 %v429
        %v1462 = vunpack.c.l.b16 %v430
        %v1463 = vunpack.c.l.b16 %v431
        %v1464 = vunpack.c.l.b16 %v432
        %v1465 = vunpack.c.l.b16 %v433
        %v1466 = vunpack.c.l.b16 %v434
        %v1467 = vunpack.c.l.b16 %v435
        %v1468 = vunpack.c.l.b16 %v436
        %v1469 = vunpack.c.l.b16 %v437
        %v1470 = vunpack.c.l.b16 %v438
        %v1471 = vunpack.c.l.b16 %v439
        %v1472 = vunpack.c.l.b16 %v440
        %v1473 = vunpack.c.l.b16 %v441
        %v1474 = vunpack.c.l.b16 %v442
        %v1475 = vunpack.c.l.b16 %v443
        %v1476 = vunpack.c.l.b16 %v444
        %v1477 = vunpack.c.l.b16 %v445
        %v1478 = vunpack.c.l.b16 %v446
        %v1479 = vunpack.c.l.b16 %v447
        %v1480 = vunpack.c.l.b16 %v448
        %v1481 = vunpack.c.l.b16 %v449
        %v1482 = vunpack.c.l.b16 %v450
        %v1483 = vunpack.c.l.b16 %v451
        %v1484 = vunpack.c.l.b16 %v452
        %v1485 = vunpack.c.l.b16 %v453
        %v1486 = vunpack.c.l.b16 %v454
        %v1487 = vunpack.c.l.b16 %v455
        %v1488 = vunpack.c.l.b16 %v456
        %v1489 = vunpack.c.l.b16 %v457
        %v1490 = vunpack.c.l.b16 %v458
        %v1491 = vunpack.c.l.b16 %v459
        %v1492 = vunpack.c.l.b16 %v460
        %v1493 = vunpack.c.l.b16 %v461
        %v1494 = vunpack.c.l.b16 %v462
        %v1495 = vunpack.c.l.b16 %v463
        %v1496 = vunpack.c.l.b16 %v464
        %v1497 = vunpack.c.l.b16 %v465
        %v1498 = vunpack.c.l.b16 %v466
        %v1499 = vunpack.c.l.b16 %v467
        %v1500 = vunpack.c.l.b16 %v468
        %v1501 = vunpack.c.l.b16 %v469
        %v1502 = vunpack.c.l.b16 %v470
        %v1503 = vunpack.c.l.b16 %v471
        %v1504 = vunpack.c.l.b16 %v472
        %v1505 = vunpack.c.l.b16 %v473
        %v1506 = vunpack.c.l.b16 %v474
        %v1507 = vunpack.c.l.b16 %v475
        %v1508 = vunpack.c.l.b16 %v476
        %v1509 = vunpack.c.l.b16 %v477
        %v1510 = vunpack.c.l.b16 %v478
        %v1511 = vunpack.c.l.b16 %v479
        %v1512 = vunpack.c.l.b16 %v480
        %v1513 = vunpack.c.l.b16 %v481
        %v1514 = vunpack.c.l.b16 %v482
        %v1515 = vunpack.c.l.b16 %v483
        %v1516 = vunpack.c.l.b16 %v484
        %v1517 = vunpack.c.l.b16 %v485
        %v1518 = vunpack.c.l.b16 %v486
        %v1519 = vunpack.c.l.b16 %v487
        %v1520 = vunpack.c.l.b16 %v488
        %v1521 = vunpack.c.l.b16 %v489
        %v1522 = vunpack.c.l.b16 %v490
        %v1523 = vunpack.c.l.b16 %v491
        %v1524 = vunpack.c.l.b16 %v492
        %v1525 = vunpack.c.l.b16 %v493
        %v1526 = vunpack.c.l.b16 %v494
        %v1527 = vunpack.c.l.b16 %v495
        %v1528 = vunpack.c.l.b16 %v496
        %v1529 = vunpack.c.l.b16 %v497
        %v1530 = vunpack.c.l.b16 %v498
        %v1531 = vunpack.c.l.b16 %v499
        %v1532 = vunpack.c.l.b16 %v500
        %v1533 = vunpack.c.l.b16 %v501
        %v1534 = vunpack.c.l.b16 %v502
        %v1535 = vunpack.c.l.b16 %v503
        %v1536 = vunpack.c.l.b16 %v504
        %v1537 = vunpack.c.l.b16 %v505
        %v1538 = vunpack.c.l.b16 %v506
        %v1539 = vunpack.c.l.b16 %v507
        %v1540 = vunpack.c.l.b16 %v508
        %v1541 = vunpack.c.l.b16 %v509
        %v1542 = vunpack.c.l.b16 %v510
        %v1543 = vunpack.c.l.b16 %v511
        %v1544 = vunpack.c.l.b16 %v512
        %v1545 = vunpack.c.l.b16 %v513
        %v1546 = vunpack.c.l.b16 %v514
        %v1547 = vunpack.c.l.b16 %v515
        %v1548 = vunpack.c.l.b16 %v516
        %v1549 = vunpack.c.l.b16 %v517
        %v1550 = vunpack.c.l.b16 %v518
        %v1551 = vunpack.c.l.b16 %v519
        %v1552 = vunpack.c.l.b16 %v520
        %v1553 = vunpack.c.l.b16 %v521
        %v1554 = vunpack.c.l.b16 %v522
        %v1555 = vunpack.c.l.b16 %v523
        %v1556 = vunpack.c.l.b16 %v524
        %v1557 = vunpack.c.l.b16 %v525
        %v1558 = vunpack.c.l.b16 %v526
        %v1559 = vunpack.c.l.b16 %v527
        %v1560 = vunpack.c.l.b16 %v528
        %v1561 = vunpack.c.l.b16 %v529
        %v1562 = vunpack.c.l.b16 %v530
        %v1563 = vunpack.c.l.b16 %v531
        %v1564 = vunpack.c.l.b16 %v532
        %v1565 = vunpack.c.l.b16 %v533
        %v1566 = vunpack.c.l.b16 %v534
        %v1567 = vunpack.c.l.b16 %v535
        %v1568 = vunpack.c.l.b16 %v536
        %v1569 = vunpack.c.l.b16 %v537
        %v1570 = vunpack.c.l.b16 %v538
        %v1571 = vunpack.c.l.b16 %v539
        %v1572 = vunpack.c.l.b16 %v540
        %v1573 = vunpack.c.l.b16 %v541
        %v1574 = vunpack.c.l.b16 %v542
        %v1575 = vunpack.c.l.b16 %v543
        %v1576 = vunpack.c.l.b16 %v544
        %v1577 = vunpack.c.l.b16 %v545
        %v1578 = vunpack.c.l.b16 %v546
        %v1579 = vunpack.c.l.b16 %v547
        %v1580 = vunpack.c.l.b16 %v548
        %v1581 = vunpack.c.l.b16 %v549
        %v1582 = vunpack.c.l.b16 %v550
        %v1583 = vunpack.c.l.b16 %v551
        %v1584 = vunpack.c.l.b16 %v552
        %v1585 = vunpack.c.l.b16 %v553
        %v1586 = vunpack.c.l.b16 %v554
        %v1587 = vunpack.c.l.b16 %v555
        %v1588 = vunpack.c.l.b16 %v556
        %v1589 = vunpack.c.l.b16 %v557
        %v1590 = vunpack.c.l.b16 %v558
        %v1591 = vunpack.c.l.b16 %v559
        %v1592 = vunpack.c.l.b16 %v560
        %v1593 = vunpack.c.l.b16 %v561
        %v1594 = vunpack.c.l.b16 %v562
        %v1595 = vunpack.c.l.b16 %v563
        %v1596 = vunpack.c.l.b16 %v564
        %v1597 = vunpack.c.l.b16 %v565
        %v1598 = vunpack.c.l.b16 %v566
        %v1599 = vunpack.c.l.b16 %v567
        %v1600 = vunpack.c.l.b16 %v568
        %v1601 = vunpack.c.l.b16 %v569
        %v1602 = vunpack.c.l.b16 %v570
        %v1603 = vunpack.c.l.b16 %v571
        %v1604 = vunpack.c.l.b16 %v572
        %v1605 = vunpack.c.l.b16 %v573
        %v1606 = vunpack.c.l.b16 %v574
        %v1607 = vunpack.c.l.b16 %v575
        %v1608 = vunpack.c.l.b16 %v576
        %v1609 = vunpack.c.l.b16 %v577
        %v1610 = vunpack.c.l.b16 %v578
        %v1611 = vunpack.c.l.b16 %v579
        %v1612 = vunpack.c.l.b16 %v580
        %v1613 = vunpack.c.l.b16 %v581
        %v1614 = vunpack.c.l.b16 %v582
        %v1615 = vunpack.c.l.b16 %v583
        %v1616 = vunpack.c.l.b16 %v584
        %v1617 = vunpack.c.l.b16 %v585
        %v1618 = vunpack.c.l.b16 %v586
        %v1619 = vunpack.c.l.b16 %v587
        %v1620 = vunpack.c.l.b16 %v588
        %v1621 = vunpack.c.l.b16 %v589
        %v1622 = vunpack.c.l.b16 %v590
        %v1623 = vunpack.c.l.b16 %v591
        %v1624 = vunpack.c.l.b16 %v592
        %v1625 = vunpack.c.l.b16 %v593
        %v1626 = vunpack.c.l.b16 %v594
        %v1627 = vunpack.c.l.b16 %v595
        %v1628 = vunpack.c.l.b16 %v596
        %v1629 = vunpack.c.l.b16 %v597
        %v1630 = vunpack.c.l.b16 %v598
        %v1631 = vunpack.c.l.b16 %v599
        %v1632 = vunpack.c.l.b16 %v600
        %v1633 = vunpack.c.l.b16 %v601
        %v1634 = vunpack.c.l.b16 %v602
        %v1635 = vunpack.c.l.b16 %v603
        %v1636 = vunpack.c.l.b16 %v604
        %v1637 = vunpack.c.l.b16 %v605
        %v1638 = vunpack.c.l.b16 %v606
        %v1639 = vunpack.c.l.b16 %v607
        %v1640 = vunpack.c.l.b16 %v608
        %v1641 = vunpack.c.l.b16 %v609
        %v1642 = vunpack.c.l.b16 %v610
        %v1643 = vunpack.c.l.b16 %v611
        %v1644 = vunpack.c.l.b16 %v612
        %v1645 = vunpack.c.l.b16 %v613
        %v1646 = vunpack.c.l.b16 %v614
        %v1647 = vunpack.c.l.b16 %v615
        %v1648 = vunpack.c.l.b16 %v616
        %v1649 = vunpack.c.l.b16 %v617
        %v1650 = vunpack.c.l.b16 %v618
        %v1651 = vunpack.c.l.b16 %v619
        %v1652 = vunpack.c.l.b16 %v620
        %v1653 = vunpack.c.l.b16 %v621
        %v1654 = vunpack.c.l.b16 %v622
        %v1655 = vunpack.c.l.b16 %v623
        %v1656 = vunpack.c.l.b16 %v624
        %v1657 = vunpack.c.l.b16 %v625
        %v1658 = vunpack.c.l.b16 %v626
        %v1659 = vunpack.c.l.b16 %v627
        %v1660 = vunpack.c.l.b16 %v628
        %v1661 = vunpack.c.l.b16 %v629
        %v1662 = vunpack.c.l.b16 %v630
        %v1663 = vunpack.c.l.b16 %v631
        %v1664 = vunpack.c.l.b16 %v632
        %v1665 = vunpack.c.l.b16 %v633
        %v1666 = vunpack.c.l.b16 %v634
        %v1667 = vunpack.c.l.b16 %v635
        %v1668 = vunpack.c.l.b16 %v636
        %v1669 = vunpack.c.l.b16 %v637
        %v1670 = vunpack.c.l.b16 %v638
        %v1671 = vunpack.c.l.b16 %v639
        %v1672 = vunpack.c.l.b16 %v640
        %v1673 = vunpack.c.l.b16 %v641
        %v1674 = vunpack.c.l.b16 %v642
        %v1675 = vunpack.c.l.b16 %v643
        %v1676 = vunpack.c.l.b16 %v644
        %v1677 = vunpack.c.l.b16 %v645
        %v1678 = vunpack.c.l.b16 %v646
        %v1679 = vunpack.c.l.b16 %v647
        %v1680 = vunpack.c.l.b16 %v648
        %v1681 = vunpack.c.l.b16 %v649
        %v1682 = vunpack.c.l.b16 %v650
        %v1683 = vunpack.c.l.b16 %v651
        %v1684 = vunpack.c.l.b16 %v652
        %v1685 = vunpack.c.l.b16 %v653
        %v1686 = vunpack.c.l.b16 %v654
        %v1687 = vunpack.c.l.b16 %v655
        %v1688 = vunpack.c.l.b16 %v656
        %v1689 = vunpack.c.l.b16 %v657
        %v1690 = vunpack.c.l.b16 %v658
        %v1691 = vunpack.c.l.b16 %v659
        %v1692 = vunpack.c.l.b16 %v660
        %v1693 = vunpack.c.l.b16 %v661
        %v1694 = vunpack.c.l.b16 %v662
        %v1695 = vunpack.c.l.b16 %v663
        %v1696 = vunpack.c.l.b16 %v664
        %v1697 = vunpack.c.l.b16 %v665
        %v1698 = vunpack.c.l.b16 %v666
        %v1699 = vunpack.c.l.b16 %v667
        %v1700 = vunpack.c.l.b16 %v668
        %v1701 = vunpack.c.l.b16 %v669
        %v1702 = vunpack.c.l.b16 %v670
        %v1703 = vunpack.c.l.b16 %v671
        %v1704 = vunpack.c.l.b16 %v672
        %v1705 = vunpack.c.l.b16 %v673
        %v1706 = vunpack.c.l.b16 %v674
        %v1707 = vunpack.c.l.b16 %v675
        %v1708 = vunpack.c.l.b16 %v676
        %v1709 = vunpack.c.l.b16 %v677
        %v1710 = vunpack.c.l.b16 %v678
        %v1711 = vunpack.c.l.b16 %v679
        %v1712 = vunpack.c.l.b16 %v680
        %v1713 = vunpack.c.l.b16 %v681
        %v1714 = vunpack.c.l.b16 %v682
        %v1715 = vunpack.c.l.b16 %v683
        %v1716 = vunpack.c.l.b16 %v684
        %v1717 = vunpack.c.l.b16 %v685
        %v1718 = vunpack.c.l.b16 %v686
        %v1719 = vunpack.c.l.b16 %v687
        %v1720 = vunpack.c.l.b16 %v688
        %v1721 = vunpack.c.l.b16 %v689
        %v1722 = vunpack.c.l.b16 %v690
        %v1723 = vunpack.c.l.b16 %v691
        %v1724 = vunpack.c.l.b16 %v692
        %v1725 = vunpack.c.l.b16 %v693
        %v1726 = vunpack.c.l.b16 %v694
        %v1727 = vunpack.c.l.b16 %v695
        %v1728 = vunpack.c.l.b16 %v696
        %v1729 = vunpack.c.l.b16 %v697
        %v1730 = vunpack.c.l.b16 %v698
        %v1731 = vunpack.c.l.b16 %v699
        %v1732 = vunpack.c.l.b16 %v700
        %v1733 = vunpack.c.l.b16 %v701
        %v1734 = vunpack.c.l.b16 %v702
        %v1735 = vunpack.c.l.b16 %v703
        %v1736 = vunpack.c.l.b16 %v704
        %v1737 = vunpack.c.l.b16 %v705
        %v1738 = vunpack.c.l.b16 %v706
        %v1739 = vunpack.c.l.b16 %v707
        %v1740 = vunpack.c.l.b16 %v708
        %v1741 = vunpack.c.l.b16 %v709
        %v1742 = vunpack.c.l.b16 %v710
        %v1743 = vunpack.c.l.b16 %v711
        %v1744 = vunpack.c.l.b16 %v712
        %v1745 = vunpack.c.l.b16 %v713
        %v1746 = vunpack.c.l.b16 %v714
        %v1747 = vunpack.c.l.b16 %v715
        %v1748 = vunpack.c.l.b16 %v716
        %v1749 = vunpack.c.l.b16 %v717
        %v1750 = vunpack.c.l.b16 %v718
        %v1751 = vunpack.c.l.b16 %v719
        %v1752 = vunpack.c.l.b16 %v720
        %v1753 = vunpack.c.l.b16 %v721
        %v1754 = vunpack.c.l.b16 %v722
        %v1755 = vunpack.c.l.b16 %v723
        %v1756 = vunpack.c.l.b16 %v724
        %v1757 = vunpack.c.l.b16 %v725
        %v1758 = vunpack.c.l.b16 %v726
        %v1759 = vunpack.c.l.b16 %v727
        %v1760 = vunpack.c.l.b16 %v728
        %v1761 = vunpack.c.l.b16 %v729
        %v1762 = vunpack.c.l.b16 %v730
        %v1763 = vunpack.c.l.b16 %v731
        %v1764 = vunpack.c.l.b16 %v732
        %v1765 = vunpack.c.l.b16 %v733
        %v1766 = vunpack.c.l.b16 %v734
        %v1767 = vunpack.c.l.b16 %v735
        %v1768 = vunpack.c.l.b16 %v736
        %v1769 = vunpack.c.l.b16 %v737
        %v1770 = vunpack.c.l.b16 %v738
        %v1771 = vunpack.c.l.b16 %v739
        %v1772 = vunpack.c.l.b16 %v740
        %v1773 = vunpack.c.l.b16 %v741
        %v1774 = vunpack.c.l.b16 %v742
        %v1775 = vunpack.c.l.b16 %v743
        %v1776 = vunpack.c.l.b16 %v744
        %v1777 = vunpack.c.l.b16 %v745
        %v1778 = vunpack.c.l.b16 %v746
        %v1779 = vunpack.c.l.b16 %v747
        %v1780 = vunpack.c.l.b16 %v748
        %v1781 = vunpack.c.l.b16 %v749
        %v1782 = vpack.c.b16 %v1271, %v1270
        %v1783 = vpack.c.b16 %v1273, %v1272
        %v1784 = vpack.c.b16 %v1275, %v1274
        %v1785 = vpack.c.b16 %v1277, %v1276
        %v1786 = vpack.c.b16 %v1279, %v1278
        %v1787 = vpack.c.b16 %v1281, %v1280
        %v1788 = vpack.c.b16 %v1283, %v1282
        %v1789 = vpack.c.b16 %v1285, %v1284
        %v1790 = vpack.c.b16 %v1287, %v1286
        %v1791 = vpack.c.b16 %v1289, %v1288
        %v1792 = vpack.c.b16 %v1291, %v1290
        %v1793 = vpack.c.b16 %v1293, %v1292
        %v1794 = vpack.c.b16 %v1295, %v1294
        %v1795 = vpack.c.b16 %v1297, %v1296
        %v1796 = vpack.c.b16 %v1299, %v1298
        %v1797 = vpack.c.b16 %v1301, %v1300
        %v1798 = vpack.c.b16 %v1303, %v1302
        %v1799 = vpack.c.b16 %v1305, %v1304
        %v1800 = vpack.c.b16 %v1307, %v1306
        %v1801 = vpack.c.b16 %v1309, %v1308
        %v1802 = vpack.c.b16 %v1311, %v1310
        %v1803 = vpack.c.b16 %v1313, %v1312
        %v1804 = vpack.c.b16 %v1315, %v1314
        %v1805 = vpack.c.b16 %v1317, %v1316
        %v1806 = vpack.c.b16 %v1319, %v1318
        %v1807 = vpack.c.b16 %v1321, %v1320
        %v1808 = vpack.c.b16 %v1323, %v1322
        %v1809 = vpack.c.b16 %v1325, %v1324
        %v1810 = vpack.c.b16 %v1327, %v1326
        %v1811 = vpack.c.b16 %v1329, %v1328
        %v1812 = vpack.c.b16 %v1331, %v1330
        %v1813 = vpack.c.b16 %v1333, %v1332
        %v1814 = vpack.c.b16 %v1335, %v1334
        %v1815 = vpack.c.b16 %v1337, %v1336
        %v1816 = vpack.c.b16 %v1339, %v1338
        %v1817 = vpack.c.b16 %v1341, %v1340
        %v1818 = vpack.c.b16 %v1343, %v1342
        %v1819 = vpack.c.b16 %v1345, %v1344
        %v1820 = vpack.c.b16 %v1347, %v1346
        %v1821 = vpack.c.b16 %v1349, %v1348
        %v1822 = vpack.c.b16 %v1351, %v1350
        %v1823 = vpack.c.b16 %v1353, %v1352
        %v1824 = vpack.c.b16 %v1355, %v1354
        %v1825 = vpack.c.b16 %v1357, %v1356
        %v1826 = vpack.c.b16 %v1359, %v1358
        %v1827 = vpack.c.b16 %v1361, %v1360
        %v1828 = vpack.c.b16 %v1363, %v1362
        %v1829 = vpack.c.b16 %v1365, %v1364
        %v1830 = vpack.c.b16 %v1367, %v1366
        %v1831 = vpack.c.b16 %v1369, %v1368
        %v1832 = vpack.c.b16 %v1371, %v1370
        %v1833 = vpack.c.b16 %v1373, %v1372
        %v1834 = vpack.c.b16 %v1375, %v1374
        %v1835 = vpack.c.b16 %v1377, %v1376
        %v1836 = vpack.c.b16 %v1379, %v1378
        %v1837 = vpack.c.b16 %v1381, %v1380
        %v1838 = vpack.c.b16 %v1383, %v1382
        %v1839 = vpack.c.b16 %v1385, %v1384
        %v1840 = vpack.c.b16 %v1387, %v1386
        %v1841 = vpack.c.b16 %v1389, %v1388
        %v1842 = vpack.c.b16 %v1391, %v1390
        %v1843 = vpack.c.b16 %v1393, %v1392
        %v1844 = vpack.c.b16 %v1395, %v1394
        %v1845 = vpack.c.b16 %v1397, %v1396
        %v1846 = vpack.c.b16 %v1399, %v1398
        %v1847 = vpack.c.b16 %v1401, %v1400
        %v1848 = vpack.c.b16 %v1403, %v1402
        %v1849 = vpack.c.b16 %v1405, %v1404
        %v1850 = vpack.c.b16 %v1407, %v1406
        %v1851 = vpack.c.b16 %v1409, %v1408
        %v1852 = vpack.c.b16 %v1411, %v1410
        %v1853 = vpack.c.b16 %v1413, %v1412
        %v1854 = vpack.c.b16 %v1415, %v1414
        %v1855 = vpack.c.b16 %v1417, %v1416
        %v1856 = vpack.c.b16 %v1419, %v1418
        %v1857 = vpack.c.b16 %v1421, %v1420
        %v1858 = vpack.c.b16 %v1423, %v1422
        %v1859 = vpack.c.b16 %v1425, %v1424
        %v1860 = vpack.c.b16 %v1427, %v1426
        %v1861 = vpack.c.b16 %v1429, %v1428
        %v1862 = vpack.c.b16 %v1431, %v1430
        %v1863 = vpack.c.b16 %v1433, %v1432
        %v1864 = vpack.c.b16 %v1435, %v1434
        %v1865 = vpack.c.b16 %v1437, %v1436
        %v1866 = vpack.c.b16 %v1439, %v1438
        %v1867 = vpack.c.b16 %v1441, %v1440
        %v1868 = vpack.c.b16 %v1443, %v1442
        %v1869 = vpack.c.b16 %v1445, %v1444
        %v1870 = vpack.c.b16 %v1447, %v1446
        %v1871 = vpack.c.b16 %v1449, %v1448
        %v1872 = vpack.c.b16 %v1451, %v1450
        %v1873 = vpack.c.b16 %v1453, %v1452
        %v1874 = vpack.c.b16 %v1455, %v1454
        %v1875 = vpack.c.b16 %v1457, %v1456
        %v1876 = vpack.c.b16 %v1459, %v1458
        %v1877 = vpack.c.b16 %v1461, %v1460
        %v1878 = vpack.c.b16 %v1463, %v1462
        %v1879 = vpack.c.b16 %v1465, %v1464
        %v1880 = vpack.c.b16 %v1467, %v1466
        %v1881 = vpack.c.b16 %v1469, %v1468
        %v1882 = vpack.c.b16 %v1471, %v1470
        %v1883 = vpack.c.b16 %v1473, %v1472
        %v1884 = vpack.c.b16 %v1475, %v1474
        %v1885 = vpack.c.b16 %v1477, %v1476
        %v1886 = vpack.c.b16 %v1479, %v1478
        %v1887 = vpack.c.b16 %v1481, %v1480
        %v1888 = vpack.c.b16 %v1483, %v1482
        %v1889 = vpack.c.b16 %v1485, %v1484
        %v1890 = vpack.c.b16 %v1487, %v1486
        %v1891 = vpack.c.b16 %v1489, %v1488
        %v1892 = vpack.c.b16 %v1491, %v1490
        %v1893 = vpack.c.b16 %v1493, %v1492
        %v1894 = vpack.c.b16 %v1495, %v1494
        %v1895 = vpack.c.b16 %v1497, %v1496
        %v1896 = vpack.c.b16 %v1499, %v1498
        %v1897 = vpack.c.b16 %v1501, %v1500
        %v1898 = vpack.c.b16 %v1503, %v1502
        %v1899 = vpack.c.b16 %v1505, %v1504
        %v1900 = vpack.c.b16 %v1507, %v1506
        %v1901 = vpack.c.b16 %v1509, %v1508
        %v1902 = vpack.c.b16 %v1511, %v1510
        %v1903 = vpack.c.b16 %v1513, %v1512
        %v1904 = vpack.c.b16 %v1515, %v1514
        %v1905 = vpack.c.b16 %v1517, %v1516
        %v1906 = vpack.c.b16 %v1519, %v1518
        %v1907 = vpack.c.b16 %v1521, %v1520
        %v1908 = vpack.c.b16 %v1523, %v1522
        %v1909 = vpack.c.b16 %v1525, %v1524
        %v1910 = vpack.c.b16 %v1527, %v1526
        %v1911 = vpack.c.b16 %v1529, %v1528
        %v1912 = vpack.c.b16 %v1531, %v1530
        %v1913 = vpack.c.b16 %v1533, %v1532
        %v1914 = vpack.c.b16 %v1535, %v1534
        %v1915 = vpack.c.b16 %v1537, %v1536
        %v1916 = vpack.c.b16 %v1539, %v1538
        %v1917 = vpack.c.b16 %v1541, %v1540
        %v1918 = vpack.c.b16 %v1543, %v1542
        %v1919 = vpack.c.b16 %v1545, %v1544
        %v1920 = vpack.c.b16 %v1547, %v1546
        %v1921 = vpack.c.b16 %v1549, %v1548
        %v1922 = vpack.c.b16 %v1551, %v1550
        %v1923 = vpack.c.b16 %v1553, %v1552
        %v1924 = vpack.c.b16 %v1555, %v1554
        %v1925 = vpack.c.b16 %v1557, %v1556
        %v1926 = vpack.c.b16 %v1559, %v1558
        %v1927 = vpack.c.b16 %v1561, %v1560
        %v1928 = vpack.c.b16 %v1563, %v1562
        %v1929 = vpack.c.b16 %v1565, %v1564
        %v1930 = vpack.c.b16 %v1567, %v1566
        %v1931 = vpack.c.b16 %v1569, %v1568
        %v1932 = vpack.c.b16 %v1571, %v1570
        %v1933 = vpack.c.b16 %v1573, %v1572
        %v1934 = vpack.c.b16 %v1575, %v1574
        %v1935 = vpack.c.b16 %v1577, %v1576
        %v1936 = vpack.c.b16 %v1579, %v1578
        %v1937 = vpack.c.b16 %v1581, %v1580
        %v1938 = vpack.c.b16 %v1583, %v1582
        %v1939 = vpack.c.b16 %v1585, %v1584
        %v1940 = vpack.c.b16 %v1587, %v1586
        %v1941 = vpack.c.b16 %v1589, %v1588
        %v1942 = vpack.c.b16 %v1591, %v1590
        %v1943 = vpack.c.b16 %v1593, %v1592
        %v1944 = vpack.c.b16 %v1595, %v1594
        %v1945 = vpack.c.b16 %v1597, %v1596
        %v1946 = vpack.c.b16 %v1599, %v1598
        %v1947 = vpack.c.b16 %v1601, %v1600
        %v1948 = vpack.c.b16 %v1603, %v1602
        %v1949 = vpack.c.b16 %v1605, %v1604
        %v1950 = vpack.c.b16 %v1607, %v1606
        %v1951 = vpack.c.b16 %v1609, %v1608
        %v1952 = vpack.c.b16 %v1611, %v1610
        %v1953 = vpack.c.b16 %v1613, %v1612
        %v1954 = vpack.c.b16 %v1615, %v1614
        %v1955 = vpack.c.b16 %v1617, %v1616
        %v1956 = vpack.c.b16 %v1619, %v1618
        %v1957 = vpack.c.b16 %v1621, %v1620
        %v1958 = vpack.c.b16 %v1623, %v1622
        %v1959 = vpack.c.b16 %v1625, %v1624
        %v1960 = vpack.c.b16 %v1627, %v1626
        %v1961 = vpack.c.b16 %v1629, %v1628
        %v1962 = vpack.c.b16 %v1631, %v1630
        %v1963 = vpack.c.b16 %v1633, %v1632
        %v1964 = vpack.c.b16 %v1635, %v1634
        %v1965 = vpack.c.b16 %v1637, %v1636
        %v1966 = vpack.c.b16 %v1639, %v1638
        %v1967 = vpack.c.b16 %v1641, %v1640
        %v1968 = vpack.c.b16 %v1643, %v1642
        %v1969 = vpack.c.b16 %v1645, %v1644
        %v1970 = vpack.c.b16 %v1647, %v1646
        %v1971 = vpack.c.b16 %v1649, %v1648
        %v1972 = vpack.c.b16 %v1651, %v1650
        %v1973 = vpack.c.b16 %v1653, %v1652
        %v1974 = vpack.c.b16 %v1655, %v1654
        %v1975 = vpack.c.b16 %v1657, %v1656
        %v1976 = vpack.c.b16 %v1659, %v1658
        %v1977 = vpack.c.b16 %v1661, %v1660
        %v1978 = vpack.c.b16 %v1663, %v1662
        %v1979 = vpack.c.b16 %v1665, %v1664
        %v1980 = vpack.c.b16 %v1667, %v1666
        %v1981 = vpack.c.b16 %v1669, %v1668
        %v1982 = vpack.c.b16 %v1671, %v1670
        %v1983 = vpack.c.b16 %v1673, %v1672
        %v1984 = vpack.c.b16 %v1675, %v1674
        %v1985 = vpack.c.b16 %v1677, %v1676
        %v1986 = vpack.c.b16 %v1679, %v1678
        %v1987 = vpack.c.b16 %v1681, %v1680
        %v1988 = vpack.c.b16 %v1683, %v1682
        %v1989 = vpack.c.b16 %v1685, %v1684
        %v1990 = vpack.c.b16 %v1687, %v1686
        %v1991 = vpack.c.b16 %v1689, %v1688
        %v1992 = vpack.c.b16 %v1691, %v1690
        %v1993 = vpack.c.b16 %v1693, %v1692
        %v1994 = vpack.c.b16 %v1695, %v1694
        %v1995 = vpack.c.b16 %v1697, %v1696
        %v1996 = vpack.c.b16 %v1699, %v1698
        %v1997 = vpack.c.b16 %v1701, %v1700
        %v1998 = vpack.c.b16 %v1703, %v1702
        %v1999 = vpack.c.b16 %v1705, %v1704
        %v2000 = vpack.c.b16 %v1707, %v1706
        %v2001 = vpack.c.b16 %v1709, %v1708
        %v2002 = vpack.c.b16 %v1711, %v1710
        %v2003 = vpack.c.b16 %v1713, %v1712
        %v2004 = vpack.c.b16 %v1715, %v1714
        %v2005 = vpack.c.b16 %v1717, %v1716
        %v2006 = vpack.c.b16 %v1719, %v1718
        %v2007 = vpack.c.b16 %v1721, %v1720
        %v2008 = vpack.c.b16 %v1723, %v1722
        %v2009 = vpack.c.b16 %v1725, %v1724
        %v2010 = vpack.c.b16 %v1727, %v1726
        %v2011 = vpack.c.b16 %v1729, %v1728
        %v2012 = vpack.c.b16 %v1731, %v1730
        %v2013 = vpack.c.b16 %v1733, %v1732
        %v2014 = vpack.c.b16 %v1735, %v1734
        %v2015 = vpack.c.b16 %v1737, %v1736
        %v2016 = vpack.c.b16 %v1739, %v1738
        %v2017 = vpack.c.b16 %v1741, %v1740
        %v2018 = vpack.c.b16 %v1743, %v1742
        %v2019 = vpack.c.b16 %v1745, %v1744
        %v2020 = vpack.c.b16 %v1747, %v1746
        %v2021 = vpack.c.b16 %v1749, %v1748
        %v2022 = vpack.c.b16 %v1751, %v1750
        %v2023 = vpack.c.b16 %v1753, %v1752
        %v2024 = vpack.c.b16 %v1755, %v1754
        %v2025 = vpack.c.b16 %v1757, %v1756
        %v2026 = vpack.c.b16 %v1759, %v1758
        %v2027 = vpack.c.b16 %v1761, %v1760
        %v2028 = vpack.c.b16 %v1763, %v1762
        %v2029 = vpack.c.b16 %v1765, %v1764
        %v2030 = vpack.c.b16 %v1767, %v1766
        %v2031 = vpack.c.b16 %v1769, %v1768
        %v2032 = vpack.c.b16 %v1771, %v1770
        %v2033 = vpack.c.b16 %v1773, %v1772
        %v2034 = vpack.c.b16 %v1775, %v1774
        %v2035 = vpack.c.b16 %v1777, %v1776
        %v2036 = vpack.c.b16 %v1779, %v1778
        %v2037 = vpack.c.b16 %v1781, %v1780
        %v2042 = vunpack.c.l.b16 %v750
        %v2043 = vunpack.c.l.b16 %v751
        %v2044 = vunpack.c.l.b16 %v752
        %v2045 = vunpack.c.l.b16 %v753
        %v2046 = vpack.c.b16 %v2043, %v2042
        %v2047 = vpack.c.b16 %v2045, %v2044
        %vm2049 = vcmask 220160
        %v2051 = vsel %vm2049, %v1782, 0
        %v2054 = vsel %vm2049, %v1783, 0
        %v2057 = vsel %vm2049, %v1784, 0
        %v2060 = vsel %vm2049, %v1785, 0
        %v2063 = vsel %vm2049, %v1786, 0
        %v2066 = vsel %vm2049, %v1787, 0
        %v2069 = vsel %vm2049, %v1788, 0
        %v2072 = vsel %vm2049, %v1789, 0
        %v2075 = vsel %vm2049, %v1790, 0
        %v2078 = vsel %vm2049, %v1791, 0
        %v2081 = vsel %vm2049, %v1792, 0
        %v2084 = vsel %vm2049, %v1793, 0
        %v2087 = vsel %vm2049, %v1794, 0
        %v2090 = vsel %vm2049, %v1795, 0
        %v2093 = vsel %vm2049, %v1796, 0
        %v2096 = vsel %vm2049, %v1797, 0
        %v2099 = vsel %vm2049, %v1798, 0
        %v2102 = vsel %vm2049, %v1799, 0
        %v2105 = vsel %vm2049, %v1800, 0
        %v2108 = vsel %vm2049, %v1801, 0
        %v2111 = vsel %vm2049, %v1802, 0
        %v2114 = vsel %vm2049, %v1803, 0
        %v2117 = vsel %vm2049, %v1804, 0
        %v2120 = vsel %vm2049, %v1805, 0
        %v2123 = vsel %vm2049, %v1806, 0
        %v2126 = vsel %vm2049, %v1807, 0
        %v2129 = vsel %vm2049, %v1808, 0
        %v2132 = vsel %vm2049, %v1809, 0
        %v2135 = vsel %vm2049, %v1810, 0
        %v2138 = vsel %vm2049, %v1811, 0
        %v2141 = vsel %vm2049, %v1812, 0
        %v2144 = vsel %vm2049, %v1813, 0
        %v2147 = vsel %vm2049, %v1814, 0
        %v2150 = vsel %vm2049, %v1815, 0
        %v2153 = vsel %vm2049, %v1816, 0
        %v2156 = vsel %vm2049, %v1817, 0
        %v2159 = vsel %vm2049, %v1818, 0
        %v2162 = vsel %vm2049, %v1819, 0
        %v2165 = vsel %vm2049, %v1820, 0
        %v2168 = vsel %vm2049, %v1821, 0
        %v2171 = vsel %vm2049, %v1822, 0
        %v2174 = vsel %vm2049, %v1823, 0
        %v2177 = vsel %vm2049, %v1824, 0
        %v2180 = vsel %vm2049, %v1825, 0
        %v2183 = vsel %vm2049, %v1826, 0
        %v2186 = vsel %vm2049, %v1827, 0
        %v2189 = vsel %vm2049, %v1828, 0
        %v2192 = vsel %vm2049, %v1829, 0
        %v2195 = vsel %vm2049, %v1830, 0
        %v2198 = vsel %vm2049, %v1831, 0
        %v2201 = vsel %vm2049, %v1832, 0
        %v2204 = vsel %vm2049, %v1833, 0
        %v2207 = vsel %vm2049, %v1834, 0
        %v2210 = vsel %vm2049, %v1835, 0
        %v2213 = vsel %vm2049, %v1836, 0
        %v2216 = vsel %vm2049, %v1837, 0
        %v2219 = vsel %vm2049, %v1838, 0
        %v2222 = vsel %vm2049, %v1839, 0
        %v2225 = vsel %vm2049, %v1840, 0
        %v2228 = vsel %vm2049, %v1841, 0
        %v2231 = vsel %vm2049, %v1842, 0
        %v2234 = vsel %vm2049, %v1843, 0
        %v2237 = vsel %vm2049, %v1844, 0
        %v2240 = vsel %vm2049, %v1845, 0
        %v2243 = vsel %vm2049, %v1846, 0
        %v2246 = vsel %vm2049, %v1847, 0
        %v2249 = vsel %vm2049, %v1848, 0
        %v2252 = vsel %vm2049, %v1849, 0
        %v2255 = vsel %vm2049, %v1850, 0
        %v2258 = vsel %vm2049, %v1851, 0
        %v2261 = vsel %vm2049, %v1852, 0
        %v2264 = vsel %vm2049, %v1853, 0
        %v2267 = vsel %vm2049, %v1854, 0
        %v2270 = vsel %vm2049, %v1855, 0
        %v2273 = vsel %vm2049, %v1856, 0
        %v2276 = vsel %vm2049, %v1857, 0
        %v2279 = vsel %vm2049, %v1858, 0
        %v2282 = vsel %vm2049, %v1859, 0
        %v2285 = vsel %vm2049, %v1860, 0
        %v2288 = vsel %vm2049, %v1861, 0
        %v2291 = vsel %vm2049, %v1862, 0
        %v2294 = vsel %vm2049, %v1863, 0
        %v2297 = vsel %vm2049, %v1864, 0
        %v2300 = vsel %vm2049, %v1865, 0
        %v2303 = vsel %vm2049, %v1866, 0
        %v2306 = vsel %vm2049, %v1867, 0
        %v2309 = vsel %vm2049, %v1868, 0
        %v2312 = vsel %vm2049, %v1869, 0
        %v2315 = vsel %vm2049, %v1870, 0
        %v2318 = vsel %vm2049, %v1871, 0
        %v2321 = vsel %vm2049, %v1872, 0
        %v2324 = vsel %vm2049, %v1873, 0
        %v2327 = vsel %vm2049, %v1874, 0
        %v2330 = vsel %vm2049, %v1875, 0
        %v2333 = vsel %vm2049, %v1876, 0
        %v2336 = vsel %vm2049, %v1877, 0
        %v2339 = vsel %vm2049, %v1878, 0
        %v2342 = vsel %vm2049, %v1879, 0
        %v2345 = vsel %vm2049, %v1880, 0
        %v2348 = vsel %vm2049, %v1881, 0
        %v2351 = vsel %vm2049, %v1882, 0
        %v2354 = vsel %vm2049, %v1883, 0
        %v2357 = vsel %vm2049, %v1884, 0
        %v2360 = vsel %vm2049, %v1885, 0
        %v2363 = vsel %vm2049, %v1886, 0
        %v2366 = vsel %vm2049, %v1887, 0
        %v2369 = vsel %vm2049, %v1888, 0
        %v2372 = vsel %vm2049, %v1889, 0
        %v2375 = vsel %vm2049, %v1890, 0
        %v2378 = vsel %vm2049, %v1891, 0
        %v2381 = vsel %vm2049, %v1892, 0
        %v2384 = vsel %vm2049, %v1893, 0
        %v2387 = vsel %vm2049, %v1894, 0
        %v2390 = vsel %vm2049, %v1895, 0
        %v2393 = vsel %vm2049, %v1896, 0
        %v2396 = vsel %vm2049, %v1897, 0
        %v2399 = vsel %vm2049, %v1898, 0
        %v2402 = vsel %vm2049, %v1899, 0
        %v2405 = vsel %vm2049, %v1900, 0
        %v2408 = vsel %vm2049, %v1901, 0
        %v2411 = vsel %vm2049, %v1902, 0
        %v2414 = vsel %vm2049, %v1903, 0
        %v2417 = vsel %vm2049, %v1904, 0
        %v2420 = vsel %vm2049, %v1905, 0
        %v2423 = vsel %vm2049, %v1906, 0
        %v2426 = vsel %vm2049, %v1907, 0
        %v2429 = vsel %vm2049, %v1908, 0
        %v2432 = vsel %vm2049, %v1909, 0
        %v2435 = vsel %vm2049, %v1910, 0
        %v2438 = vsel %vm2049, %v1911, 0
        %v2441 = vsel %vm2049, %v1912, 0
        %v2444 = vsel %vm2049, %v1913, 0
        %v2447 = vsel %vm2049, %v1914, 0
        %v2450 = vsel %vm2049, %v1915, 0
        %v2453 = vsel %vm2049, %v1916, 0
        %v2456 = vsel %vm2049, %v1917, 0
        %v2459 = vsel %vm2049, %v1918, 0
        %v2462 = vsel %vm2049, %v1919, 0
        %v2465 = vsel %vm2049, %v1920, 0
        %v2468 = vsel %vm2049, %v1921, 0
        %v2471 = vsel %vm2049, %v1922, 0
        %v2474 = vsel %vm2049, %v1923, 0
        %v2477 = vsel %vm2049, %v1924, 0
        %v2480 = vsel %vm2049, %v1925, 0
        %v2483 = vsel %vm2049, %v1926, 0
        %v2486 = vsel %vm2049, %v1927, 0
        %v2489 = vsel %vm2049, %v1928, 0
        %v2492 = vsel %vm2049, %v1929, 0
        %v2495 = vsel %vm2049, %v1930, 0
        %v2498 = vsel %vm2049, %v1931, 0
        %v2501 = vsel %vm2049, %v1932, 0
        %v2504 = vsel %vm2049, %v1933, 0
        %v2507 = vsel %vm2049, %v1934, 0
        %v2510 = vsel %vm2049, %v1935, 0
        %v2513 = vsel %vm2049, %v1936, 0
        %v2516 = vsel %vm2049, %v1937, 0
        %v2519 = vsel %vm2049, %v1938, 0
        %v2522 = vsel %vm2049, %v1939, 0
        %v2525 = vsel %vm2049, %v1940, 0
        %v2528 = vsel %vm2049, %v1941, 0
        %v2531 = vsel %vm2049, %v1942, 0
        %v2534 = vsel %vm2049, %v1943, 0
        %v2537 = vsel %vm2049, %v1944, 0
        %v2540 = vsel %vm2049, %v1945, 0
        %v2543 = vsel %vm2049, %v1946, 0
        %v2546 = vsel %vm2049, %v1947, 0
        %v2549 = vsel %vm2049, %v1948, 0
        %v2552 = vsel %vm2049, %v1949, 0
        %v2555 = vsel %vm2049, %v1950, 0
        %v2558 = vsel %vm2049, %v1951, 0
        %v2561 = vsel %vm2049, %v1952, 0
        %v2564 = vsel %vm2049, %v1953, 0
        %v2567 = vsel %vm2049, %v1954, 0
        %v2570 = vsel %vm2049, %v1955, 0
        %v2573 = vsel %vm2049, %v1956, 0
        %v2576 = vsel %vm2049, %v1957, 0
        %v2579 = vsel %vm2049, %v1958, 0
        %v2582 = vsel %vm2049, %v1959, 0
        %v2585 = vsel %vm2049, %v1960, 0
        %v2588 = vsel %vm2049, %v1961, 0
        %v2591 = vsel %vm2049, %v1962, 0
        %v2594 = vsel %vm2049, %v1963, 0
        %v2597 = vsel %vm2049, %v1964, 0
        %v2600 = vsel %vm2049, %v1965, 0
        %v2603 = vsel %vm2049, %v1966, 0
        %v2606 = vsel %vm2049, %v1967, 0
        %v2609 = vsel %vm2049, %v1968, 0
        %v2612 = vsel %vm2049, %v1969, 0
        %v2615 = vsel %vm2049, %v1970, 0
        %v2618 = vsel %vm2049, %v1971, 0
        %v2621 = vsel %vm2049, %v1972, 0
        %v2624 = vsel %vm2049, %v1973, 0
        %v2627 = vsel %vm2049, %v1974, 0
        %v2630 = vsel %vm2049, %v1975, 0
        %v2633 = vsel %vm2049, %v1976, 0
        %v2636 = vsel %vm2049, %v1977, 0
        %v2639 = vsel %vm2049, %v1978, 0
        %v2642 = vsel %vm2049, %v1979, 0
        %v2645 = vsel %vm2049, %v1980, 0
        %v2648 = vsel %vm2049, %v1981, 0
        %v2651 = vsel %vm2049, %v1982, 0
        %v2654 = vsel %vm2049, %v1983, 0
        %v2657 = vsel %vm2049, %v1984, 0
        %v2660 = vsel %vm2049, %v1985, 0
        %v2663 = vsel %vm2049, %v1986, 0
        %v2666 = vsel %vm2049, %v1987, 0
        %v2669 = vsel %vm2049, %v1988, 0
        %v2672 = vsel %vm2049, %v1989, 0
        %v2675 = vsel %vm2049, %v1990, 0
        %v2678 = vsel %vm2049, %v1991, 0
        %v2681 = vsel %vm2049, %v1992, 0
        %v2684 = vsel %vm2049, %v1993, 0
        %v2687 = vsel %vm2049, %v1994, 0
        %v2690 = vsel %vm2049, %v1995, 0
        %v2693 = vsel %vm2049, %v1996, 0
        %v2696 = vsel %vm2049, %v1997, 0
        %v2699 = vsel %vm2049, %v1998, 0
        %v2702 = vsel %vm2049, %v1999, 0
        %v2705 = vsel %vm2049, %v2000, 0
        %v2708 = vsel %vm2049, %v2001, 0
        %v2711 = vsel %vm2049, %v2002, 0
        %v2714 = vsel %vm2049, %v2003, 0
        %v2717 = vsel %vm2049, %v2004, 0
        %v2720 = vsel %vm2049, %v2005, 0
        %v2723 = vsel %vm2049, %v2006, 0
        %v2726 = vsel %vm2049, %v2007, 0
        %v2729 = vsel %vm2049, %v2008, 0
        %v2732 = vsel %vm2049, %v2009, 0
        %v2735 = vsel %vm2049, %v2010, 0
        %v2738 = vsel %vm2049, %v2011, 0
        %v2741 = vsel %vm2049, %v2012, 0
        %v2744 = vsel %vm2049, %v2013, 0
        %v2747 = vsel %vm2049, %v2014, 0
        %v2750 = vsel %vm2049, %v2015, 0
        %v2753 = vsel %vm2049, %v2016, 0
        %v2756 = vsel %vm2049, %v2017, 0
        %v2759 = vsel %vm2049, %v2018, 0
        %v2762 = vsel %vm2049, %v2019, 0
        %v2765 = vsel %vm2049, %v2020, 0
        %v2768 = vsel %vm2049, %v2021, 0
        %v2771 = vsel %vm2049, %v2022, 0
        %v2774 = vsel %vm2049, %v2023, 0
        %v2777 = vsel %vm2049, %v2024, 0
        %v2780 = vsel %vm2049, %v2025, 0
        %v2783 = vsel %vm2049, %v2026, 0
        %v2786 = vsel %vm2049, %v2027, 0
        %v2789 = vsel %vm2049, %v2028, 0
        %v2792 = vsel %vm2049, %v2029, 0
        %v2795 = vsel %vm2049, %v2030, 0
        %v2798 = vsel %vm2049, %v2031, 0
        %v2801 = vsel %vm2049, %v2032, 0
        %v2804 = vsel %vm2049, %v2033, 0
        %v2807 = vsel %vm2049, %v2034, 0
        %v2810 = vsel %vm2049, %v2035, 0
        %v2813 = vsel %vm2049, %v2036, 0
        %v2816 = vsel %vm2049, %v2037, 0
        %vm2818 = vcmask 1044480
        %vm2819 = vcmask 1045504
        %v2820 = vsel %vm2818, 4294967295, 65535
        %v2821 = vsel %vm2819, %v2820, 0
        %v2823 = vand.u32 %v2047, %v2821
        %2825 = vmatpush.bf16.msra.mxu0 0
        %2826 = vmatpush.bf16.msra.mxu0 0
        %2827 = vmatpush.bf16.msra.mxu0 0
        %2828 = vmatpush.bf16.msra.mxu0 0
        %2829 = vmatpush.bf16.msra.mxu0 0
        %2830 = vmatpush.bf16.msra.mxu0 0
        %2831 = vmatpush.bf16.msra.mxu0 %v2823
        %2832 = vmatpush.bf16.msra.mxu0 %v2046
        %2833 = vmatmul.bf16.gmra.mxu0 %v2051
        %v2834 = vpop.f32.mrf.mxu0
        %v2835 = vadd.f32 %v756, %v2834
        %v2836 = vpop.f32.mrf.mxu0
        %v2837 = vadd.f32 %v756, %v2836
        %2838 = vmatmul.bf16.gmra.mxu0 %v2054
        %v2839 = vpop.f32.mrf.mxu0
        %v2840 = vadd.f32 %v756, %v2839
        %v2841 = vpop.f32.mrf.mxu0
        %v2842 = vadd.f32 %v756, %v2841
        %2843 = vmatmul.bf16.gmra.mxu0 %v2057
        %v2844 = vpop.f32.mrf.mxu0
        %v2845 = vadd.f32 %v756, %v2844
        %v2846 = vpop.f32.mrf.mxu0
        %v2847 = vadd.f32 %v756, %v2846
        %2848 = vmatmul.bf16.gmra.mxu0 %v2060
        %v2849 = vpop.f32.mrf.mxu0
        %v2850 = vadd.f32 %v756, %v2849
        %v2851 = vpop.f32.mrf.mxu0
        %v2852 = vadd.f32 %v756, %v2851
        %2853 = vmatmul.bf16.gmra.mxu0 %v2063
        %v2854 = vpop.f32.mrf.mxu0
        %v2855 = vadd.f32 %v756, %v2854
        %v2856 = vpop.f32.mrf.mxu0
        %v2857 = vadd.f32 %v756, %v2856
        %2858 = vmatmul.bf16.gmra.mxu0 %v2066
        %v2859 = vpop.f32.mrf.mxu0
        %v2860 = vadd.f32 %v756, %v2859
        %v2861 = vpop.f32.mrf.mxu0
        %v2862 = vadd.f32 %v756, %v2861
        %2863 = vmatmul.bf16.gmra.mxu0 %v2069
        %v2864 = vpop.f32.mrf.mxu0
        %v2865 = vadd.f32 %v756, %v2864
        %v2866 = vpop.f32.mrf.mxu0
        %v2867 = vadd.f32 %v756, %v2866
        %2868 = vmatmul.bf16.gmra.mxu0 %v2072
        %v2869 = vpop.f32.mrf.mxu0
        %v2870 = vadd.f32 %v756, %v2869
        %v2871 = vpop.f32.mrf.mxu0
        %v2872 = vadd.f32 %v756, %v2871
        %2873 = vmatmul.bf16.gmra.mxu0 %v2075
        %v2874 = vpop.f32.mrf.mxu0
        %v2875 = vadd.f32 %v756, %v2874
        %v2876 = vpop.f32.mrf.mxu0
        %v2877 = vadd.f32 %v756, %v2876
        %2878 = vmatmul.bf16.gmra.mxu0 %v2078
        %v2879 = vpop.f32.mrf.mxu0
        %v2880 = vadd.f32 %v756, %v2879
        %v2881 = vpop.f32.mrf.mxu0
        %v2882 = vadd.f32 %v756, %v2881
        %2883 = vmatmul.bf16.gmra.mxu0 %v2081
        %v2884 = vpop.f32.mrf.mxu0
        %v2885 = vadd.f32 %v756, %v2884
        %v2886 = vpop.f32.mrf.mxu0
        %v2887 = vadd.f32 %v756, %v2886
        %2888 = vmatmul.bf16.gmra.mxu0 %v2084
        %v2889 = vpop.f32.mrf.mxu0
        %v2890 = vadd.f32 %v756, %v2889
        %v2891 = vpop.f32.mrf.mxu0
        %v2892 = vadd.f32 %v756, %v2891
        %2893 = vmatmul.bf16.gmra.mxu0 %v2087
        %v2894 = vpop.f32.mrf.mxu0
        %v2895 = vadd.f32 %v756, %v2894
        %v2896 = vpop.f32.mrf.mxu0
        %v2897 = vadd.f32 %v756, %v2896
        %2898 = vmatmul.bf16.gmra.mxu0 %v2090
        %v2899 = vpop.f32.mrf.mxu0
        %v2900 = vadd.f32 %v756, %v2899
        %v2901 = vpop.f32.mrf.mxu0
        %v2902 = vadd.f32 %v756, %v2901
        %2903 = vmatmul.bf16.gmra.mxu0 %v2093
        %v2904 = vpop.f32.mrf.mxu0
        %v2905 = vadd.f32 %v756, %v2904
        %v2906 = vpop.f32.mrf.mxu0
        %v2907 = vadd.f32 %v756, %v2906
        %2908 = vmatmul.bf16.gmra.mxu0 %v2096
        %v2909 = vpop.f32.mrf.mxu0
        %v2910 = vadd.f32 %v756, %v2909
        %v2911 = vpop.f32.mrf.mxu0
        %v2912 = vadd.f32 %v756, %v2911
        %2913 = vmatmul.bf16.gmra.mxu0 %v2099
        %v2914 = vpop.f32.mrf.mxu0
        %v2915 = vadd.f32 %v756, %v2914
        %v2916 = vpop.f32.mrf.mxu0
        %v2917 = vadd.f32 %v756, %v2916
        %2918 = vmatmul.bf16.gmra.mxu0 %v2102
        %v2919 = vpop.f32.mrf.mxu0
        %v2920 = vadd.f32 %v756, %v2919
        %v2921 = vpop.f32.mrf.mxu0
        %v2922 = vadd.f32 %v756, %v2921
        %2923 = vmatmul.bf16.gmra.mxu0 %v2105
        %v2924 = vpop.f32.mrf.mxu0
        %v2925 = vadd.f32 %v756, %v2924
        %v2926 = vpop.f32.mrf.mxu0
        %v2927 = vadd.f32 %v756, %v2926
        %2928 = vmatmul.bf16.gmra.mxu0 %v2108
        %v2929 = vpop.f32.mrf.mxu0
        %v2930 = vadd.f32 %v756, %v2929
        %v2931 = vpop.f32.mrf.mxu0
        %v2932 = vadd.f32 %v756, %v2931
        %2933 = vmatmul.bf16.gmra.mxu0 %v2111
        %v2934 = vpop.f32.mrf.mxu0
        %v2935 = vadd.f32 %v756, %v2934
        %v2936 = vpop.f32.mrf.mxu0
        %v2937 = vadd.f32 %v756, %v2936
        %2938 = vmatmul.bf16.gmra.mxu0 %v2114
        %v2939 = vpop.f32.mrf.mxu0
        %v2940 = vadd.f32 %v756, %v2939
        %v2941 = vpop.f32.mrf.mxu0
        %v2942 = vadd.f32 %v756, %v2941
        %2943 = vmatmul.bf16.gmra.mxu0 %v2117
        %v2944 = vpop.f32.mrf.mxu0
        %v2945 = vadd.f32 %v756, %v2944
        %v2946 = vpop.f32.mrf.mxu0
        %v2947 = vadd.f32 %v756, %v2946
        %2948 = vmatmul.bf16.gmra.mxu0 %v2120
        %v2949 = vpop.f32.mrf.mxu0
        %v2950 = vadd.f32 %v756, %v2949
        %v2951 = vpop.f32.mrf.mxu0
        %v2952 = vadd.f32 %v756, %v2951
        %2953 = vmatmul.bf16.gmra.mxu0 %v2123
        %v2954 = vpop.f32.mrf.mxu0
        %v2955 = vadd.f32 %v756, %v2954
        %v2956 = vpop.f32.mrf.mxu0
        %v2957 = vadd.f32 %v756, %v2956
        %2958 = vmatmul.bf16.gmra.mxu0 %v2126
        %v2959 = vpop.f32.mrf.mxu0
        %v2960 = vadd.f32 %v756, %v2959
        %v2961 = vpop.f32.mrf.mxu0
        %v2962 = vadd.f32 %v756, %v2961
        %2963 = vmatmul.bf16.gmra.mxu0 %v2129
        %v2964 = vpop.f32.mrf.mxu0
        %v2965 = vadd.f32 %v756, %v2964
        %v2966 = vpop.f32.mrf.mxu0
        %v2967 = vadd.f32 %v756, %v2966
        %2968 = vmatmul.bf16.gmra.mxu0 %v2132
        %v2969 = vpop.f32.mrf.mxu0
        %v2970 = vadd.f32 %v756, %v2969
        %v2971 = vpop.f32.mrf.mxu0
        %v2972 = vadd.f32 %v756, %v2971
        %2973 = vmatmul.bf16.gmra.mxu0 %v2135
        %v2974 = vpop.f32.mrf.mxu0
        %v2975 = vadd.f32 %v756, %v2974
        %v2976 = vpop.f32.mrf.mxu0
        %v2977 = vadd.f32 %v756, %v2976
        %2978 = vmatmul.bf16.gmra.mxu0 %v2138
        %v2979 = vpop.f32.mrf.mxu0
        %v2980 = vadd.f32 %v756, %v2979
        %v2981 = vpop.f32.mrf.mxu0
        %v2982 = vadd.f32 %v756, %v2981
        %2983 = vmatmul.bf16.gmra.mxu0 %v2141
        %v2984 = vpop.f32.mrf.mxu0
        %v2985 = vadd.f32 %v756, %v2984
        %v2986 = vpop.f32.mrf.mxu0
        %v2987 = vadd.f32 %v756, %v2986
        %2988 = vmatmul.bf16.gmra.mxu0 %v2144
        %v2989 = vpop.f32.mrf.mxu0
        %v2990 = vadd.f32 %v756, %v2989
        %v2991 = vpop.f32.mrf.mxu0
        %v2992 = vadd.f32 %v756, %v2991
        %2993 = vmatmul.bf16.gmra.mxu0 %v2147
        %v2994 = vpop.f32.mrf.mxu0
        %v2995 = vadd.f32 %v756, %v2994
        %v2996 = vpop.f32.mrf.mxu0
        %v2997 = vadd.f32 %v756, %v2996
        %2998 = vmatmul.bf16.gmra.mxu0 %v2150
        %v2999 = vpop.f32.mrf.mxu0
        %v3000 = vadd.f32 %v756, %v2999
        %v3001 = vpop.f32.mrf.mxu0
        %v3002 = vadd.f32 %v756, %v3001
        %3003 = vmatmul.bf16.gmra.mxu0 %v2153
        %v3004 = vpop.f32.mrf.mxu0
        %v3005 = vadd.f32 %v756, %v3004
        %v3006 = vpop.f32.mrf.mxu0
        %v3007 = vadd.f32 %v756, %v3006
        %3008 = vmatmul.bf16.gmra.mxu0 %v2156
        %v3009 = vpop.f32.mrf.mxu0
        %v3010 = vadd.f32 %v756, %v3009
        %v3011 = vpop.f32.mrf.mxu0
        %v3012 = vadd.f32 %v756, %v3011
        %3013 = vmatmul.bf16.gmra.mxu0 %v2159
        %v3014 = vpop.f32.mrf.mxu0
        %v3015 = vadd.f32 %v756, %v3014
        %v3016 = vpop.f32.mrf.mxu0
        %v3017 = vadd.f32 %v756, %v3016
        %3018 = vmatmul.bf16.gmra.mxu0 %v2162
        %v3019 = vpop.f32.mrf.mxu0
        %v3020 = vadd.f32 %v756, %v3019
        %v3021 = vpop.f32.mrf.mxu0
        %v3022 = vadd.f32 %v756, %v3021
        %3023 = vmatmul.bf16.gmra.mxu0 %v2165
        %v3024 = vpop.f32.mrf.mxu0
        %v3025 = vadd.f32 %v756, %v3024
        %v3026 = vpop.f32.mrf.mxu0
        %v3027 = vadd.f32 %v756, %v3026
        %3028 = vmatmul.bf16.gmra.mxu0 %v2168
        %v3029 = vpop.f32.mrf.mxu0
        %v3030 = vadd.f32 %v756, %v3029
        %v3031 = vpop.f32.mrf.mxu0
        %v3032 = vadd.f32 %v756, %v3031
        %3033 = vmatmul.bf16.gmra.mxu0 %v2171
        %v3034 = vpop.f32.mrf.mxu0
        %v3035 = vadd.f32 %v756, %v3034
        %v3036 = vpop.f32.mrf.mxu0
        %v3037 = vadd.f32 %v756, %v3036
        %3038 = vmatmul.bf16.gmra.mxu0 %v2174
        %v3039 = vpop.f32.mrf.mxu0
        %v3040 = vadd.f32 %v756, %v3039
        %v3041 = vpop.f32.mrf.mxu0
        %v3042 = vadd.f32 %v756, %v3041
        %3043 = vmatmul.bf16.gmra.mxu0 %v2177
        %v3044 = vpop.f32.mrf.mxu0
        %v3045 = vadd.f32 %v756, %v3044
        %v3046 = vpop.f32.mrf.mxu0
        %v3047 = vadd.f32 %v756, %v3046
        %3048 = vmatmul.bf16.gmra.mxu0 %v2180
        %v3049 = vpop.f32.mrf.mxu0
        %v3050 = vadd.f32 %v756, %v3049
        %v3051 = vpop.f32.mrf.mxu0
        %v3052 = vadd.f32 %v756, %v3051
        %3053 = vmatmul.bf16.gmra.mxu0 %v2183
        %v3054 = vpop.f32.mrf.mxu0
        %v3055 = vadd.f32 %v756, %v3054
        %v3056 = vpop.f32.mrf.mxu0
        %v3057 = vadd.f32 %v756, %v3056
        %3058 = vmatmul.bf16.gmra.mxu0 %v2186
        %v3059 = vpop.f32.mrf.mxu0
        %v3060 = vadd.f32 %v756, %v3059
        %v3061 = vpop.f32.mrf.mxu0
        %v3062 = vadd.f32 %v756, %v3061
        %3063 = vmatmul.bf16.gmra.mxu0 %v2189
        %v3064 = vpop.f32.mrf.mxu0
        %v3065 = vadd.f32 %v756, %v3064
        %v3066 = vpop.f32.mrf.mxu0
        %v3067 = vadd.f32 %v756, %v3066
        %3068 = vmatmul.bf16.gmra.mxu0 %v2192
        %v3069 = vpop.f32.mrf.mxu0
        %v3070 = vadd.f32 %v756, %v3069
        %v3071 = vpop.f32.mrf.mxu0
        %v3072 = vadd.f32 %v756, %v3071
        %3073 = vmatmul.bf16.gmra.mxu0 %v2195
        %v3074 = vpop.f32.mrf.mxu0
        %v3075 = vadd.f32 %v756, %v3074
        %v3076 = vpop.f32.mrf.mxu0
        %v3077 = vadd.f32 %v756, %v3076
        %3078 = vmatmul.bf16.gmra.mxu0 %v2198
        %v3079 = vpop.f32.mrf.mxu0
        %v3080 = vadd.f32 %v756, %v3079
        %v3081 = vpop.f32.mrf.mxu0
        %v3082 = vadd.f32 %v756, %v3081
        %3083 = vmatmul.bf16.gmra.mxu0 %v2201
        %v3084 = vpop.f32.mrf.mxu0
        %v3085 = vadd.f32 %v756, %v3084
        %v3086 = vpop.f32.mrf.mxu0
        %v3087 = vadd.f32 %v756, %v3086
        %3088 = vmatmul.bf16.gmra.mxu0 %v2204
        %v3089 = vpop.f32.mrf.mxu0
        %v3090 = vadd.f32 %v756, %v3089
        %v3091 = vpop.f32.mrf.mxu0
        %v3092 = vadd.f32 %v756, %v3091
        %3093 = vmatmul.bf16.gmra.mxu0 %v2207
        %v3094 = vpop.f32.mrf.mxu0
        %v3095 = vadd.f32 %v756, %v3094
        %v3096 = vpop.f32.mrf.mxu0
        %v3097 = vadd.f32 %v756, %v3096
        %3098 = vmatmul.bf16.gmra.mxu0 %v2210
        %v3099 = vpop.f32.mrf.mxu0
        %v3100 = vadd.f32 %v756, %v3099
        %v3101 = vpop.f32.mrf.mxu0
        %v3102 = vadd.f32 %v756, %v3101
        %3103 = vmatmul.bf16.gmra.mxu0 %v2213
        %v3104 = vpop.f32.mrf.mxu0
        %v3105 = vadd.f32 %v756, %v3104
        %v3106 = vpop.f32.mrf.mxu0
        %v3107 = vadd.f32 %v756, %v3106
        %3108 = vmatmul.bf16.gmra.mxu0 %v2216
        %v3109 = vpop.f32.mrf.mxu0
        %v3110 = vadd.f32 %v756, %v3109
        %v3111 = vpop.f32.mrf.mxu0
        %v3112 = vadd.f32 %v756, %v3111
        %3113 = vmatmul.bf16.gmra.mxu0 %v2219
        %v3114 = vpop.f32.mrf.mxu0
        %v3115 = vadd.f32 %v756, %v3114
        %v3116 = vpop.f32.mrf.mxu0
        %v3117 = vadd.f32 %v756, %v3116
        %3118 = vmatmul.bf16.gmra.mxu0 %v2222
        %v3119 = vpop.f32.mrf.mxu0
        %v3120 = vadd.f32 %v756, %v3119
        %v3121 = vpop.f32.mrf.mxu0
        %v3122 = vadd.f32 %v756, %v3121
        %3123 = vmatmul.bf16.gmra.mxu0 %v2225
        %v3124 = vpop.f32.mrf.mxu0
        %v3125 = vadd.f32 %v756, %v3124
        %v3126 = vpop.f32.mrf.mxu0
        %v3127 = vadd.f32 %v756, %v3126
        %3128 = vmatmul.bf16.gmra.mxu0 %v2228
        %v3129 = vpop.f32.mrf.mxu0
        %v3130 = vadd.f32 %v756, %v3129
        %v3131 = vpop.f32.mrf.mxu0
        %v3132 = vadd.f32 %v756, %v3131
        %3133 = vmatmul.bf16.gmra.mxu0 %v2231
        %v3134 = vpop.f32.mrf.mxu0
        %v3135 = vadd.f32 %v756, %v3134
        %v3136 = vpop.f32.mrf.mxu0
        %v3137 = vadd.f32 %v756, %v3136
        %3138 = vmatmul.bf16.gmra.mxu0 %v2234
        %v3139 = vpop.f32.mrf.mxu0
        %v3140 = vadd.f32 %v756, %v3139
        %v3141 = vpop.f32.mrf.mxu0
        %v3142 = vadd.f32 %v756, %v3141
        %3143 = vmatmul.bf16.gmra.mxu0 %v2237
        %v3144 = vpop.f32.mrf.mxu0
        %v3145 = vadd.f32 %v756, %v3144
        %v3146 = vpop.f32.mrf.mxu0
        %v3147 = vadd.f32 %v756, %v3146
        %3148 = vmatmul.bf16.gmra.mxu0 %v2240
        %v3149 = vpop.f32.mrf.mxu0
        %v3150 = vadd.f32 %v756, %v3149
        %v3151 = vpop.f32.mrf.mxu0
        %v3152 = vadd.f32 %v756, %v3151
        %3153 = vmatmul.bf16.gmra.mxu0 %v2243
        %v3154 = vpop.f32.mrf.mxu0
        %v3155 = vadd.f32 %v756, %v3154
        %v3156 = vpop.f32.mrf.mxu0
        %v3157 = vadd.f32 %v756, %v3156
        %3158 = vmatmul.bf16.gmra.mxu0 %v2246
        %v3159 = vpop.f32.mrf.mxu0
        %v3160 = vadd.f32 %v756, %v3159
        %v3161 = vpop.f32.mrf.mxu0
        %v3162 = vadd.f32 %v756, %v3161
        %3163 = vmatmul.bf16.gmra.mxu0 %v2249
        %v3164 = vpop.f32.mrf.mxu0
        %v3165 = vadd.f32 %v756, %v3164
        %v3166 = vpop.f32.mrf.mxu0
        %v3167 = vadd.f32 %v756, %v3166
        %3168 = vmatmul.bf16.gmra.mxu0 %v2252
        %v3169 = vpop.f32.mrf.mxu0
        %v3170 = vadd.f32 %v756, %v3169
        %v3171 = vpop.f32.mrf.mxu0
        %v3172 = vadd.f32 %v756, %v3171
        %3173 = vmatmul.bf16.gmra.mxu0 %v2255
        %v3174 = vpop.f32.mrf.mxu0
        %v3175 = vadd.f32 %v756, %v3174
        %v3176 = vpop.f32.mrf.mxu0
        %v3177 = vadd.f32 %v756, %v3176
        %3178 = vmatmul.bf16.gmra.mxu0 %v2258
        %v3179 = vpop.f32.mrf.mxu0
        %v3180 = vadd.f32 %v756, %v3179
        %v3181 = vpop.f32.mrf.mxu0
        %v3182 = vadd.f32 %v756, %v3181
        %3183 = vmatmul.bf16.gmra.mxu0 %v2261
        %v3184 = vpop.f32.mrf.mxu0
        %v3185 = vadd.f32 %v756, %v3184
        %v3186 = vpop.f32.mrf.mxu0
        %v3187 = vadd.f32 %v756, %v3186
        %3188 = vmatmul.bf16.gmra.mxu0 %v2264
        %v3189 = vpop.f32.mrf.mxu0
        %v3190 = vadd.f32 %v756, %v3189
        %v3191 = vpop.f32.mrf.mxu0
        %v3192 = vadd.f32 %v756, %v3191
        %3193 = vmatmul.bf16.gmra.mxu0 %v2267
        %v3194 = vpop.f32.mrf.mxu0
        %v3195 = vadd.f32 %v756, %v3194
        %v3196 = vpop.f32.mrf.mxu0
        %v3197 = vadd.f32 %v756, %v3196
        %3198 = vmatmul.bf16.gmra.mxu0 %v2270
        %v3199 = vpop.f32.mrf.mxu0
        %v3200 = vadd.f32 %v756, %v3199
        %v3201 = vpop.f32.mrf.mxu0
        %v3202 = vadd.f32 %v756, %v3201
        %3203 = vmatmul.bf16.gmra.mxu0 %v2273
        %v3204 = vpop.f32.mrf.mxu0
        %v3205 = vadd.f32 %v756, %v3204
        %v3206 = vpop.f32.mrf.mxu0
        %v3207 = vadd.f32 %v756, %v3206
        %3208 = vmatmul.bf16.gmra.mxu0 %v2276
        %v3209 = vpop.f32.mrf.mxu0
        %v3210 = vadd.f32 %v756, %v3209
        %v3211 = vpop.f32.mrf.mxu0
        %v3212 = vadd.f32 %v756, %v3211
        %3213 = vmatmul.bf16.gmra.mxu0 %v2279
        %v3214 = vpop.f32.mrf.mxu0
        %v3215 = vadd.f32 %v756, %v3214
        %v3216 = vpop.f32.mrf.mxu0
        %v3217 = vadd.f32 %v756, %v3216
        %3218 = vmatmul.bf16.gmra.mxu0 %v2282
        %v3219 = vpop.f32.mrf.mxu0
        %v3220 = vadd.f32 %v756, %v3219
        %v3221 = vpop.f32.mrf.mxu0
        %v3222 = vadd.f32 %v756, %v3221
        %3223 = vmatmul.bf16.gmra.mxu0 %v2285
        %v3224 = vpop.f32.mrf.mxu0
        %v3225 = vadd.f32 %v756, %v3224
        %v3226 = vpop.f32.mrf.mxu0
        %v3227 = vadd.f32 %v756, %v3226
        %3228 = vmatmul.bf16.gmra.mxu0 %v2288
        %v3229 = vpop.f32.mrf.mxu0
        %v3230 = vadd.f32 %v756, %v3229
        %v3231 = vpop.f32.mrf.mxu0
        %v3232 = vadd.f32 %v756, %v3231
        %3233 = vmatmul.bf16.gmra.mxu0 %v2291
        %v3234 = vpop.f32.mrf.mxu0
        %v3235 = vadd.f32 %v756, %v3234
        %v3236 = vpop.f32.mrf.mxu0
        %v3237 = vadd.f32 %v756, %v3236
        %3238 = vmatmul.bf16.gmra.mxu0 %v2294
        %v3239 = vpop.f32.mrf.mxu0
        %v3240 = vadd.f32 %v756, %v3239
        %v3241 = vpop.f32.mrf.mxu0
        %v3242 = vadd.f32 %v756, %v3241
        %3243 = vmatmul.bf16.gmra.mxu0 %v2297
        %v3244 = vpop.f32.mrf.mxu0
        %v3245 = vadd.f32 %v756, %v3244
        %v3246 = vpop.f32.mrf.mxu0
        %v3247 = vadd.f32 %v756, %v3246
        %3248 = vmatmul.bf16.gmra.mxu0 %v2300
        %v3249 = vpop.f32.mrf.mxu0
        %v3250 = vadd.f32 %v756, %v3249
        %v3251 = vpop.f32.mrf.mxu0
        %v3252 = vadd.f32 %v756, %v3251
        %3253 = vmatmul.bf16.gmra.mxu0 %v2303
        %v3254 = vpop.f32.mrf.mxu0
        %v3255 = vadd.f32 %v756, %v3254
        %v3256 = vpop.f32.mrf.mxu0
        %v3257 = vadd.f32 %v756, %v3256
        %3258 = vmatmul.bf16.gmra.mxu0 %v2306
        %v3259 = vpop.f32.mrf.mxu0
        %v3260 = vadd.f32 %v756, %v3259
        %v3261 = vpop.f32.mrf.mxu0
        %v3262 = vadd.f32 %v756, %v3261
        %3263 = vmatmul.bf16.gmra.mxu0 %v2309
        %v3264 = vpop.f32.mrf.mxu0
        %v3265 = vadd.f32 %v756, %v3264
        %v3266 = vpop.f32.mrf.mxu0
        %v3267 = vadd.f32 %v756, %v3266
        %3268 = vmatmul.bf16.gmra.mxu0 %v2312
        %v3269 = vpop.f32.mrf.mxu0
        %v3270 = vadd.f32 %v756, %v3269
        %v3271 = vpop.f32.mrf.mxu0
        %v3272 = vadd.f32 %v756, %v3271
        %3273 = vmatmul.bf16.gmra.mxu0 %v2315
        %v3274 = vpop.f32.mrf.mxu0
        %v3275 = vadd.f32 %v756, %v3274
        %v3276 = vpop.f32.mrf.mxu0
        %v3277 = vadd.f32 %v756, %v3276
        %3278 = vmatmul.bf16.gmra.mxu0 %v2318
        %v3279 = vpop.f32.mrf.mxu0
        %v3280 = vadd.f32 %v756, %v3279
        %v3281 = vpop.f32.mrf.mxu0
        %v3282 = vadd.f32 %v756, %v3281
        %3283 = vmatmul.bf16.gmra.mxu0 %v2321
        %v3284 = vpop.f32.mrf.mxu0
        %v3285 = vadd.f32 %v756, %v3284
        %v3286 = vpop.f32.mrf.mxu0
        %v3287 = vadd.f32 %v756, %v3286
        %3288 = vmatmul.bf16.gmra.mxu0 %v2324
        %v3289 = vpop.f32.mrf.mxu0
        %v3290 = vadd.f32 %v756, %v3289
        %v3291 = vpop.f32.mrf.mxu0
        %v3292 = vadd.f32 %v756, %v3291
        %3293 = vmatmul.bf16.gmra.mxu0 %v2327
        %v3294 = vpop.f32.mrf.mxu0
        %v3295 = vadd.f32 %v756, %v3294
        %v3296 = vpop.f32.mrf.mxu0
        %v3297 = vadd.f32 %v756, %v3296
        %3298 = vmatmul.bf16.gmra.mxu0 %v2330
        %v3299 = vpop.f32.mrf.mxu0
        %v3300 = vadd.f32 %v756, %v3299
        %v3301 = vpop.f32.mrf.mxu0
        %v3302 = vadd.f32 %v756, %v3301
        %3303 = vmatmul.bf16.gmra.mxu0 %v2333
        %v3304 = vpop.f32.mrf.mxu0
        %v3305 = vadd.f32 %v756, %v3304
        %v3306 = vpop.f32.mrf.mxu0
        %v3307 = vadd.f32 %v756, %v3306
        %3308 = vmatmul.bf16.gmra.mxu0 %v2336
        %v3309 = vpop.f32.mrf.mxu0
        %v3310 = vadd.f32 %v756, %v3309
        %v3311 = vpop.f32.mrf.mxu0
        %v3312 = vadd.f32 %v756, %v3311
        %3313 = vmatmul.bf16.gmra.mxu0 %v2339
        %v3314 = vpop.f32.mrf.mxu0
        %v3315 = vadd.f32 %v756, %v3314
        %v3316 = vpop.f32.mrf.mxu0
        %v3317 = vadd.f32 %v756, %v3316
        %3318 = vmatmul.bf16.gmra.mxu0 %v2342
        %v3319 = vpop.f32.mrf.mxu0
        %v3320 = vadd.f32 %v756, %v3319
        %v3321 = vpop.f32.mrf.mxu0
        %v3322 = vadd.f32 %v756, %v3321
        %3323 = vmatmul.bf16.gmra.mxu0 %v2345
        %v3324 = vpop.f32.mrf.mxu0
        %v3325 = vadd.f32 %v756, %v3324
        %v3326 = vpop.f32.mrf.mxu0
        %v3327 = vadd.f32 %v756, %v3326
        %3328 = vmatmul.bf16.gmra.mxu0 %v2348
        %v3329 = vpop.f32.mrf.mxu0
        %v3330 = vadd.f32 %v756, %v3329
        %v3331 = vpop.f32.mrf.mxu0
        %v3332 = vadd.f32 %v756, %v3331
        %3333 = vmatmul.bf16.gmra.mxu0 %v2351
        %v3334 = vpop.f32.mrf.mxu0
        %v3335 = vadd.f32 %v756, %v3334
        %v3336 = vpop.f32.mrf.mxu0
        %v3337 = vadd.f32 %v756, %v3336
        %3338 = vmatmul.bf16.gmra.mxu0 %v2354
        %v3339 = vpop.f32.mrf.mxu0
        %v3340 = vadd.f32 %v756, %v3339
        %v3341 = vpop.f32.mrf.mxu0
        %v3342 = vadd.f32 %v756, %v3341
        %3343 = vmatmul.bf16.gmra.mxu0 %v2357
        %v3344 = vpop.f32.mrf.mxu0
        %v3345 = vadd.f32 %v756, %v3344
        %v3346 = vpop.f32.mrf.mxu0
        %v3347 = vadd.f32 %v756, %v3346
        %3348 = vmatmul.bf16.gmra.mxu0 %v2360
        %v3349 = vpop.f32.mrf.mxu0
        %v3350 = vadd.f32 %v756, %v3349
        %v3351 = vpop.f32.mrf.mxu0
        %v3352 = vadd.f32 %v756, %v3351
        %3353 = vmatmul.bf16.gmra.mxu0 %v2363
        %v3354 = vpop.f32.mrf.mxu0
        %v3355 = vadd.f32 %v756, %v3354
        %v3356 = vpop.f32.mrf.mxu0
        %v3357 = vadd.f32 %v756, %v3356
        %3358 = vmatmul.bf16.gmra.mxu0 %v2366
        %v3359 = vpop.f32.mrf.mxu0
        %v3360 = vadd.f32 %v756, %v3359
        %v3361 = vpop.f32.mrf.mxu0
        %v3362 = vadd.f32 %v756, %v3361
        %3363 = vmatmul.bf16.gmra.mxu0 %v2369
        %v3364 = vpop.f32.mrf.mxu0
        %v3365 = vadd.f32 %v756, %v3364
        %v3366 = vpop.f32.mrf.mxu0
        %v3367 = vadd.f32 %v756, %v3366
        %3368 = vmatmul.bf16.gmra.mxu0 %v2372
        %v3369 = vpop.f32.mrf.mxu0
        %v3370 = vadd.f32 %v756, %v3369
        %v3371 = vpop.f32.mrf.mxu0
        %v3372 = vadd.f32 %v756, %v3371
        %3373 = vmatmul.bf16.gmra.mxu0 %v2375
        %v3374 = vpop.f32.mrf.mxu0
        %v3375 = vadd.f32 %v756, %v3374
        %v3376 = vpop.f32.mrf.mxu0
        %v3377 = vadd.f32 %v756, %v3376
        %3378 = vmatmul.bf16.gmra.mxu0 %v2378
        %v3379 = vpop.f32.mrf.mxu0
        %v3380 = vadd.f32 %v756, %v3379
        %v3381 = vpop.f32.mrf.mxu0
        %v3382 = vadd.f32 %v756, %v3381
        %3383 = vmatmul.bf16.gmra.mxu0 %v2381
        %v3384 = vpop.f32.mrf.mxu0
        %v3385 = vadd.f32 %v756, %v3384
        %v3386 = vpop.f32.mrf.mxu0
        %v3387 = vadd.f32 %v756, %v3386
        %3388 = vmatmul.bf16.gmra.mxu0 %v2384
        %v3389 = vpop.f32.mrf.mxu0
        %v3390 = vadd.f32 %v756, %v3389
        %v3391 = vpop.f32.mrf.mxu0
        %v3392 = vadd.f32 %v756, %v3391
        %3393 = vmatmul.bf16.gmra.mxu0 %v2387
        %v3394 = vpop.f32.mrf.mxu0
        %v3395 = vadd.f32 %v756, %v3394
        %v3396 = vpop.f32.mrf.mxu0
        %v3397 = vadd.f32 %v756, %v3396
        %3398 = vmatmul.bf16.gmra.mxu0 %v2390
        %v3399 = vpop.f32.mrf.mxu0
        %v3400 = vadd.f32 %v756, %v3399
        %v3401 = vpop.f32.mrf.mxu0
        %v3402 = vadd.f32 %v756, %v3401
        %3403 = vmatmul.bf16.gmra.mxu0 %v2393
        %v3404 = vpop.f32.mrf.mxu0
        %v3405 = vadd.f32 %v756, %v3404
        %v3406 = vpop.f32.mrf.mxu0
        %v3407 = vadd.f32 %v756, %v3406
        %3408 = vmatmul.bf16.gmra.mxu0 %v2396
        %v3409 = vpop.f32.mrf.mxu0
        %v3410 = vadd.f32 %v756, %v3409
        %v3411 = vpop.f32.mrf.mxu0
        %v3412 = vadd.f32 %v756, %v3411
        %3413 = vmatmul.bf16.gmra.mxu0 %v2399
        %v3414 = vpop.f32.mrf.mxu0
        %v3415 = vadd.f32 %v756, %v3414
        %v3416 = vpop.f32.mrf.mxu0
        %v3417 = vadd.f32 %v756, %v3416
        %3418 = vmatmul.bf16.gmra.mxu0 %v2402
        %v3419 = vpop.f32.mrf.mxu0
        %v3420 = vadd.f32 %v756, %v3419
        %v3421 = vpop.f32.mrf.mxu0
        %v3422 = vadd.f32 %v756, %v3421
        %3423 = vmatmul.bf16.gmra.mxu0 %v2405
        %v3424 = vpop.f32.mrf.mxu0
        %v3425 = vadd.f32 %v756, %v3424
        %v3426 = vpop.f32.mrf.mxu0
        %v3427 = vadd.f32 %v756, %v3426
        %3428 = vmatmul.bf16.gmra.mxu0 %v2408
        %v3429 = vpop.f32.mrf.mxu0
        %v3430 = vadd.f32 %v756, %v3429
        %v3431 = vpop.f32.mrf.mxu0
        %v3432 = vadd.f32 %v756, %v3431
        %3433 = vmatmul.bf16.gmra.mxu0 %v2411
        %v3434 = vpop.f32.mrf.mxu0
        %v3435 = vadd.f32 %v756, %v3434
        %v3436 = vpop.f32.mrf.mxu0
        %v3437 = vadd.f32 %v756, %v3436
        %3438 = vmatmul.bf16.gmra.mxu0 %v2414
        %v3439 = vpop.f32.mrf.mxu0
        %v3440 = vadd.f32 %v756, %v3439
        %v3441 = vpop.f32.mrf.mxu0
        %v3442 = vadd.f32 %v756, %v3441
        %3443 = vmatmul.bf16.gmra.mxu0 %v2417
        %v3444 = vpop.f32.mrf.mxu0
        %v3445 = vadd.f32 %v756, %v3444
        %v3446 = vpop.f32.mrf.mxu0
        %v3447 = vadd.f32 %v756, %v3446
        %3448 = vmatmul.bf16.gmra.mxu0 %v2420
        %v3449 = vpop.f32.mrf.mxu0
        %v3450 = vadd.f32 %v756, %v3449
        %v3451 = vpop.f32.mrf.mxu0
        %v3452 = vadd.f32 %v756, %v3451
        %3453 = vmatmul.bf16.gmra.mxu0 %v2423
        %v3454 = vpop.f32.mrf.mxu0
        %v3455 = vadd.f32 %v756, %v3454
        %v3456 = vpop.f32.mrf.mxu0
        %v3457 = vadd.f32 %v756, %v3456
        %3458 = vmatmul.bf16.gmra.mxu0 %v2426
        %v3459 = vpop.f32.mrf.mxu0
        %v3460 = vadd.f32 %v756, %v3459
        %v3461 = vpop.f32.mrf.mxu0
        %v3462 = vadd.f32 %v756, %v3461
        %3463 = vmatmul.bf16.gmra.mxu0 %v2429
        %v3464 = vpop.f32.mrf.mxu0
        %v3465 = vadd.f32 %v756, %v3464
        %v3466 = vpop.f32.mrf.mxu0
        %v3467 = vadd.f32 %v756, %v3466
        %3468 = vmatmul.bf16.gmra.mxu0 %v2432
        %v3469 = vpop.f32.mrf.mxu0
        %v3470 = vadd.f32 %v756, %v3469
        %v3471 = vpop.f32.mrf.mxu0
        %v3472 = vadd.f32 %v756, %v3471
        %3473 = vmatmul.bf16.gmra.mxu0 %v2435
        %v3474 = vpop.f32.mrf.mxu0
        %v3475 = vadd.f32 %v756, %v3474
        %v3476 = vpop.f32.mrf.mxu0
        %v3477 = vadd.f32 %v756, %v3476
        %3478 = vmatmul.bf16.gmra.mxu0 %v2438
        %v3479 = vpop.f32.mrf.mxu0
        %v3480 = vadd.f32 %v756, %v3479
        %v3481 = vpop.f32.mrf.mxu0
        %v3482 = vadd.f32 %v756, %v3481
        %3483 = vmatmul.bf16.gmra.mxu0 %v2441
        %v3484 = vpop.f32.mrf.mxu0
        %v3485 = vadd.f32 %v756, %v3484
        %v3486 = vpop.f32.mrf.mxu0
        %v3487 = vadd.f32 %v756, %v3486
        %3488 = vmatmul.bf16.gmra.mxu0 %v2444
        %v3489 = vpop.f32.mrf.mxu0
        %v3490 = vadd.f32 %v756, %v3489
        %v3491 = vpop.f32.mrf.mxu0
        %v3492 = vadd.f32 %v756, %v3491
        %3493 = vmatmul.bf16.gmra.mxu0 %v2447
        %v3494 = vpop.f32.mrf.mxu0
        %v3495 = vadd.f32 %v756, %v3494
        %v3496 = vpop.f32.mrf.mxu0
        %v3497 = vadd.f32 %v756, %v3496
        %3498 = vmatmul.bf16.gmra.mxu0 %v2450
        %v3499 = vpop.f32.mrf.mxu0
        %v3500 = vadd.f32 %v756, %v3499
        %v3501 = vpop.f32.mrf.mxu0
        %v3502 = vadd.f32 %v756, %v3501
        %3503 = vmatmul.bf16.gmra.mxu0 %v2453
        %v3504 = vpop.f32.mrf.mxu0
        %v3505 = vadd.f32 %v756, %v3504
        %v3506 = vpop.f32.mrf.mxu0
        %v3507 = vadd.f32 %v756, %v3506
        %3508 = vmatmul.bf16.gmra.mxu0 %v2456
        %v3509 = vpop.f32.mrf.mxu0
        %v3510 = vadd.f32 %v756, %v3509
        %v3511 = vpop.f32.mrf.mxu0
        %v3512 = vadd.f32 %v756, %v3511
        %3513 = vmatmul.bf16.gmra.mxu0 %v2459
        %v3514 = vpop.f32.mrf.mxu0
        %v3515 = vadd.f32 %v756, %v3514
        %v3516 = vpop.f32.mrf.mxu0
        %v3517 = vadd.f32 %v756, %v3516
        %3518 = vmatmul.bf16.gmra.mxu0 %v2462
        %v3519 = vpop.f32.mrf.mxu0
        %v3520 = vadd.f32 %v756, %v3519
        %v3521 = vpop.f32.mrf.mxu0
        %v3522 = vadd.f32 %v756, %v3521
        %3523 = vmatmul.bf16.gmra.mxu0 %v2465
        %v3524 = vpop.f32.mrf.mxu0
        %v3525 = vadd.f32 %v756, %v3524
        %v3526 = vpop.f32.mrf.mxu0
        %v3527 = vadd.f32 %v756, %v3526
        %3528 = vmatmul.bf16.gmra.mxu0 %v2468
        %v3529 = vpop.f32.mrf.mxu0
        %v3530 = vadd.f32 %v756, %v3529
        %v3531 = vpop.f32.mrf.mxu0
        %v3532 = vadd.f32 %v756, %v3531
        %3533 = vmatmul.bf16.gmra.mxu0 %v2471
        %v3534 = vpop.f32.mrf.mxu0
        %v3535 = vadd.f32 %v756, %v3534
        %v3536 = vpop.f32.mrf.mxu0
        %v3537 = vadd.f32 %v756, %v3536
        %3538 = vmatmul.bf16.gmra.mxu0 %v2474
        %v3539 = vpop.f32.mrf.mxu0
        %v3540 = vadd.f32 %v756, %v3539
        %v3541 = vpop.f32.mrf.mxu0
        %v3542 = vadd.f32 %v756, %v3541
        %3543 = vmatmul.bf16.gmra.mxu0 %v2477
        %v3544 = vpop.f32.mrf.mxu0
        %v3545 = vadd.f32 %v756, %v3544
        %v3546 = vpop.f32.mrf.mxu0
        %v3547 = vadd.f32 %v756, %v3546
        %3548 = vmatmul.bf16.gmra.mxu0 %v2480
        %v3549 = vpop.f32.mrf.mxu0
        %v3550 = vadd.f32 %v756, %v3549
        %v3551 = vpop.f32.mrf.mxu0
        %v3552 = vadd.f32 %v756, %v3551
        %3553 = vmatmul.bf16.gmra.mxu0 %v2483
        %v3554 = vpop.f32.mrf.mxu0
        %v3555 = vadd.f32 %v756, %v3554
        %v3556 = vpop.f32.mrf.mxu0
        %v3557 = vadd.f32 %v756, %v3556
        %3558 = vmatmul.bf16.gmra.mxu0 %v2486
        %v3559 = vpop.f32.mrf.mxu0
        %v3560 = vadd.f32 %v756, %v3559
        %v3561 = vpop.f32.mrf.mxu0
        %v3562 = vadd.f32 %v756, %v3561
        %3563 = vmatmul.bf16.gmra.mxu0 %v2489
        %v3564 = vpop.f32.mrf.mxu0
        %v3565 = vadd.f32 %v756, %v3564
        %v3566 = vpop.f32.mrf.mxu0
        %v3567 = vadd.f32 %v756, %v3566
        %3568 = vmatmul.bf16.gmra.mxu0 %v2492
        %v3569 = vpop.f32.mrf.mxu0
        %v3570 = vadd.f32 %v756, %v3569
        %v3571 = vpop.f32.mrf.mxu0
        %v3572 = vadd.f32 %v756, %v3571
        %3573 = vmatmul.bf16.gmra.mxu0 %v2495
        %v3574 = vpop.f32.mrf.mxu0
        %v3575 = vadd.f32 %v756, %v3574
        %v3576 = vpop.f32.mrf.mxu0
        %v3577 = vadd.f32 %v756, %v3576
        %3578 = vmatmul.bf16.gmra.mxu0 %v2498
        %v3579 = vpop.f32.mrf.mxu0
        %v3580 = vadd.f32 %v756, %v3579
        %v3581 = vpop.f32.mrf.mxu0
        %v3582 = vadd.f32 %v756, %v3581
        %3583 = vmatmul.bf16.gmra.mxu0 %v2501
        %v3584 = vpop.f32.mrf.mxu0
        %v3585 = vadd.f32 %v756, %v3584
        %v3586 = vpop.f32.mrf.mxu0
        %v3587 = vadd.f32 %v756, %v3586
        %3588 = vmatmul.bf16.gmra.mxu0 %v2504
        %v3589 = vpop.f32.mrf.mxu0
        %v3590 = vadd.f32 %v756, %v3589
        %v3591 = vpop.f32.mrf.mxu0
        %v3592 = vadd.f32 %v756, %v3591
        %3593 = vmatmul.bf16.gmra.mxu0 %v2507
        %v3594 = vpop.f32.mrf.mxu0
        %v3595 = vadd.f32 %v756, %v3594
        %v3596 = vpop.f32.mrf.mxu0
        %v3597 = vadd.f32 %v756, %v3596
        %3598 = vmatmul.bf16.gmra.mxu0 %v2510
        %v3599 = vpop.f32.mrf.mxu0
        %v3600 = vadd.f32 %v756, %v3599
        %v3601 = vpop.f32.mrf.mxu0
        %v3602 = vadd.f32 %v756, %v3601
        %3603 = vmatmul.bf16.gmra.mxu0 %v2513
        %v3604 = vpop.f32.mrf.mxu0
        %v3605 = vadd.f32 %v756, %v3604
        %v3606 = vpop.f32.mrf.mxu0
        %v3607 = vadd.f32 %v756, %v3606
        %3608 = vmatmul.bf16.gmra.mxu0 %v2516
        %v3609 = vpop.f32.mrf.mxu0
        %v3610 = vadd.f32 %v756, %v3609
        %v3611 = vpop.f32.mrf.mxu0
        %v3612 = vadd.f32 %v756, %v3611
        %3613 = vmatmul.bf16.gmra.mxu0 %v2519
        %v3614 = vpop.f32.mrf.mxu0
        %v3615 = vadd.f32 %v756, %v3614
        %v3616 = vpop.f32.mrf.mxu0
        %v3617 = vadd.f32 %v756, %v3616
        %3618 = vmatmul.bf16.gmra.mxu0 %v2522
        %v3619 = vpop.f32.mrf.mxu0
        %v3620 = vadd.f32 %v756, %v3619
        %v3621 = vpop.f32.mrf.mxu0
        %v3622 = vadd.f32 %v756, %v3621
        %3623 = vmatmul.bf16.gmra.mxu0 %v2525
        %v3624 = vpop.f32.mrf.mxu0
        %v3625 = vadd.f32 %v756, %v3624
        %v3626 = vpop.f32.mrf.mxu0
        %v3627 = vadd.f32 %v756, %v3626
        %3628 = vmatmul.bf16.gmra.mxu0 %v2528
        %v3629 = vpop.f32.mrf.mxu0
        %v3630 = vadd.f32 %v756, %v3629
        %v3631 = vpop.f32.mrf.mxu0
        %v3632 = vadd.f32 %v756, %v3631
        %3633 = vmatmul.bf16.gmra.mxu0 %v2531
        %v3634 = vpop.f32.mrf.mxu0
        %v3635 = vadd.f32 %v756, %v3634
        %v3636 = vpop.f32.mrf.mxu0
        %v3637 = vadd.f32 %v756, %v3636
        %3638 = vmatmul.bf16.gmra.mxu0 %v2534
        %v3639 = vpop.f32.mrf.mxu0
        %v3640 = vadd.f32 %v756, %v3639
        %v3641 = vpop.f32.mrf.mxu0
        %v3642 = vadd.f32 %v756, %v3641
        %3643 = vmatmul.bf16.gmra.mxu0 %v2537
        %v3644 = vpop.f32.mrf.mxu0
        %v3645 = vadd.f32 %v756, %v3644
        %v3646 = vpop.f32.mrf.mxu0
        %v3647 = vadd.f32 %v756, %v3646
        %3648 = vmatmul.bf16.gmra.mxu0 %v2540
        %v3649 = vpop.f32.mrf.mxu0
        %v3650 = vadd.f32 %v756, %v3649
        %v3651 = vpop.f32.mrf.mxu0
        %v3652 = vadd.f32 %v756, %v3651
        %3653 = vmatmul.bf16.gmra.mxu0 %v2543
        %v3654 = vpop.f32.mrf.mxu0
        %v3655 = vadd.f32 %v756, %v3654
        %v3656 = vpop.f32.mrf.mxu0
        %v3657 = vadd.f32 %v756, %v3656
        %3658 = vmatmul.bf16.gmra.mxu0 %v2546
        %v3659 = vpop.f32.mrf.mxu0
        %v3660 = vadd.f32 %v756, %v3659
        %v3661 = vpop.f32.mrf.mxu0
        %v3662 = vadd.f32 %v756, %v3661
        %3663 = vmatmul.bf16.gmra.mxu0 %v2549
        %v3664 = vpop.f32.mrf.mxu0
        %v3665 = vadd.f32 %v756, %v3664
        %v3666 = vpop.f32.mrf.mxu0
        %v3667 = vadd.f32 %v756, %v3666
        %3668 = vmatmul.bf16.gmra.mxu0 %v2552
        %v3669 = vpop.f32.mrf.mxu0
        %v3670 = vadd.f32 %v756, %v3669
        %v3671 = vpop.f32.mrf.mxu0
        %v3672 = vadd.f32 %v756, %v3671
        %3673 = vmatmul.bf16.gmra.mxu0 %v2555
        %v3674 = vpop.f32.mrf.mxu0
        %v3675 = vadd.f32 %v756, %v3674
        %v3676 = vpop.f32.mrf.mxu0
        %v3677 = vadd.f32 %v756, %v3676
        %3678 = vmatmul.bf16.gmra.mxu0 %v2558
        %v3679 = vpop.f32.mrf.mxu0
        %v3680 = vadd.f32 %v756, %v3679
        %v3681 = vpop.f32.mrf.mxu0
        %v3682 = vadd.f32 %v756, %v3681
        %3683 = vmatmul.bf16.gmra.mxu0 %v2561
        %v3684 = vpop.f32.mrf.mxu0
        %v3685 = vadd.f32 %v756, %v3684
        %v3686 = vpop.f32.mrf.mxu0
        %v3687 = vadd.f32 %v756, %v3686
        %3688 = vmatmul.bf16.gmra.mxu0 %v2564
        %v3689 = vpop.f32.mrf.mxu0
        %v3690 = vadd.f32 %v756, %v3689
        %v3691 = vpop.f32.mrf.mxu0
        %v3692 = vadd.f32 %v756, %v3691
        %3693 = vmatmul.bf16.gmra.mxu0 %v2567
        %v3694 = vpop.f32.mrf.mxu0
        %v3695 = vadd.f32 %v756, %v3694
        %v3696 = vpop.f32.mrf.mxu0
        %v3697 = vadd.f32 %v756, %v3696
        %3698 = vmatmul.bf16.gmra.mxu0 %v2570
        %v3699 = vpop.f32.mrf.mxu0
        %v3700 = vadd.f32 %v756, %v3699
        %v3701 = vpop.f32.mrf.mxu0
        %v3702 = vadd.f32 %v756, %v3701
        %3703 = vmatmul.bf16.gmra.mxu0 %v2573
        %v3704 = vpop.f32.mrf.mxu0
        %v3705 = vadd.f32 %v756, %v3704
        %v3706 = vpop.f32.mrf.mxu0
        %v3707 = vadd.f32 %v756, %v3706
        %3708 = vmatmul.bf16.gmra.mxu0 %v2576
        %v3709 = vpop.f32.mrf.mxu0
        %v3710 = vadd.f32 %v756, %v3709
        %v3711 = vpop.f32.mrf.mxu0
        %v3712 = vadd.f32 %v756, %v3711
        %3713 = vmatmul.bf16.gmra.mxu0 %v2579
        %v3714 = vpop.f32.mrf.mxu0
        %v3715 = vadd.f32 %v756, %v3714
        %v3716 = vpop.f32.mrf.mxu0
        %v3717 = vadd.f32 %v756, %v3716
        %3718 = vmatmul.bf16.gmra.mxu0 %v2582
        %v3719 = vpop.f32.mrf.mxu0
        %v3720 = vadd.f32 %v756, %v3719
        %v3721 = vpop.f32.mrf.mxu0
        %v3722 = vadd.f32 %v756, %v3721
        %3723 = vmatmul.bf16.gmra.mxu0 %v2585
        %v3724 = vpop.f32.mrf.mxu0
        %v3725 = vadd.f32 %v756, %v3724
        %v3726 = vpop.f32.mrf.mxu0
        %v3727 = vadd.f32 %v756, %v3726
        %3728 = vmatmul.bf16.gmra.mxu0 %v2588
        %v3729 = vpop.f32.mrf.mxu0
        %v3730 = vadd.f32 %v756, %v3729
        %v3731 = vpop.f32.mrf.mxu0
        %v3732 = vadd.f32 %v756, %v3731
        %3733 = vmatmul.bf16.gmra.mxu0 %v2591
        %v3734 = vpop.f32.mrf.mxu0
        %v3735 = vadd.f32 %v756, %v3734
        %v3736 = vpop.f32.mrf.mxu0
        %v3737 = vadd.f32 %v756, %v3736
        %3738 = vmatmul.bf16.gmra.mxu0 %v2594
        %v3739 = vpop.f32.mrf.mxu0
        %v3740 = vadd.f32 %v756, %v3739
        %v3741 = vpop.f32.mrf.mxu0
        %v3742 = vadd.f32 %v756, %v3741
        %3743 = vmatmul.bf16.gmra.mxu0 %v2597
        %v3744 = vpop.f32.mrf.mxu0
        %v3745 = vadd.f32 %v756, %v3744
        %v3746 = vpop.f32.mrf.mxu0
        %v3747 = vadd.f32 %v756, %v3746
        %3748 = vmatmul.bf16.gmra.mxu0 %v2600
        %v3749 = vpop.f32.mrf.mxu0
        %v3750 = vadd.f32 %v756, %v3749
        %v3751 = vpop.f32.mrf.mxu0
        %v3752 = vadd.f32 %v756, %v3751
        %3753 = vmatmul.bf16.gmra.mxu0 %v2603
        %v3754 = vpop.f32.mrf.mxu0
        %v3755 = vadd.f32 %v756, %v3754
        %v3756 = vpop.f32.mrf.mxu0
        %v3757 = vadd.f32 %v756, %v3756
        %3758 = vmatmul.bf16.gmra.mxu0 %v2606
        %v3759 = vpop.f32.mrf.mxu0
        %v3760 = vadd.f32 %v756, %v3759
        %v3761 = vpop.f32.mrf.mxu0
        %v3762 = vadd.f32 %v756, %v3761
        %3763 = vmatmul.bf16.gmra.mxu0 %v2609
        %v3764 = vpop.f32.mrf.mxu0
        %v3765 = vadd.f32 %v756, %v3764
        %v3766 = vpop.f32.mrf.mxu0
        %v3767 = vadd.f32 %v756, %v3766
        %3768 = vmatmul.bf16.gmra.mxu0 %v2612
        %v3769 = vpop.f32.mrf.mxu0
        %v3770 = vadd.f32 %v756, %v3769
        %v3771 = vpop.f32.mrf.mxu0
        %v3772 = vadd.f32 %v756, %v3771
        %3773 = vmatmul.bf16.gmra.mxu0 %v2615
        %v3774 = vpop.f32.mrf.mxu0
        %v3775 = vadd.f32 %v756, %v3774
        %v3776 = vpop.f32.mrf.mxu0
        %v3777 = vadd.f32 %v756, %v3776
        %3778 = vmatmul.bf16.gmra.mxu0 %v2618
        %v3779 = vpop.f32.mrf.mxu0
        %v3780 = vadd.f32 %v756, %v3779
        %v3781 = vpop.f32.mrf.mxu0
        %v3782 = vadd.f32 %v756, %v3781
        %3783 = vmatmul.bf16.gmra.mxu0 %v2621
        %v3784 = vpop.f32.mrf.mxu0
        %v3785 = vadd.f32 %v756, %v3784
        %v3786 = vpop.f32.mrf.mxu0
        %v3787 = vadd.f32 %v756, %v3786
        %3788 = vmatmul.bf16.gmra.mxu0 %v2624
        %v3789 = vpop.f32.mrf.mxu0
        %v3790 = vadd.f32 %v756, %v3789
        %v3791 = vpop.f32.mrf.mxu0
        %v3792 = vadd.f32 %v756, %v3791
        %3793 = vmatmul.bf16.gmra.mxu0 %v2627
        %v3794 = vpop.f32.mrf.mxu0
        %v3795 = vadd.f32 %v756, %v3794
        %v3796 = vpop.f32.mrf.mxu0
        %v3797 = vadd.f32 %v756, %v3796
        %3798 = vmatmul.bf16.gmra.mxu0 %v2630
        %v3799 = vpop.f32.mrf.mxu0
        %v3800 = vadd.f32 %v756, %v3799
        %v3801 = vpop.f32.mrf.mxu0
        %v3802 = vadd.f32 %v756, %v3801
        %3803 = vmatmul.bf16.gmra.mxu0 %v2633
        %v3804 = vpop.f32.mrf.mxu0
        %v3805 = vadd.f32 %v756, %v3804
        %v3806 = vpop.f32.mrf.mxu0
        %v3807 = vadd.f32 %v756, %v3806
        %3808 = vmatmul.bf16.gmra.mxu0 %v2636
        %v3809 = vpop.f32.mrf.mxu0
        %v3810 = vadd.f32 %v756, %v3809
        %v3811 = vpop.f32.mrf.mxu0
        %v3812 = vadd.f32 %v756, %v3811
        %3813 = vmatmul.bf16.gmra.mxu0 %v2639
        %v3814 = vpop.f32.mrf.mxu0
        %v3815 = vadd.f32 %v756, %v3814
        %v3816 = vpop.f32.mrf.mxu0
        %v3817 = vadd.f32 %v756, %v3816
        %3818 = vmatmul.bf16.gmra.mxu0 %v2642
        %v3819 = vpop.f32.mrf.mxu0
        %v3820 = vadd.f32 %v756, %v3819
        %v3821 = vpop.f32.mrf.mxu0
        %v3822 = vadd.f32 %v756, %v3821
        %3823 = vmatmul.bf16.gmra.mxu0 %v2645
        %v3824 = vpop.f32.mrf.mxu0
        %v3825 = vadd.f32 %v756, %v3824
        %v3826 = vpop.f32.mrf.mxu0
        %v3827 = vadd.f32 %v756, %v3826
        %3828 = vmatmul.bf16.gmra.mxu0 %v2648
        %v3829 = vpop.f32.mrf.mxu0
        %v3830 = vadd.f32 %v756, %v3829
        %v3831 = vpop.f32.mrf.mxu0
        %v3832 = vadd.f32 %v756, %v3831
        %3833 = vmatmul.bf16.gmra.mxu0 %v2651
        %v3834 = vpop.f32.mrf.mxu0
        %v3835 = vadd.f32 %v756, %v3834
        %v3836 = vpop.f32.mrf.mxu0
        %v3837 = vadd.f32 %v756, %v3836
        %3838 = vmatmul.bf16.gmra.mxu0 %v2654
        %v3839 = vpop.f32.mrf.mxu0
        %v3840 = vadd.f32 %v756, %v3839
        %v3841 = vpop.f32.mrf.mxu0
        %v3842 = vadd.f32 %v756, %v3841
        %3843 = vmatmul.bf16.gmra.mxu0 %v2657
        %v3844 = vpop.f32.mrf.mxu0
        %v3845 = vadd.f32 %v756, %v3844
        %v3846 = vpop.f32.mrf.mxu0
        %v3847 = vadd.f32 %v756, %v3846
        %3848 = vmatmul.bf16.gmra.mxu0 %v2660
        %v3849 = vpop.f32.mrf.mxu0
        %v3850 = vadd.f32 %v756, %v3849
        %v3851 = vpop.f32.mrf.mxu0
        %v3852 = vadd.f32 %v756, %v3851
        %3853 = vmatmul.bf16.gmra.mxu0 %v2663
        %v3854 = vpop.f32.mrf.mxu0
        %v3855 = vadd.f32 %v756, %v3854
        %v3856 = vpop.f32.mrf.mxu0
        %v3857 = vadd.f32 %v756, %v3856
        %3858 = vmatmul.bf16.gmra.mxu0 %v2666
        %v3859 = vpop.f32.mrf.mxu0
        %v3860 = vadd.f32 %v756, %v3859
        %v3861 = vpop.f32.mrf.mxu0
        %v3862 = vadd.f32 %v756, %v3861
        %3863 = vmatmul.bf16.gmra.mxu0 %v2669
        %v3864 = vpop.f32.mrf.mxu0
        %v3865 = vadd.f32 %v756, %v3864
        %v3866 = vpop.f32.mrf.mxu0
        %v3867 = vadd.f32 %v756, %v3866
        %3868 = vmatmul.bf16.gmra.mxu0 %v2672
        %v3869 = vpop.f32.mrf.mxu0
        %v3870 = vadd.f32 %v756, %v3869
        %v3871 = vpop.f32.mrf.mxu0
        %v3872 = vadd.f32 %v756, %v3871
        %3873 = vmatmul.bf16.gmra.mxu0 %v2675
        %v3874 = vpop.f32.mrf.mxu0
        %v3875 = vadd.f32 %v756, %v3874
        %v3876 = vpop.f32.mrf.mxu0
        %v3877 = vadd.f32 %v756, %v3876
        %3878 = vmatmul.bf16.gmra.mxu0 %v2678
        %v3879 = vpop.f32.mrf.mxu0
        %v3880 = vadd.f32 %v756, %v3879
        %v3881 = vpop.f32.mrf.mxu0
        %v3882 = vadd.f32 %v756, %v3881
        %3883 = vmatmul.bf16.gmra.mxu0 %v2681
        %v3884 = vpop.f32.mrf.mxu0
        %v3885 = vadd.f32 %v756, %v3884
        %v3886 = vpop.f32.mrf.mxu0
        %v3887 = vadd.f32 %v756, %v3886
        %3888 = vmatmul.bf16.gmra.mxu0 %v2684
        %v3889 = vpop.f32.mrf.mxu0
        %v3890 = vadd.f32 %v756, %v3889
        %v3891 = vpop.f32.mrf.mxu0
        %v3892 = vadd.f32 %v756, %v3891
        %3893 = vmatmul.bf16.gmra.mxu0 %v2687
        %v3894 = vpop.f32.mrf.mxu0
        %v3895 = vadd.f32 %v756, %v3894
        %v3896 = vpop.f32.mrf.mxu0
        %v3897 = vadd.f32 %v756, %v3896
        %3898 = vmatmul.bf16.gmra.mxu0 %v2690
        %v3899 = vpop.f32.mrf.mxu0
        %v3900 = vadd.f32 %v756, %v3899
        %v3901 = vpop.f32.mrf.mxu0
        %v3902 = vadd.f32 %v756, %v3901
        %3903 = vmatmul.bf16.gmra.mxu0 %v2693
        %v3904 = vpop.f32.mrf.mxu0
        %v3905 = vadd.f32 %v756, %v3904
        %v3906 = vpop.f32.mrf.mxu0
        %v3907 = vadd.f32 %v756, %v3906
        %3908 = vmatmul.bf16.gmra.mxu0 %v2696
        %v3909 = vpop.f32.mrf.mxu0
        %v3910 = vadd.f32 %v756, %v3909
        %v3911 = vpop.f32.mrf.mxu0
        %v3912 = vadd.f32 %v756, %v3911
        %3913 = vmatmul.bf16.gmra.mxu0 %v2699
        %v3914 = vpop.f32.mrf.mxu0
        %v3915 = vadd.f32 %v756, %v3914
        %v3916 = vpop.f32.mrf.mxu0
        %v3917 = vadd.f32 %v756, %v3916
        %3918 = vmatmul.bf16.gmra.mxu0 %v2702
        %v3919 = vpop.f32.mrf.mxu0
        %v3920 = vadd.f32 %v756, %v3919
        %v3921 = vpop.f32.mrf.mxu0
        %v3922 = vadd.f32 %v756, %v3921
        %3923 = vmatmul.bf16.gmra.mxu0 %v2705
        %v3924 = vpop.f32.mrf.mxu0
        %v3925 = vadd.f32 %v756, %v3924
        %v3926 = vpop.f32.mrf.mxu0
        %v3927 = vadd.f32 %v756, %v3926
        %3928 = vmatmul.bf16.gmra.mxu0 %v2708
        %v3929 = vpop.f32.mrf.mxu0
        %v3930 = vadd.f32 %v756, %v3929
        %v3931 = vpop.f32.mrf.mxu0
        %v3932 = vadd.f32 %v756, %v3931
        %3933 = vmatmul.bf16.gmra.mxu0 %v2711
        %v3934 = vpop.f32.mrf.mxu0
        %v3935 = vadd.f32 %v756, %v3934
        %v3936 = vpop.f32.mrf.mxu0
        %v3937 = vadd.f32 %v756, %v3936
        %3938 = vmatmul.bf16.gmra.mxu0 %v2714
        %v3939 = vpop.f32.mrf.mxu0
        %v3940 = vadd.f32 %v756, %v3939
        %v3941 = vpop.f32.mrf.mxu0
        %v3942 = vadd.f32 %v756, %v3941
        %3943 = vmatmul.bf16.gmra.mxu0 %v2717
        %v3944 = vpop.f32.mrf.mxu0
        %v3945 = vadd.f32 %v756, %v3944
        %v3946 = vpop.f32.mrf.mxu0
        %v3947 = vadd.f32 %v756, %v3946
        %3948 = vmatmul.bf16.gmra.mxu0 %v2720
        %v3949 = vpop.f32.mrf.mxu0
        %v3950 = vadd.f32 %v756, %v3949
        %v3951 = vpop.f32.mrf.mxu0
        %v3952 = vadd.f32 %v756, %v3951
        %3953 = vmatmul.bf16.gmra.mxu0 %v2723
        %v3954 = vpop.f32.mrf.mxu0
        %v3955 = vadd.f32 %v756, %v3954
        %v3956 = vpop.f32.mrf.mxu0
        %v3957 = vadd.f32 %v756, %v3956
        %3958 = vmatmul.bf16.gmra.mxu0 %v2726
        %v3959 = vpop.f32.mrf.mxu0
        %v3960 = vadd.f32 %v756, %v3959
        %v3961 = vpop.f32.mrf.mxu0
        %v3962 = vadd.f32 %v756, %v3961
        %3963 = vmatmul.bf16.gmra.mxu0 %v2729
        %v3964 = vpop.f32.mrf.mxu0
        %v3965 = vadd.f32 %v756, %v3964
        %v3966 = vpop.f32.mrf.mxu0
        %v3967 = vadd.f32 %v756, %v3966
        %3968 = vmatmul.bf16.gmra.mxu0 %v2732
        %v3969 = vpop.f32.mrf.mxu0
        %v3970 = vadd.f32 %v756, %v3969
        %v3971 = vpop.f32.mrf.mxu0
        %v3972 = vadd.f32 %v756, %v3971
        %3973 = vmatmul.bf16.gmra.mxu0 %v2735
        %v3974 = vpop.f32.mrf.mxu0
        %v3975 = vadd.f32 %v756, %v3974
        %v3976 = vpop.f32.mrf.mxu0
        %v3977 = vadd.f32 %v756, %v3976
        %3978 = vmatmul.bf16.gmra.mxu0 %v2738
        %v3979 = vpop.f32.mrf.mxu0
        %v3980 = vadd.f32 %v756, %v3979
        %v3981 = vpop.f32.mrf.mxu0
        %v3982 = vadd.f32 %v756, %v3981
        %3983 = vmatmul.bf16.gmra.mxu0 %v2741
        %v3984 = vpop.f32.mrf.mxu0
        %v3985 = vadd.f32 %v756, %v3984
        %v3986 = vpop.f32.mrf.mxu0
        %v3987 = vadd.f32 %v756, %v3986
        %3988 = vmatmul.bf16.gmra.mxu0 %v2744
        %v3989 = vpop.f32.mrf.mxu0
        %v3990 = vadd.f32 %v756, %v3989
        %v3991 = vpop.f32.mrf.mxu0
        %v3992 = vadd.f32 %v756, %v3991
        %3993 = vmatmul.bf16.gmra.mxu0 %v2747
        %v3994 = vpop.f32.mrf.mxu0
        %v3995 = vadd.f32 %v756, %v3994
        %v3996 = vpop.f32.mrf.mxu0
        %v3997 = vadd.f32 %v756, %v3996
        %3998 = vmatmul.bf16.gmra.mxu0 %v2750
        %v3999 = vpop.f32.mrf.mxu0
        %v4000 = vadd.f32 %v756, %v3999
        %v4001 = vpop.f32.mrf.mxu0
        %v4002 = vadd.f32 %v756, %v4001
        %4003 = vmatmul.bf16.gmra.mxu0 %v2753
        %v4004 = vpop.f32.mrf.mxu0
        %v4005 = vadd.f32 %v756, %v4004
        %v4006 = vpop.f32.mrf.mxu0
        %v4007 = vadd.f32 %v756, %v4006
        %4008 = vmatmul.bf16.gmra.mxu0 %v2756
        %v4009 = vpop.f32.mrf.mxu0
        %v4010 = vadd.f32 %v756, %v4009
        %v4011 = vpop.f32.mrf.mxu0
        %v4012 = vadd.f32 %v756, %v4011
        %4013 = vmatmul.bf16.gmra.mxu0 %v2759
        %v4014 = vpop.f32.mrf.mxu0
        %v4015 = vadd.f32 %v756, %v4014
        %v4016 = vpop.f32.mrf.mxu0
        %v4017 = vadd.f32 %v756, %v4016
        %4018 = vmatmul.bf16.gmra.mxu0 %v2762
        %v4019 = vpop.f32.mrf.mxu0
        %v4020 = vadd.f32 %v756, %v4019
        %v4021 = vpop.f32.mrf.mxu0
        %v4022 = vadd.f32 %v756, %v4021
        %4023 = vmatmul.bf16.gmra.mxu0 %v2765
        %v4024 = vpop.f32.mrf.mxu0
        %v4025 = vadd.f32 %v756, %v4024
        %v4026 = vpop.f32.mrf.mxu0
        %v4027 = vadd.f32 %v756, %v4026
        %4028 = vmatmul.bf16.gmra.mxu0 %v2768
        %v4029 = vpop.f32.mrf.mxu0
        %v4030 = vadd.f32 %v756, %v4029
        %v4031 = vpop.f32.mrf.mxu0
        %v4032 = vadd.f32 %v756, %v4031
        %4033 = vmatmul.bf16.gmra.mxu0 %v2771
        %v4034 = vpop.f32.mrf.mxu0
        %v4035 = vadd.f32 %v756, %v4034
        %v4036 = vpop.f32.mrf.mxu0
        %v4037 = vadd.f32 %v756, %v4036
        %4038 = vmatmul.bf16.gmra.mxu0 %v2774
        %v4039 = vpop.f32.mrf.mxu0
        %v4040 = vadd.f32 %v756, %v4039
        %v4041 = vpop.f32.mrf.mxu0
        %v4042 = vadd.f32 %v756, %v4041
        %4043 = vmatmul.bf16.gmra.mxu0 %v2777
        %v4044 = vpop.f32.mrf.mxu0
        %v4045 = vadd.f32 %v756, %v4044
        %v4046 = vpop.f32.mrf.mxu0
        %v4047 = vadd.f32 %v756, %v4046
        %4048 = vmatmul.bf16.gmra.mxu0 %v2780
        %v4049 = vpop.f32.mrf.mxu0
        %v4050 = vadd.f32 %v756, %v4049
        %v4051 = vpop.f32.mrf.mxu0
        %v4052 = vadd.f32 %v756, %v4051
        %4053 = vmatmul.bf16.gmra.mxu0 %v2783
        %v4054 = vpop.f32.mrf.mxu0
        %v4055 = vadd.f32 %v756, %v4054
        %v4056 = vpop.f32.mrf.mxu0
        %v4057 = vadd.f32 %v756, %v4056
        %4058 = vmatmul.bf16.gmra.mxu0 %v2786
        %v4059 = vpop.f32.mrf.mxu0
        %v4060 = vadd.f32 %v756, %v4059
        %v4061 = vpop.f32.mrf.mxu0
        %v4062 = vadd.f32 %v756, %v4061
        %4063 = vmatmul.bf16.gmra.mxu0 %v2789
        %v4064 = vpop.f32.mrf.mxu0
        %v4065 = vadd.f32 %v756, %v4064
        %v4066 = vpop.f32.mrf.mxu0
        %v4067 = vadd.f32 %v756, %v4066
        %4068 = vmatmul.bf16.gmra.mxu0 %v2792
        %v4069 = vpop.f32.mrf.mxu0
        %v4070 = vadd.f32 %v756, %v4069
        %v4071 = vpop.f32.mrf.mxu0
        %v4072 = vadd.f32 %v756, %v4071
        %4073 = vmatmul.bf16.gmra.mxu0 %v2795
        %v4074 = vpop.f32.mrf.mxu0
        %v4075 = vadd.f32 %v756, %v4074
        %v4076 = vpop.f32.mrf.mxu0
        %v4077 = vadd.f32 %v756, %v4076
        %4078 = vmatmul.bf16.gmra.mxu0 %v2798
        %v4079 = vpop.f32.mrf.mxu0
        %v4080 = vadd.f32 %v756, %v4079
        %v4081 = vpop.f32.mrf.mxu0
        %v4082 = vadd.f32 %v756, %v4081
        %4083 = vmatmul.bf16.gmra.mxu0 %v2801
        %v4084 = vpop.f32.mrf.mxu0
        %v4085 = vadd.f32 %v756, %v4084
        %v4086 = vpop.f32.mrf.mxu0
        %v4087 = vadd.f32 %v756, %v4086
        %4088 = vmatmul.bf16.gmra.mxu0 %v2804
        %v4089 = vpop.f32.mrf.mxu0
        %v4090 = vadd.f32 %v756, %v4089
        %v4091 = vpop.f32.mrf.mxu0
        %v4092 = vadd.f32 %v756, %v4091
        %4093 = vmatmul.bf16.gmra.mxu0 %v2807
        %v4094 = vpop.f32.mrf.mxu0
        %v4095 = vadd.f32 %v756, %v4094
        %v4096 = vpop.f32.mrf.mxu0
        %v4097 = vadd.f32 %v756, %v4096
        %4098 = vmatmul.bf16.gmra.mxu0 %v2810
        %v4099 = vpop.f32.mrf.mxu0
        %v4100 = vadd.f32 %v756, %v4099
        %v4101 = vpop.f32.mrf.mxu0
        %v4102 = vadd.f32 %v756, %v4101
        %4103 = vmatmul.bf16.gmra.mxu0 %v2813
        %v4104 = vpop.f32.mrf.mxu0
        %v4105 = vadd.f32 %v756, %v4104
        %v4106 = vpop.f32.mrf.mxu0
        %v4107 = vadd.f32 %v756, %v4106
        %4108 = vmatmul.bf16.gmra.mxu0 %v2816
        %v4109 = vpop.f32.mrf.mxu0
        %v4110 = vadd.f32 %v756, %v4109
        %v4111 = vpop.f32.mrf.mxu0
        %v4112 = vadd.f32 %v756, %v4111
        %4113 = vdwg.mxu0
        %v4114 = vmax.f32 %v2835, 0.0
        %v4115 = vmax.f32 %v2837, 0.0
        %v4116 = vmax.f32 %v2840, 0.0
        %v4117 = vmax.f32 %v2842, 0.0
        %v4118 = vmax.f32 %v2845, 0.0
        %v4119 = vmax.f32 %v2847, 0.0
        %v4120 = vmax.f32 %v2850, 0.0
        %v4121 = vmax.f32 %v2852, 0.0
        %v4122 = vmax.f32 %v2855, 0.0
        %v4123 = vmax.f32 %v2857, 0.0
        %v4124 = vmax.f32 %v2860, 0.0
        %v4125 = vmax.f32 %v2862, 0.0
        %v4126 = vmax.f32 %v2865, 0.0
        %v4127 = vmax.f32 %v2867, 0.0
        %v4128 = vmax.f32 %v2870, 0.0
        %v4129 = vmax.f32 %v2872, 0.0
        %v4130 = vmax.f32 %v2875, 0.0
        %v4131 = vmax.f32 %v2877, 0.0
        %v4132 = vmax.f32 %v2880, 0.0
        %v4133 = vmax.f32 %v2882, 0.0
        %v4134 = vmax.f32 %v2885, 0.0
        %v4135 = vmax.f32 %v2887, 0.0
        %v4136 = vmax.f32 %v2890, 0.0
        %v4137 = vmax.f32 %v2892, 0.0
        %v4138 = vmax.f32 %v2895, 0.0
        %v4139 = vmax.f32 %v2897, 0.0
        %v4140 = vmax.f32 %v2900, 0.0
        %v4141 = vmax.f32 %v2902, 0.0
        %v4142 = vmax.f32 %v2905, 0.0
        %v4143 = vmax.f32 %v2907, 0.0
        %v4144 = vmax.f32 %v2910, 0.0
        %v4145 = vmax.f32 %v2912, 0.0
        %v4146 = vmax.f32 %v2915, 0.0
        %v4147 = vmax.f32 %v2917, 0.0
        %v4148 = vmax.f32 %v2920, 0.0
        %v4149 = vmax.f32 %v2922, 0.0
        %v4150 = vmax.f32 %v2925, 0.0
        %v4151 = vmax.f32 %v2927, 0.0
        %v4152 = vmax.f32 %v2930, 0.0
        %v4153 = vmax.f32 %v2932, 0.0
        %v4154 = vmax.f32 %v2935, 0.0
        %v4155 = vmax.f32 %v2937, 0.0
        %v4156 = vmax.f32 %v2940, 0.0
        %v4157 = vmax.f32 %v2942, 0.0
        %v4158 = vmax.f32 %v2945, 0.0
        %v4159 = vmax.f32 %v2947, 0.0
        %v4160 = vmax.f32 %v2950, 0.0
        %v4161 = vmax.f32 %v2952, 0.0
        %v4162 = vmax.f32 %v2955, 0.0
        %v4163 = vmax.f32 %v2957, 0.0
        %v4164 = vmax.f32 %v2960, 0.0
        %v4165 = vmax.f32 %v2962, 0.0
        %v4166 = vmax.f32 %v2965, 0.0
        %v4167 = vmax.f32 %v2967, 0.0
        %v4168 = vmax.f32 %v2970, 0.0
        %v4169 = vmax.f32 %v2972, 0.0
        %v4170 = vmax.f32 %v2975, 0.0
        %v4171 = vmax.f32 %v2977, 0.0
        %v4172 = vmax.f32 %v2980, 0.0
        %v4173 = vmax.f32 %v2982, 0.0
        %v4174 = vmax.f32 %v2985, 0.0
        %v4175 = vmax.f32 %v2987, 0.0
        %v4176 = vmax.f32 %v2990, 0.0
        %v4177 = vmax.f32 %v2992, 0.0
        %v4178 = vmax.f32 %v2995, 0.0
        %v4179 = vmax.f32 %v2997, 0.0
        %v4180 = vmax.f32 %v3000, 0.0
        %v4181 = vmax.f32 %v3002, 0.0
        %v4182 = vmax.f32 %v3005, 0.0
        %v4183 = vmax.f32 %v3007, 0.0
        %v4184 = vmax.f32 %v3010, 0.0
        %v4185 = vmax.f32 %v3012, 0.0
        %v4186 = vmax.f32 %v3015, 0.0
        %v4187 = vmax.f32 %v3017, 0.0
        %v4188 = vmax.f32 %v3020, 0.0
        %v4189 = vmax.f32 %v3022, 0.0
        %v4190 = vmax.f32 %v3025, 0.0
        %v4191 = vmax.f32 %v3027, 0.0
        %v4192 = vmax.f32 %v3030, 0.0
        %v4193 = vmax.f32 %v3032, 0.0
        %v4194 = vmax.f32 %v3035, 0.0
        %v4195 = vmax.f32 %v3037, 0.0
        %v4196 = vmax.f32 %v3040, 0.0
        %v4197 = vmax.f32 %v3042, 0.0
        %v4198 = vmax.f32 %v3045, 0.0
        %v4199 = vmax.f32 %v3047, 0.0
        %v4200 = vmax.f32 %v3050, 0.0
        %v4201 = vmax.f32 %v3052, 0.0
        %v4202 = vmax.f32 %v3055, 0.0
        %v4203 = vmax.f32 %v3057, 0.0
        %v4204 = vmax.f32 %v3060, 0.0
        %v4205 = vmax.f32 %v3062, 0.0
        %v4206 = vmax.f32 %v3065, 0.0
        %v4207 = vmax.f32 %v3067, 0.0
        %v4208 = vmax.f32 %v3070, 0.0
        %v4209 = vmax.f32 %v3072, 0.0
        %v4210 = vmax.f32 %v3075, 0.0
        %v4211 = vmax.f32 %v3077, 0.0
        %v4212 = vmax.f32 %v3080, 0.0
        %v4213 = vmax.f32 %v3082, 0.0
        %v4214 = vmax.f32 %v3085, 0.0
        %v4215 = vmax.f32 %v3087, 0.0
        %v4216 = vmax.f32 %v3090, 0.0
        %v4217 = vmax.f32 %v3092, 0.0
        %v4218 = vmax.f32 %v3095, 0.0
        %v4219 = vmax.f32 %v3097, 0.0
        %v4220 = vmax.f32 %v3100, 0.0
        %v4221 = vmax.f32 %v3102, 0.0
        %v4222 = vmax.f32 %v3105, 0.0
        %v4223 = vmax.f32 %v3107, 0.0
        %v4224 = vmax.f32 %v3110, 0.0
        %v4225 = vmax.f32 %v3112, 0.0
        %v4226 = vmax.f32 %v3115, 0.0
        %v4227 = vmax.f32 %v3117, 0.0
        %v4228 = vmax.f32 %v3120, 0.0
        %v4229 = vmax.f32 %v3122, 0.0
        %v4230 = vmax.f32 %v3125, 0.0
        %v4231 = vmax.f32 %v3127, 0.0
        %v4232 = vmax.f32 %v3130, 0.0
        %v4233 = vmax.f32 %v3132, 0.0
        %v4234 = vmax.f32 %v3135, 0.0
        %v4235 = vmax.f32 %v3137, 0.0
        %v4236 = vmax.f32 %v3140, 0.0
        %v4237 = vmax.f32 %v3142, 0.0
        %v4238 = vmax.f32 %v3145, 0.0
        %v4239 = vmax.f32 %v3147, 0.0
        %v4240 = vmax.f32 %v3150, 0.0
        %v4241 = vmax.f32 %v3152, 0.0
        %v4242 = vmax.f32 %v3155, 0.0
        %v4243 = vmax.f32 %v3157, 0.0
        %v4244 = vmax.f32 %v3160, 0.0
        %v4245 = vmax.f32 %v3162, 0.0
        %v4246 = vmax.f32 %v3165, 0.0
        %v4247 = vmax.f32 %v3167, 0.0
        %v4248 = vmax.f32 %v3170, 0.0
        %v4249 = vmax.f32 %v3172, 0.0
        %v4250 = vmax.f32 %v3175, 0.0
        %v4251 = vmax.f32 %v3177, 0.0
        %v4252 = vmax.f32 %v3180, 0.0
        %v4253 = vmax.f32 %v3182, 0.0
        %v4254 = vmax.f32 %v3185, 0.0
        %v4255 = vmax.f32 %v3187, 0.0
        %v4256 = vmax.f32 %v3190, 0.0
        %v4257 = vmax.f32 %v3192, 0.0
        %v4258 = vmax.f32 %v3195, 0.0
        %v4259 = vmax.f32 %v3197, 0.0
        %v4260 = vmax.f32 %v3200, 0.0
        %v4261 = vmax.f32 %v3202, 0.0
        %v4262 = vmax.f32 %v3205, 0.0
        %v4263 = vmax.f32 %v3207, 0.0
        %v4264 = vmax.f32 %v3210, 0.0
        %v4265 = vmax.f32 %v3212, 0.0
        %v4266 = vmax.f32 %v3215, 0.0
        %v4267 = vmax.f32 %v3217, 0.0
        %v4268 = vmax.f32 %v3220, 0.0
        %v4269 = vmax.f32 %v3222, 0.0
        %v4270 = vmax.f32 %v3225, 0.0
        %v4271 = vmax.f32 %v3227, 0.0
        %v4272 = vmax.f32 %v3230, 0.0
        %v4273 = vmax.f32 %v3232, 0.0
        %v4274 = vmax.f32 %v3235, 0.0
        %v4275 = vmax.f32 %v3237, 0.0
        %v4276 = vmax.f32 %v3240, 0.0
        %v4277 = vmax.f32 %v3242, 0.0
        %v4278 = vmax.f32 %v3245, 0.0
        %v4279 = vmax.f32 %v3247, 0.0
        %v4280 = vmax.f32 %v3250, 0.0
        %v4281 = vmax.f32 %v3252, 0.0
        %v4282 = vmax.f32 %v3255, 0.0
        %v4283 = vmax.f32 %v3257, 0.0
        %v4284 = vmax.f32 %v3260, 0.0
        %v4285 = vmax.f32 %v3262, 0.0
        %v4286 = vmax.f32 %v3265, 0.0
        %v4287 = vmax.f32 %v3267, 0.0
        %v4288 = vmax.f32 %v3270, 0.0
        %v4289 = vmax.f32 %v3272, 0.0
        %v4290 = vmax.f32 %v3275, 0.0
        %v4291 = vmax.f32 %v3277, 0.0
        %v4292 = vmax.f32 %v3280, 0.0
        %v4293 = vmax.f32 %v3282, 0.0
        %v4294 = vmax.f32 %v3285, 0.0
        %v4295 = vmax.f32 %v3287, 0.0
        %v4296 = vmax.f32 %v3290, 0.0
        %v4297 = vmax.f32 %v3292, 0.0
        %v4298 = vmax.f32 %v3295, 0.0
        %v4299 = vmax.f32 %v3297, 0.0
        %v4300 = vmax.f32 %v3300, 0.0
        %v4301 = vmax.f32 %v3302, 0.0
        %v4302 = vmax.f32 %v3305, 0.0
        %v4303 = vmax.f32 %v3307, 0.0
        %v4304 = vmax.f32 %v3310, 0.0
        %v4305 = vmax.f32 %v3312, 0.0
        %v4306 = vmax.f32 %v3315, 0.0
        %v4307 = vmax.f32 %v3317, 0.0
        %v4308 = vmax.f32 %v3320, 0.0
        %v4309 = vmax.f32 %v3322, 0.0
        %v4310 = vmax.f32 %v3325, 0.0
        %v4311 = vmax.f32 %v3327, 0.0
        %v4312 = vmax.f32 %v3330, 0.0
        %v4313 = vmax.f32 %v3332, 0.0
        %v4314 = vmax.f32 %v3335, 0.0
        %v4315 = vmax.f32 %v3337, 0.0
        %v4316 = vmax.f32 %v3340, 0.0
        %v4317 = vmax.f32 %v3342, 0.0
        %v4318 = vmax.f32 %v3345, 0.0
        %v4319 = vmax.f32 %v3347, 0.0
        %v4320 = vmax.f32 %v3350, 0.0
        %v4321 = vmax.f32 %v3352, 0.0
        %v4322 = vmax.f32 %v3355, 0.0
        %v4323 = vmax.f32 %v3357, 0.0
        %v4324 = vmax.f32 %v3360, 0.0
        %v4325 = vmax.f32 %v3362, 0.0
        %v4326 = vmax.f32 %v3365, 0.0
        %v4327 = vmax.f32 %v3367, 0.0
        %v4328 = vmax.f32 %v3370, 0.0
        %v4329 = vmax.f32 %v3372, 0.0
        %v4330 = vmax.f32 %v3375, 0.0
        %v4331 = vmax.f32 %v3377, 0.0
        %v4332 = vmax.f32 %v3380, 0.0
        %v4333 = vmax.f32 %v3382, 0.0
        %v4334 = vmax.f32 %v3385, 0.0
        %v4335 = vmax.f32 %v3387, 0.0
        %v4336 = vmax.f32 %v3390, 0.0
        %v4337 = vmax.f32 %v3392, 0.0
        %v4338 = vmax.f32 %v3395, 0.0
        %v4339 = vmax.f32 %v3397, 0.0
        %v4340 = vmax.f32 %v3400, 0.0
        %v4341 = vmax.f32 %v3402, 0.0
        %v4342 = vmax.f32 %v3405, 0.0
        %v4343 = vmax.f32 %v3407, 0.0
        %v4344 = vmax.f32 %v3410, 0.0
        %v4345 = vmax.f32 %v3412, 0.0
        %v4346 = vmax.f32 %v3415, 0.0
        %v4347 = vmax.f32 %v3417, 0.0
        %v4348 = vmax.f32 %v3420, 0.0
        %v4349 = vmax.f32 %v3422, 0.0
        %v4350 = vmax.f32 %v3425, 0.0
        %v4351 = vmax.f32 %v3427, 0.0
        %v4352 = vmax.f32 %v3430, 0.0
        %v4353 = vmax.f32 %v3432, 0.0
        %v4354 = vmax.f32 %v3435, 0.0
        %v4355 = vmax.f32 %v3437, 0.0
        %v4356 = vmax.f32 %v3440, 0.0
        %v4357 = vmax.f32 %v3442, 0.0
        %v4358 = vmax.f32 %v3445, 0.0
        %v4359 = vmax.f32 %v3447, 0.0
        %v4360 = vmax.f32 %v3450, 0.0
        %v4361 = vmax.f32 %v3452, 0.0
        %v4362 = vmax.f32 %v3455, 0.0
        %v4363 = vmax.f32 %v3457, 0.0
        %v4364 = vmax.f32 %v3460, 0.0
        %v4365 = vmax.f32 %v3462, 0.0
        %v4366 = vmax.f32 %v3465, 0.0
        %v4367 = vmax.f32 %v3467, 0.0
        %v4368 = vmax.f32 %v3470, 0.0
        %v4369 = vmax.f32 %v3472, 0.0
        %v4370 = vmax.f32 %v3475, 0.0
        %v4371 = vmax.f32 %v3477, 0.0
        %v4372 = vmax.f32 %v3480, 0.0
        %v4373 = vmax.f32 %v3482, 0.0
        %v4374 = vmax.f32 %v3485, 0.0
        %v4375 = vmax.f32 %v3487, 0.0
        %v4376 = vmax.f32 %v3490, 0.0
        %v4377 = vmax.f32 %v3492, 0.0
        %v4378 = vmax.f32 %v3495, 0.0
        %v4379 = vmax.f32 %v3497, 0.0
        %v4380 = vmax.f32 %v3500, 0.0
        %v4381 = vmax.f32 %v3502, 0.0
        %v4382 = vmax.f32 %v3505, 0.0
        %v4383 = vmax.f32 %v3507, 0.0
        %v4384 = vmax.f32 %v3510, 0.0
        %v4385 = vmax.f32 %v3512, 0.0
        %v4386 = vmax.f32 %v3515, 0.0
        %v4387 = vmax.f32 %v3517, 0.0
        %v4388 = vmax.f32 %v3520, 0.0
        %v4389 = vmax.f32 %v3522, 0.0
        %v4390 = vmax.f32 %v3525, 0.0
        %v4391 = vmax.f32 %v3527, 0.0
        %v4392 = vmax.f32 %v3530, 0.0
        %v4393 = vmax.f32 %v3532, 0.0
        %v4394 = vmax.f32 %v3535, 0.0
        %v4395 = vmax.f32 %v3537, 0.0
        %v4396 = vmax.f32 %v3540, 0.0
        %v4397 = vmax.f32 %v3542, 0.0
        %v4398 = vmax.f32 %v3545, 0.0
        %v4399 = vmax.f32 %v3547, 0.0
        %v4400 = vmax.f32 %v3550, 0.0
        %v4401 = vmax.f32 %v3552, 0.0
        %v4402 = vmax.f32 %v3555, 0.0
        %v4403 = vmax.f32 %v3557, 0.0
        %v4404 = vmax.f32 %v3560, 0.0
        %v4405 = vmax.f32 %v3562, 0.0
        %v4406 = vmax.f32 %v3565, 0.0
        %v4407 = vmax.f32 %v3567, 0.0
        %v4408 = vmax.f32 %v3570, 0.0
        %v4409 = vmax.f32 %v3572, 0.0
        %v4410 = vmax.f32 %v3575, 0.0
        %v4411 = vmax.f32 %v3577, 0.0
        %v4412 = vmax.f32 %v3580, 0.0
        %v4413 = vmax.f32 %v3582, 0.0
        %v4414 = vmax.f32 %v3585, 0.0
        %v4415 = vmax.f32 %v3587, 0.0
        %v4416 = vmax.f32 %v3590, 0.0
        %v4417 = vmax.f32 %v3592, 0.0
        %v4418 = vmax.f32 %v3595, 0.0
        %v4419 = vmax.f32 %v3597, 0.0
        %v4420 = vmax.f32 %v3600, 0.0
        %v4421 = vmax.f32 %v3602, 0.0
        %v4422 = vmax.f32 %v3605, 0.0
        %v4423 = vmax.f32 %v3607, 0.0
        %v4424 = vmax.f32 %v3610, 0.0
        %v4425 = vmax.f32 %v3612, 0.0
        %v4426 = vmax.f32 %v3615, 0.0
        %v4427 = vmax.f32 %v3617, 0.0
        %v4428 = vmax.f32 %v3620, 0.0
        %v4429 = vmax.f32 %v3622, 0.0
        %v4430 = vmax.f32 %v3625, 0.0
        %v4431 = vmax.f32 %v3627, 0.0
        %v4432 = vmax.f32 %v3630, 0.0
        %v4433 = vmax.f32 %v3632, 0.0
        %v4434 = vmax.f32 %v3635, 0.0
        %v4435 = vmax.f32 %v3637, 0.0
        %v4436 = vmax.f32 %v3640, 0.0
        %v4437 = vmax.f32 %v3642, 0.0
        %v4438 = vmax.f32 %v3645, 0.0
        %v4439 = vmax.f32 %v3647, 0.0
        %v4440 = vmax.f32 %v3650, 0.0
        %v4441 = vmax.f32 %v3652, 0.0
        %v4442 = vmax.f32 %v3655, 0.0
        %v4443 = vmax.f32 %v3657, 0.0
        %v4444 = vmax.f32 %v3660, 0.0
        %v4445 = vmax.f32 %v3662, 0.0
        %v4446 = vmax.f32 %v3665, 0.0
        %v4447 = vmax.f32 %v3667, 0.0
        %v4448 = vmax.f32 %v3670, 0.0
        %v4449 = vmax.f32 %v3672, 0.0
        %v4450 = vmax.f32 %v3675, 0.0
        %v4451 = vmax.f32 %v3677, 0.0
        %v4452 = vmax.f32 %v3680, 0.0
        %v4453 = vmax.f32 %v3682, 0.0
        %v4454 = vmax.f32 %v3685, 0.0
        %v4455 = vmax.f32 %v3687, 0.0
        %v4456 = vmax.f32 %v3690, 0.0
        %v4457 = vmax.f32 %v3692, 0.0
        %v4458 = vmax.f32 %v3695, 0.0
        %v4459 = vmax.f32 %v3697, 0.0
        %v4460 = vmax.f32 %v3700, 0.0
        %v4461 = vmax.f32 %v3702, 0.0
        %v4462 = vmax.f32 %v3705, 0.0
        %v4463 = vmax.f32 %v3707, 0.0
        %v4464 = vmax.f32 %v3710, 0.0
        %v4465 = vmax.f32 %v3712, 0.0
        %v4466 = vmax.f32 %v3715, 0.0
        %v4467 = vmax.f32 %v3717, 0.0
        %v4468 = vmax.f32 %v3720, 0.0
        %v4469 = vmax.f32 %v3722, 0.0
        %v4470 = vmax.f32 %v3725, 0.0
        %v4471 = vmax.f32 %v3727, 0.0
        %v4472 = vmax.f32 %v3730, 0.0
        %v4473 = vmax.f32 %v3732, 0.0
        %v4474 = vmax.f32 %v3735, 0.0
        %v4475 = vmax.f32 %v3737, 0.0
        %v4476 = vmax.f32 %v3740, 0.0
        %v4477 = vmax.f32 %v3742, 0.0
        %v4478 = vmax.f32 %v3745, 0.0
        %v4479 = vmax.f32 %v3747, 0.0
        %v4480 = vmax.f32 %v3750, 0.0
        %v4481 = vmax.f32 %v3752, 0.0
        %v4482 = vmax.f32 %v3755, 0.0
        %v4483 = vmax.f32 %v3757, 0.0
        %v4484 = vmax.f32 %v3760, 0.0
        %v4485 = vmax.f32 %v3762, 0.0
        %v4486 = vmax.f32 %v3765, 0.0
        %v4487 = vmax.f32 %v3767, 0.0
        %v4488 = vmax.f32 %v3770, 0.0
        %v4489 = vmax.f32 %v3772, 0.0
        %v4490 = vmax.f32 %v3775, 0.0
        %v4491 = vmax.f32 %v3777, 0.0
        %v4492 = vmax.f32 %v3780, 0.0
        %v4493 = vmax.f32 %v3782, 0.0
        %v4494 = vmax.f32 %v3785, 0.0
        %v4495 = vmax.f32 %v3787, 0.0
        %v4496 = vmax.f32 %v3790, 0.0
        %v4497 = vmax.f32 %v3792, 0.0
        %v4498 = vmax.f32 %v3795, 0.0
        %v4499 = vmax.f32 %v3797, 0.0
        %v4500 = vmax.f32 %v3800, 0.0
        %v4501 = vmax.f32 %v3802, 0.0
        %v4502 = vmax.f32 %v3805, 0.0
        %v4503 = vmax.f32 %v3807, 0.0
        %v4504 = vmax.f32 %v3810, 0.0
        %v4505 = vmax.f32 %v3812, 0.0
        %v4506 = vmax.f32 %v3815, 0.0
        %v4507 = vmax.f32 %v3817, 0.0
        %v4508 = vmax.f32 %v3820, 0.0
        %v4509 = vmax.f32 %v3822, 0.0
        %v4510 = vmax.f32 %v3825, 0.0
        %v4511 = vmax.f32 %v3827, 0.0
        %v4512 = vmax.f32 %v3830, 0.0
        %v4513 = vmax.f32 %v3832, 0.0
        %v4514 = vmax.f32 %v3835, 0.0
        %v4515 = vmax.f32 %v3837, 0.0
        %v4516 = vmax.f32 %v3840, 0.0
        %v4517 = vmax.f32 %v3842, 0.0
        %v4518 = vmax.f32 %v3845, 0.0
        %v4519 = vmax.f32 %v3847, 0.0
        %v4520 = vmax.f32 %v3850, 0.0
        %v4521 = vmax.f32 %v3852, 0.0
        %v4522 = vmax.f32 %v3855, 0.0
        %v4523 = vmax.f32 %v3857, 0.0
        %v4524 = vmax.f32 %v3860, 0.0
        %v4525 = vmax.f32 %v3862, 0.0
        %v4526 = vmax.f32 %v3865, 0.0
        %v4527 = vmax.f32 %v3867, 0.0
        %v4528 = vmax.f32 %v3870, 0.0
        %v4529 = vmax.f32 %v3872, 0.0
        %v4530 = vmax.f32 %v3875, 0.0
        %v4531 = vmax.f32 %v3877, 0.0
        %v4532 = vmax.f32 %v3880, 0.0
        %v4533 = vmax.f32 %v3882, 0.0
        %v4534 = vmax.f32 %v3885, 0.0
        %v4535 = vmax.f32 %v3887, 0.0
        %v4536 = vmax.f32 %v3890, 0.0
        %v4537 = vmax.f32 %v3892, 0.0
        %v4538 = vmax.f32 %v3895, 0.0
        %v4539 = vmax.f32 %v3897, 0.0
        %v4540 = vmax.f32 %v3900, 0.0
        %v4541 = vmax.f32 %v3902, 0.0
        %v4542 = vmax.f32 %v3905, 0.0
        %v4543 = vmax.f32 %v3907, 0.0
        %v4544 = vmax.f32 %v3910, 0.0
        %v4545 = vmax.f32 %v3912, 0.0
        %v4546 = vmax.f32 %v3915, 0.0
        %v4547 = vmax.f32 %v3917, 0.0
        %v4548 = vmax.f32 %v3920, 0.0
        %v4549 = vmax.f32 %v3922, 0.0
        %v4550 = vmax.f32 %v3925, 0.0
        %v4551 = vmax.f32 %v3927, 0.0
        %v4552 = vmax.f32 %v3930, 0.0
        %v4553 = vmax.f32 %v3932, 0.0
        %v4554 = vmax.f32 %v3935, 0.0
        %v4555 = vmax.f32 %v3937, 0.0
        %v4556 = vmax.f32 %v3940, 0.0
        %v4557 = vmax.f32 %v3942, 0.0
        %v4558 = vmax.f32 %v3945, 0.0
        %v4559 = vmax.f32 %v3947, 0.0
        %v4560 = vmax.f32 %v3950, 0.0
        %v4561 = vmax.f32 %v3952, 0.0
        %v4562 = vmax.f32 %v3955, 0.0
        %v4563 = vmax.f32 %v3957, 0.0
        %v4564 = vmax.f32 %v3960, 0.0
        %v4565 = vmax.f32 %v3962, 0.0
        %v4566 = vmax.f32 %v3965, 0.0
        %v4567 = vmax.f32 %v3967, 0.0
        %v4568 = vmax.f32 %v3970, 0.0
        %v4569 = vmax.f32 %v3972, 0.0
        %v4570 = vmax.f32 %v3975, 0.0
        %v4571 = vmax.f32 %v3977, 0.0
        %v4572 = vmax.f32 %v3980, 0.0
        %v4573 = vmax.f32 %v3982, 0.0
        %v4574 = vmax.f32 %v3985, 0.0
        %v4575 = vmax.f32 %v3987, 0.0
        %v4576 = vmax.f32 %v3990, 0.0
        %v4577 = vmax.f32 %v3992, 0.0
        %v4578 = vmax.f32 %v3995, 0.0
        %v4579 = vmax.f32 %v3997, 0.0
        %v4580 = vmax.f32 %v4000, 0.0
        %v4581 = vmax.f32 %v4002, 0.0
        %v4582 = vmax.f32 %v4005, 0.0
        %v4583 = vmax.f32 %v4007, 0.0
        %v4584 = vmax.f32 %v4010, 0.0
        %v4585 = vmax.f32 %v4012, 0.0
        %v4586 = vmax.f32 %v4015, 0.0
        %v4587 = vmax.f32 %v4017, 0.0
        %v4588 = vmax.f32 %v4020, 0.0
        %v4589 = vmax.f32 %v4022, 0.0
        %v4590 = vmax.f32 %v4025, 0.0
        %v4591 = vmax.f32 %v4027, 0.0
        %v4592 = vmax.f32 %v4030, 0.0
        %v4593 = vmax.f32 %v4032, 0.0
        %v4594 = vmax.f32 %v4035, 0.0
        %v4595 = vmax.f32 %v4037, 0.0
        %v4596 = vmax.f32 %v4040, 0.0
        %v4597 = vmax.f32 %v4042, 0.0
        %v4598 = vmax.f32 %v4045, 0.0
        %v4599 = vmax.f32 %v4047, 0.0
        %v4600 = vmax.f32 %v4050, 0.0
        %v4601 = vmax.f32 %v4052, 0.0
        %v4602 = vmax.f32 %v4055, 0.0
        %v4603 = vmax.f32 %v4057, 0.0
        %v4604 = vmax.f32 %v4060, 0.0
        %v4605 = vmax.f32 %v4062, 0.0
        %v4606 = vmax.f32 %v4065, 0.0
        %v4607 = vmax.f32 %v4067, 0.0
        %v4608 = vmax.f32 %v4070, 0.0
        %v4609 = vmax.f32 %v4072, 0.0
        %v4610 = vmax.f32 %v4075, 0.0
        %v4611 = vmax.f32 %v4077, 0.0
        %v4612 = vmax.f32 %v4080, 0.0
        %v4613 = vmax.f32 %v4082, 0.0
        %v4614 = vmax.f32 %v4085, 0.0
        %v4615 = vmax.f32 %v4087, 0.0
        %v4616 = vmax.f32 %v4090, 0.0
        %v4617 = vmax.f32 %v4092, 0.0
        %v4618 = vmax.f32 %v4095, 0.0
        %v4619 = vmax.f32 %v4097, 0.0
        %v4620 = vmax.f32 %v4100, 0.0
        %v4621 = vmax.f32 %v4102, 0.0
        %v4622 = vmax.f32 %v4105, 0.0
        %v4623 = vmax.f32 %v4107, 0.0
        %v4624 = vmax.f32 %v4110, 0.0
        %v4625 = vmax.f32 %v4112, 0.0
        %v4626 = vpack.c.bf16 %v4114, %v4114
        %v4627 = vpack.c.bf16 %v4115, %v4115
        %v4628 = vpack.c.bf16 %v4116, %v4116
        %v4629 = vpack.c.bf16 %v4117, %v4117
        %v4630 = vpack.c.bf16 %v4118, %v4118
        %v4631 = vpack.c.bf16 %v4119, %v4119
        %v4632 = vpack.c.bf16 %v4120, %v4120
        %v4633 = vpack.c.bf16 %v4121, %v4121
        %v4634 = vpack.c.bf16 %v4122, %v4122
        %v4635 = vpack.c.bf16 %v4123, %v4123
        %v4636 = vpack.c.bf16 %v4124, %v4124
        %v4637 = vpack.c.bf16 %v4125, %v4125
        %v4638 = vpack.c.bf16 %v4126, %v4126
        %v4639 = vpack.c.bf16 %v4127, %v4127
        %v4640 = vpack.c.bf16 %v4128, %v4128
        %v4641 = vpack.c.bf16 %v4129, %v4129
        %v4642 = vpack.c.bf16 %v4130, %v4130
        %v4643 = vpack.c.bf16 %v4131, %v4131
        %v4644 = vpack.c.bf16 %v4132, %v4132
        %v4645 = vpack.c.bf16 %v4133, %v4133
        %v4646 = vpack.c.bf16 %v4134, %v4134
        %v4647 = vpack.c.bf16 %v4135, %v4135
        %v4648 = vpack.c.bf16 %v4136, %v4136
        %v4649 = vpack.c.bf16 %v4137, %v4137
        %v4650 = vpack.c.bf16 %v4138, %v4138
        %v4651 = vpack.c.bf16 %v4139, %v4139
        %v4652 = vpack.c.bf16 %v4140, %v4140
        %v4653 = vpack.c.bf16 %v4141, %v4141
        %v4654 = vpack.c.bf16 %v4142, %v4142
        %v4655 = vpack.c.bf16 %v4143, %v4143
        %v4656 = vpack.c.bf16 %v4144, %v4144
        %v4657 = vpack.c.bf16 %v4145, %v4145
        %v4658 = vpack.c.bf16 %v4146, %v4146
        %v4659 = vpack.c.bf16 %v4147, %v4147
        %v4660 = vpack.c.bf16 %v4148, %v4148
        %v4661 = vpack.c.bf16 %v4149, %v4149
        %v4662 = vpack.c.bf16 %v4150, %v4150
        %v4663 = vpack.c.bf16 %v4151, %v4151
        %v4664 = vpack.c.bf16 %v4152, %v4152
        %v4665 = vpack.c.bf16 %v4153, %v4153
        %v4666 = vpack.c.bf16 %v4154, %v4154
        %v4667 = vpack.c.bf16 %v4155, %v4155
        %v4668 = vpack.c.bf16 %v4156, %v4156
        %v4669 = vpack.c.bf16 %v4157, %v4157
        %v4670 = vpack.c.bf16 %v4158, %v4158
        %v4671 = vpack.c.bf16 %v4159, %v4159
        %v4672 = vpack.c.bf16 %v4160, %v4160
        %v4673 = vpack.c.bf16 %v4161, %v4161
        %v4674 = vpack.c.bf16 %v4162, %v4162
        %v4675 = vpack.c.bf16 %v4163, %v4163
        %v4676 = vpack.c.bf16 %v4164, %v4164
        %v4677 = vpack.c.bf16 %v4165, %v4165
        %v4678 = vpack.c.bf16 %v4166, %v4166
        %v4679 = vpack.c.bf16 %v4167, %v4167
        %v4680 = vpack.c.bf16 %v4168, %v4168
        %v4681 = vpack.c.bf16 %v4169, %v4169
        %v4682 = vpack.c.bf16 %v4170, %v4170
        %v4683 = vpack.c.bf16 %v4171, %v4171
        %v4684 = vpack.c.bf16 %v4172, %v4172
        %v4685 = vpack.c.bf16 %v4173, %v4173
        %v4686 = vpack.c.bf16 %v4174, %v4174
        %v4687 = vpack.c.bf16 %v4175, %v4175
        %v4688 = vpack.c.bf16 %v4176, %v4176
        %v4689 = vpack.c.bf16 %v4177, %v4177
        %v4690 = vpack.c.bf16 %v4178, %v4178
        %v4691 = vpack.c.bf16 %v4179, %v4179
        %v4692 = vpack.c.bf16 %v4180, %v4180
        %v4693 = vpack.c.bf16 %v4181, %v4181
        %v4694 = vpack.c.bf16 %v4182, %v4182
        %v4695 = vpack.c.bf16 %v4183, %v4183
        %v4696 = vpack.c.bf16 %v4184, %v4184
        %v4697 = vpack.c.bf16 %v4185, %v4185
        %v4698 = vpack.c.bf16 %v4186, %v4186
        %v4699 = vpack.c.bf16 %v4187, %v4187
        %v4700 = vpack.c.bf16 %v4188, %v4188
        %v4701 = vpack.c.bf16 %v4189, %v4189
        %v4702 = vpack.c.bf16 %v4190, %v4190
        %v4703 = vpack.c.bf16 %v4191, %v4191
        %v4704 = vpack.c.bf16 %v4192, %v4192
        %v4705 = vpack.c.bf16 %v4193, %v4193
        %v4706 = vpack.c.bf16 %v4194, %v4194
        %v4707 = vpack.c.bf16 %v4195, %v4195
        %v4708 = vpack.c.bf16 %v4196, %v4196
        %v4709 = vpack.c.bf16 %v4197, %v4197
        %v4710 = vpack.c.bf16 %v4198, %v4198
        %v4711 = vpack.c.bf16 %v4199, %v4199
        %v4712 = vpack.c.bf16 %v4200, %v4200
        %v4713 = vpack.c.bf16 %v4201, %v4201
        %v4714 = vpack.c.bf16 %v4202, %v4202
        %v4715 = vpack.c.bf16 %v4203, %v4203
        %v4716 = vpack.c.bf16 %v4204, %v4204
        %v4717 = vpack.c.bf16 %v4205, %v4205
        %v4718 = vpack.c.bf16 %v4206, %v4206
        %v4719 = vpack.c.bf16 %v4207, %v4207
        %v4720 = vpack.c.bf16 %v4208, %v4208
        %v4721 = vpack.c.bf16 %v4209, %v4209
        %v4722 = vpack.c.bf16 %v4210, %v4210
        %v4723 = vpack.c.bf16 %v4211, %v4211
        %v4724 = vpack.c.bf16 %v4212, %v4212
        %v4725 = vpack.c.bf16 %v4213, %v4213
        %v4726 = vpack.c.bf16 %v4214, %v4214
        %v4727 = vpack.c.bf16 %v4215, %v4215
        %v4728 = vpack.c.bf16 %v4216, %v4216
        %v4729 = vpack.c.bf16 %v4217, %v4217
        %v4730 = vpack.c.bf16 %v4218, %v4218
        %v4731 = vpack.c.bf16 %v4219, %v4219
        %v4732 = vpack.c.bf16 %v4220, %v4220
        %v4733 = vpack.c.bf16 %v4221, %v4221
        %v4734 = vpack.c.bf16 %v4222, %v4222
        %v4735 = vpack.c.bf16 %v4223, %v4223
        %v4736 = vpack.c.bf16 %v4224, %v4224
        %v4737 = vpack.c.bf16 %v4225, %v4225
        %v4738 = vpack.c.bf16 %v4226, %v4226
        %v4739 = vpack.c.bf16 %v4227, %v4227
        %v4740 = vpack.c.bf16 %v4228, %v4228
        %v4741 = vpack.c.bf16 %v4229, %v4229
        %v4742 = vpack.c.bf16 %v4230, %v4230
        %v4743 = vpack.c.bf16 %v4231, %v4231
        %v4744 = vpack.c.bf16 %v4232, %v4232
        %v4745 = vpack.c.bf16 %v4233, %v4233
        %v4746 = vpack.c.bf16 %v4234, %v4234
        %v4747 = vpack.c.bf16 %v4235, %v4235
        %v4748 = vpack.c.bf16 %v4236, %v4236
        %v4749 = vpack.c.bf16 %v4237, %v4237
        %v4750 = vpack.c.bf16 %v4238, %v4238
        %v4751 = vpack.c.bf16 %v4239, %v4239
        %v4752 = vpack.c.bf16 %v4240, %v4240
        %v4753 = vpack.c.bf16 %v4241, %v4241
        %v4754 = vpack.c.bf16 %v4242, %v4242
        %v4755 = vpack.c.bf16 %v4243, %v4243
        %v4756 = vpack.c.bf16 %v4244, %v4244
        %v4757 = vpack.c.bf16 %v4245, %v4245
        %v4758 = vpack.c.bf16 %v4246, %v4246
        %v4759 = vpack.c.bf16 %v4247, %v4247
        %v4760 = vpack.c.bf16 %v4248, %v4248
        %v4761 = vpack.c.bf16 %v4249, %v4249
        %v4762 = vpack.c.bf16 %v4250, %v4250
        %v4763 = vpack.c.bf16 %v4251, %v4251
        %v4764 = vpack.c.bf16 %v4252, %v4252
        %v4765 = vpack.c.bf16 %v4253, %v4253
        %v4766 = vpack.c.bf16 %v4254, %v4254
        %v4767 = vpack.c.bf16 %v4255, %v4255
        %v4768 = vpack.c.bf16 %v4256, %v4256
        %v4769 = vpack.c.bf16 %v4257, %v4257
        %v4770 = vpack.c.bf16 %v4258, %v4258
        %v4771 = vpack.c.bf16 %v4259, %v4259
        %v4772 = vpack.c.bf16 %v4260, %v4260
        %v4773 = vpack.c.bf16 %v4261, %v4261
        %v4774 = vpack.c.bf16 %v4262, %v4262
        %v4775 = vpack.c.bf16 %v4263, %v4263
        %v4776 = vpack.c.bf16 %v4264, %v4264
        %v4777 = vpack.c.bf16 %v4265, %v4265
        %v4778 = vpack.c.bf16 %v4266, %v4266
        %v4779 = vpack.c.bf16 %v4267, %v4267
        %v4780 = vpack.c.bf16 %v4268, %v4268
        %v4781 = vpack.c.bf16 %v4269, %v4269
        %v4782 = vpack.c.bf16 %v4270, %v4270
        %v4783 = vpack.c.bf16 %v4271, %v4271
        %v4784 = vpack.c.bf16 %v4272, %v4272
        %v4785 = vpack.c.bf16 %v4273, %v4273
        %v4786 = vpack.c.bf16 %v4274, %v4274
        %v4787 = vpack.c.bf16 %v4275, %v4275
        %v4788 = vpack.c.bf16 %v4276, %v4276
        %v4789 = vpack.c.bf16 %v4277, %v4277
        %v4790 = vpack.c.bf16 %v4278, %v4278
        %v4791 = vpack.c.bf16 %v4279, %v4279
        %v4792 = vpack.c.bf16 %v4280, %v4280
        %v4793 = vpack.c.bf16 %v4281, %v4281
        %v4794 = vpack.c.bf16 %v4282, %v4282
        %v4795 = vpack.c.bf16 %v4283, %v4283
        %v4796 = vpack.c.bf16 %v4284, %v4284
        %v4797 = vpack.c.bf16 %v4285, %v4285
        %v4798 = vpack.c.bf16 %v4286, %v4286
        %v4799 = vpack.c.bf16 %v4287, %v4287
        %v4800 = vpack.c.bf16 %v4288, %v4288
        %v4801 = vpack.c.bf16 %v4289, %v4289
        %v4802 = vpack.c.bf16 %v4290, %v4290
        %v4803 = vpack.c.bf16 %v4291, %v4291
        %v4804 = vpack.c.bf16 %v4292, %v4292
        %v4805 = vpack.c.bf16 %v4293, %v4293
        %v4806 = vpack.c.bf16 %v4294, %v4294
        %v4807 = vpack.c.bf16 %v4295, %v4295
        %v4808 = vpack.c.bf16 %v4296, %v4296
        %v4809 = vpack.c.bf16 %v4297, %v4297
        %v4810 = vpack.c.bf16 %v4298, %v4298
        %v4811 = vpack.c.bf16 %v4299, %v4299
        %v4812 = vpack.c.bf16 %v4300, %v4300
        %v4813 = vpack.c.bf16 %v4301, %v4301
        %v4814 = vpack.c.bf16 %v4302, %v4302
        %v4815 = vpack.c.bf16 %v4303, %v4303
        %v4816 = vpack.c.bf16 %v4304, %v4304
        %v4817 = vpack.c.bf16 %v4305, %v4305
        %v4818 = vpack.c.bf16 %v4306, %v4306
        %v4819 = vpack.c.bf16 %v4307, %v4307
        %v4820 = vpack.c.bf16 %v4308, %v4308
        %v4821 = vpack.c.bf16 %v4309, %v4309
        %v4822 = vpack.c.bf16 %v4310, %v4310
        %v4823 = vpack.c.bf16 %v4311, %v4311
        %v4824 = vpack.c.bf16 %v4312, %v4312
        %v4825 = vpack.c.bf16 %v4313, %v4313
        %v4826 = vpack.c.bf16 %v4314, %v4314
        %v4827 = vpack.c.bf16 %v4315, %v4315
        %v4828 = vpack.c.bf16 %v4316, %v4316
        %v4829 = vpack.c.bf16 %v4317, %v4317
        %v4830 = vpack.c.bf16 %v4318, %v4318
        %v4831 = vpack.c.bf16 %v4319, %v4319
        %v4832 = vpack.c.bf16 %v4320, %v4320
        %v4833 = vpack.c.bf16 %v4321, %v4321
        %v4834 = vpack.c.bf16 %v4322, %v4322
        %v4835 = vpack.c.bf16 %v4323, %v4323
        %v4836 = vpack.c.bf16 %v4324, %v4324
        %v4837 = vpack.c.bf16 %v4325, %v4325
        %v4838 = vpack.c.bf16 %v4326, %v4326
        %v4839 = vpack.c.bf16 %v4327, %v4327
        %v4840 = vpack.c.bf16 %v4328, %v4328
        %v4841 = vpack.c.bf16 %v4329, %v4329
        %v4842 = vpack.c.bf16 %v4330, %v4330
        %v4843 = vpack.c.bf16 %v4331, %v4331
        %v4844 = vpack.c.bf16 %v4332, %v4332
        %v4845 = vpack.c.bf16 %v4333, %v4333
        %v4846 = vpack.c.bf16 %v4334, %v4334
        %v4847 = vpack.c.bf16 %v4335, %v4335
        %v4848 = vpack.c.bf16 %v4336, %v4336
        %v4849 = vpack.c.bf16 %v4337, %v4337
        %v4850 = vpack.c.bf16 %v4338, %v4338
        %v4851 = vpack.c.bf16 %v4339, %v4339
        %v4852 = vpack.c.bf16 %v4340, %v4340
        %v4853 = vpack.c.bf16 %v4341, %v4341
        %v4854 = vpack.c.bf16 %v4342, %v4342
        %v4855 = vpack.c.bf16 %v4343, %v4343
        %v4856 = vpack.c.bf16 %v4344, %v4344
        %v4857 = vpack.c.bf16 %v4345, %v4345
        %v4858 = vpack.c.bf16 %v4346, %v4346
        %v4859 = vpack.c.bf16 %v4347, %v4347
        %v4860 = vpack.c.bf16 %v4348, %v4348
        %v4861 = vpack.c.bf16 %v4349, %v4349
        %v4862 = vpack.c.bf16 %v4350, %v4350
        %v4863 = vpack.c.bf16 %v4351, %v4351
        %v4864 = vpack.c.bf16 %v4352, %v4352
        %v4865 = vpack.c.bf16 %v4353, %v4353
        %v4866 = vpack.c.bf16 %v4354, %v4354
        %v4867 = vpack.c.bf16 %v4355, %v4355
        %v4868 = vpack.c.bf16 %v4356, %v4356
        %v4869 = vpack.c.bf16 %v4357, %v4357
        %v4870 = vpack.c.bf16 %v4358, %v4358
        %v4871 = vpack.c.bf16 %v4359, %v4359
        %v4872 = vpack.c.bf16 %v4360, %v4360
        %v4873 = vpack.c.bf16 %v4361, %v4361
        %v4874 = vpack.c.bf16 %v4362, %v4362
        %v4875 = vpack.c.bf16 %v4363, %v4363
        %v4876 = vpack.c.bf16 %v4364, %v4364
        %v4877 = vpack.c.bf16 %v4365, %v4365
        %v4878 = vpack.c.bf16 %v4366, %v4366
        %v4879 = vpack.c.bf16 %v4367, %v4367
        %v4880 = vpack.c.bf16 %v4368, %v4368
        %v4881 = vpack.c.bf16 %v4369, %v4369
        %v4882 = vpack.c.bf16 %v4370, %v4370
        %v4883 = vpack.c.bf16 %v4371, %v4371
        %v4884 = vpack.c.bf16 %v4372, %v4372
        %v4885 = vpack.c.bf16 %v4373, %v4373
        %v4886 = vpack.c.bf16 %v4374, %v4374
        %v4887 = vpack.c.bf16 %v4375, %v4375
        %v4888 = vpack.c.bf16 %v4376, %v4376
        %v4889 = vpack.c.bf16 %v4377, %v4377
        %v4890 = vpack.c.bf16 %v4378, %v4378
        %v4891 = vpack.c.bf16 %v4379, %v4379
        %v4892 = vpack.c.bf16 %v4380, %v4380
        %v4893 = vpack.c.bf16 %v4381, %v4381
        %v4894 = vpack.c.bf16 %v4382, %v4382
        %v4895 = vpack.c.bf16 %v4383, %v4383
        %v4896 = vpack.c.bf16 %v4384, %v4384
        %v4897 = vpack.c.bf16 %v4385, %v4385
        %v4898 = vpack.c.bf16 %v4386, %v4386
        %v4899 = vpack.c.bf16 %v4387, %v4387
        %v4900 = vpack.c.bf16 %v4388, %v4388
        %v4901 = vpack.c.bf16 %v4389, %v4389
        %v4902 = vpack.c.bf16 %v4390, %v4390
        %v4903 = vpack.c.bf16 %v4391, %v4391
        %v4904 = vpack.c.bf16 %v4392, %v4392
        %v4905 = vpack.c.bf16 %v4393, %v4393
        %v4906 = vpack.c.bf16 %v4394, %v4394
        %v4907 = vpack.c.bf16 %v4395, %v4395
        %v4908 = vpack.c.bf16 %v4396, %v4396
        %v4909 = vpack.c.bf16 %v4397, %v4397
        %v4910 = vpack.c.bf16 %v4398, %v4398
        %v4911 = vpack.c.bf16 %v4399, %v4399
        %v4912 = vpack.c.bf16 %v4400, %v4400
        %v4913 = vpack.c.bf16 %v4401, %v4401
        %v4914 = vpack.c.bf16 %v4402, %v4402
        %v4915 = vpack.c.bf16 %v4403, %v4403
        %v4916 = vpack.c.bf16 %v4404, %v4404
        %v4917 = vpack.c.bf16 %v4405, %v4405
        %v4918 = vpack.c.bf16 %v4406, %v4406
        %v4919 = vpack.c.bf16 %v4407, %v4407
        %v4920 = vpack.c.bf16 %v4408, %v4408
        %v4921 = vpack.c.bf16 %v4409, %v4409
        %v4922 = vpack.c.bf16 %v4410, %v4410
        %v4923 = vpack.c.bf16 %v4411, %v4411
        %v4924 = vpack.c.bf16 %v4412, %v4412
        %v4925 = vpack.c.bf16 %v4413, %v4413
        %v4926 = vpack.c.bf16 %v4414, %v4414
        %v4927 = vpack.c.bf16 %v4415, %v4415
        %v4928 = vpack.c.bf16 %v4416, %v4416
        %v4929 = vpack.c.bf16 %v4417, %v4417
        %v4930 = vpack.c.bf16 %v4418, %v4418
        %v4931 = vpack.c.bf16 %v4419, %v4419
        %v4932 = vpack.c.bf16 %v4420, %v4420
        %v4933 = vpack.c.bf16 %v4421, %v4421
        %v4934 = vpack.c.bf16 %v4422, %v4422
        %v4935 = vpack.c.bf16 %v4423, %v4423
        %v4936 = vpack.c.bf16 %v4424, %v4424
        %v4937 = vpack.c.bf16 %v4425, %v4425
        %v4938 = vpack.c.bf16 %v4426, %v4426
        %v4939 = vpack.c.bf16 %v4427, %v4427
        %v4940 = vpack.c.bf16 %v4428, %v4428
        %v4941 = vpack.c.bf16 %v4429, %v4429
        %v4942 = vpack.c.bf16 %v4430, %v4430
        %v4943 = vpack.c.bf16 %v4431, %v4431
        %v4944 = vpack.c.bf16 %v4432, %v4432
        %v4945 = vpack.c.bf16 %v4433, %v4433
        %v4946 = vpack.c.bf16 %v4434, %v4434
        %v4947 = vpack.c.bf16 %v4435, %v4435
        %v4948 = vpack.c.bf16 %v4436, %v4436
        %v4949 = vpack.c.bf16 %v4437, %v4437
        %v4950 = vpack.c.bf16 %v4438, %v4438
        %v4951 = vpack.c.bf16 %v4439, %v4439
        %v4952 = vpack.c.bf16 %v4440, %v4440
        %v4953 = vpack.c.bf16 %v4441, %v4441
        %v4954 = vpack.c.bf16 %v4442, %v4442
        %v4955 = vpack.c.bf16 %v4443, %v4443
        %v4956 = vpack.c.bf16 %v4444, %v4444
        %v4957 = vpack.c.bf16 %v4445, %v4445
        %v4958 = vpack.c.bf16 %v4446, %v4446
        %v4959 = vpack.c.bf16 %v4447, %v4447
        %v4960 = vpack.c.bf16 %v4448, %v4448
        %v4961 = vpack.c.bf16 %v4449, %v4449
        %v4962 = vpack.c.bf16 %v4450, %v4450
        %v4963 = vpack.c.bf16 %v4451, %v4451
        %v4964 = vpack.c.bf16 %v4452, %v4452
        %v4965 = vpack.c.bf16 %v4453, %v4453
        %v4966 = vpack.c.bf16 %v4454, %v4454
        %v4967 = vpack.c.bf16 %v4455, %v4455
        %v4968 = vpack.c.bf16 %v4456, %v4456
        %v4969 = vpack.c.bf16 %v4457, %v4457
        %v4970 = vpack.c.bf16 %v4458, %v4458
        %v4971 = vpack.c.bf16 %v4459, %v4459
        %v4972 = vpack.c.bf16 %v4460, %v4460
        %v4973 = vpack.c.bf16 %v4461, %v4461
        %v4974 = vpack.c.bf16 %v4462, %v4462
        %v4975 = vpack.c.bf16 %v4463, %v4463
        %v4976 = vpack.c.bf16 %v4464, %v4464
        %v4977 = vpack.c.bf16 %v4465, %v4465
        %v4978 = vpack.c.bf16 %v4466, %v4466
        %v4979 = vpack.c.bf16 %v4467, %v4467
        %v4980 = vpack.c.bf16 %v4468, %v4468
        %v4981 = vpack.c.bf16 %v4469, %v4469
        %v4982 = vpack.c.bf16 %v4470, %v4470
        %v4983 = vpack.c.bf16 %v4471, %v4471
        %v4984 = vpack.c.bf16 %v4472, %v4472
        %v4985 = vpack.c.bf16 %v4473, %v4473
        %v4986 = vpack.c.bf16 %v4474, %v4474
        %v4987 = vpack.c.bf16 %v4475, %v4475
        %v4988 = vpack.c.bf16 %v4476, %v4476
        %v4989 = vpack.c.bf16 %v4477, %v4477
        %v4990 = vpack.c.bf16 %v4478, %v4478
        %v4991 = vpack.c.bf16 %v4479, %v4479
        %v4992 = vpack.c.bf16 %v4480, %v4480
        %v4993 = vpack.c.bf16 %v4481, %v4481
        %v4994 = vpack.c.bf16 %v4482, %v4482
        %v4995 = vpack.c.bf16 %v4483, %v4483
        %v4996 = vpack.c.bf16 %v4484, %v4484
        %v4997 = vpack.c.bf16 %v4485, %v4485
        %v4998 = vpack.c.bf16 %v4486, %v4486
        %v4999 = vpack.c.bf16 %v4487, %v4487
        %v5000 = vpack.c.bf16 %v4488, %v4488
        %v5001 = vpack.c.bf16 %v4489, %v4489
        %v5002 = vpack.c.bf16 %v4490, %v4490
        %v5003 = vpack.c.bf16 %v4491, %v4491
        %v5004 = vpack.c.bf16 %v4492, %v4492
        %v5005 = vpack.c.bf16 %v4493, %v4493
        %v5006 = vpack.c.bf16 %v4494, %v4494
        %v5007 = vpack.c.bf16 %v4495, %v4495
        %v5008 = vpack.c.bf16 %v4496, %v4496
        %v5009 = vpack.c.bf16 %v4497, %v4497
        %v5010 = vpack.c.bf16 %v4498, %v4498
        %v5011 = vpack.c.bf16 %v4499, %v4499
        %v5012 = vpack.c.bf16 %v4500, %v4500
        %v5013 = vpack.c.bf16 %v4501, %v4501
        %v5014 = vpack.c.bf16 %v4502, %v4502
        %v5015 = vpack.c.bf16 %v4503, %v4503
        %v5016 = vpack.c.bf16 %v4504, %v4504
        %v5017 = vpack.c.bf16 %v4505, %v4505
        %v5018 = vpack.c.bf16 %v4506, %v4506
        %v5019 = vpack.c.bf16 %v4507, %v4507
        %v5020 = vpack.c.bf16 %v4508, %v4508
        %v5021 = vpack.c.bf16 %v4509, %v4509
        %v5022 = vpack.c.bf16 %v4510, %v4510
        %v5023 = vpack.c.bf16 %v4511, %v4511
        %v5024 = vpack.c.bf16 %v4512, %v4512
        %v5025 = vpack.c.bf16 %v4513, %v4513
        %v5026 = vpack.c.bf16 %v4514, %v4514
        %v5027 = vpack.c.bf16 %v4515, %v4515
        %v5028 = vpack.c.bf16 %v4516, %v4516
        %v5029 = vpack.c.bf16 %v4517, %v4517
        %v5030 = vpack.c.bf16 %v4518, %v4518
        %v5031 = vpack.c.bf16 %v4519, %v4519
        %v5032 = vpack.c.bf16 %v4520, %v4520
        %v5033 = vpack.c.bf16 %v4521, %v4521
        %v5034 = vpack.c.bf16 %v4522, %v4522
        %v5035 = vpack.c.bf16 %v4523, %v4523
        %v5036 = vpack.c.bf16 %v4524, %v4524
        %v5037 = vpack.c.bf16 %v4525, %v4525
        %v5038 = vpack.c.bf16 %v4526, %v4526
        %v5039 = vpack.c.bf16 %v4527, %v4527
        %v5040 = vpack.c.bf16 %v4528, %v4528
        %v5041 = vpack.c.bf16 %v4529, %v4529
        %v5042 = vpack.c.bf16 %v4530, %v4530
        %v5043 = vpack.c.bf16 %v4531, %v4531
        %v5044 = vpack.c.bf16 %v4532, %v4532
        %v5045 = vpack.c.bf16 %v4533, %v4533
        %v5046 = vpack.c.bf16 %v4534, %v4534
        %v5047 = vpack.c.bf16 %v4535, %v4535
        %v5048 = vpack.c.bf16 %v4536, %v4536
        %v5049 = vpack.c.bf16 %v4537, %v4537
        %v5050 = vpack.c.bf16 %v4538, %v4538
        %v5051 = vpack.c.bf16 %v4539, %v4539
        %v5052 = vpack.c.bf16 %v4540, %v4540
        %v5053 = vpack.c.bf16 %v4541, %v4541
        %v5054 = vpack.c.bf16 %v4542, %v4542
        %v5055 = vpack.c.bf16 %v4543, %v4543
        %v5056 = vpack.c.bf16 %v4544, %v4544
        %v5057 = vpack.c.bf16 %v4545, %v4545
        %v5058 = vpack.c.bf16 %v4546, %v4546
        %v5059 = vpack.c.bf16 %v4547, %v4547
        %v5060 = vpack.c.bf16 %v4548, %v4548
        %v5061 = vpack.c.bf16 %v4549, %v4549
        %v5062 = vpack.c.bf16 %v4550, %v4550
        %v5063 = vpack.c.bf16 %v4551, %v4551
        %v5064 = vpack.c.bf16 %v4552, %v4552
        %v5065 = vpack.c.bf16 %v4553, %v4553
        %v5066 = vpack.c.bf16 %v4554, %v4554
        %v5067 = vpack.c.bf16 %v4555, %v4555
        %v5068 = vpack.c.bf16 %v4556, %v4556
        %v5069 = vpack.c.bf16 %v4557, %v4557
        %v5070 = vpack.c.bf16 %v4558, %v4558
        %v5071 = vpack.c.bf16 %v4559, %v4559
        %v5072 = vpack.c.bf16 %v4560, %v4560
        %v5073 = vpack.c.bf16 %v4561, %v4561
        %v5074 = vpack.c.bf16 %v4562, %v4562
        %v5075 = vpack.c.bf16 %v4563, %v4563
        %v5076 = vpack.c.bf16 %v4564, %v4564
        %v5077 = vpack.c.bf16 %v4565, %v4565
        %v5078 = vpack.c.bf16 %v4566, %v4566
        %v5079 = vpack.c.bf16 %v4567, %v4567
        %v5080 = vpack.c.bf16 %v4568, %v4568
        %v5081 = vpack.c.bf16 %v4569, %v4569
        %v5082 = vpack.c.bf16 %v4570, %v4570
        %v5083 = vpack.c.bf16 %v4571, %v4571
        %v5084 = vpack.c.bf16 %v4572, %v4572
        %v5085 = vpack.c.bf16 %v4573, %v4573
        %v5086 = vpack.c.bf16 %v4574, %v4574
        %v5087 = vpack.c.bf16 %v4575, %v4575
        %v5088 = vpack.c.bf16 %v4576, %v4576
        %v5089 = vpack.c.bf16 %v4577, %v4577
        %v5090 = vpack.c.bf16 %v4578, %v4578
        %v5091 = vpack.c.bf16 %v4579, %v4579
        %v5092 = vpack.c.bf16 %v4580, %v4580
        %v5093 = vpack.c.bf16 %v4581, %v4581
        %v5094 = vpack.c.bf16 %v4582, %v4582
        %v5095 = vpack.c.bf16 %v4583, %v4583
        %v5096 = vpack.c.bf16 %v4584, %v4584
        %v5097 = vpack.c.bf16 %v4585, %v4585
        %v5098 = vpack.c.bf16 %v4586, %v4586
        %v5099 = vpack.c.bf16 %v4587, %v4587
        %v5100 = vpack.c.bf16 %v4588, %v4588
        %v5101 = vpack.c.bf16 %v4589, %v4589
        %v5102 = vpack.c.bf16 %v4590, %v4590
        %v5103 = vpack.c.bf16 %v4591, %v4591
        %v5104 = vpack.c.bf16 %v4592, %v4592
        %v5105 = vpack.c.bf16 %v4593, %v4593
        %v5106 = vpack.c.bf16 %v4594, %v4594
        %v5107 = vpack.c.bf16 %v4595, %v4595
        %v5108 = vpack.c.bf16 %v4596, %v4596
        %v5109 = vpack.c.bf16 %v4597, %v4597
        %v5110 = vpack.c.bf16 %v4598, %v4598
        %v5111 = vpack.c.bf16 %v4599, %v4599
        %v5112 = vpack.c.bf16 %v4600, %v4600
        %v5113 = vpack.c.bf16 %v4601, %v4601
        %v5114 = vpack.c.bf16 %v4602, %v4602
        %v5115 = vpack.c.bf16 %v4603, %v4603
        %v5116 = vpack.c.bf16 %v4604, %v4604
        %v5117 = vpack.c.bf16 %v4605, %v4605
        %v5118 = vpack.c.bf16 %v4606, %v4606
        %v5119 = vpack.c.bf16 %v4607, %v4607
        %v5120 = vpack.c.bf16 %v4608, %v4608
        %v5121 = vpack.c.bf16 %v4609, %v4609
        %v5122 = vpack.c.bf16 %v4610, %v4610
        %v5123 = vpack.c.bf16 %v4611, %v4611
        %v5124 = vpack.c.bf16 %v4612, %v4612
        %v5125 = vpack.c.bf16 %v4613, %v4613
        %v5126 = vpack.c.bf16 %v4614, %v4614
        %v5127 = vpack.c.bf16 %v4615, %v4615
        %v5128 = vpack.c.bf16 %v4616, %v4616
        %v5129 = vpack.c.bf16 %v4617, %v4617
        %v5130 = vpack.c.bf16 %v4618, %v4618
        %v5131 = vpack.c.bf16 %v4619, %v4619
        %v5132 = vpack.c.bf16 %v4620, %v4620
        %v5133 = vpack.c.bf16 %v4621, %v4621
        %v5134 = vpack.c.bf16 %v4622, %v4622
        %v5135 = vpack.c.bf16 %v4623, %v4623
        %v5136 = vpack.c.bf16 %v4624, %v4624
        %v5137 = vpack.c.bf16 %v4625, %v4625
        %vm5138 = vcmask 257024
        %5139 = vst.msk [vmem:[%s210] sm:$0xf] %vm5138, %v4626
        %5140 = vst.msk [vmem:[%s210 + $0x4] sm:$0xf] %vm5138, %v4627
        %5141 = vst.msk [vmem:[%s210 + $0x8] sm:$0xf] %vm5138, %v4628
        %5142 = vst.msk [vmem:[%s210 + $0xc] sm:$0xf] %vm5138, %v4629
        %5143 = vst.msk [vmem:[%s210 + $0x10] sm:$0xf] %vm5138, %v4630
        %5144 = vst.msk [vmem:[%s210 + $0x14] sm:$0xf] %vm5138, %v4631
        %5145 = vst.msk [vmem:[%s210 + $0x18] sm:$0xf] %vm5138, %v4632
        %5146 = vst.msk [vmem:[%s210 + $0x1c] sm:$0xf] %vm5138, %v4633
        %5147 = vst.msk [vmem:[%s210 + $0x20] sm:$0xf] %vm5138, %v4634
        %5148 = vst.msk [vmem:[%s210 + $0x24] sm:$0xf] %vm5138, %v4635
        %5149 = vst.msk [vmem:[%s210 + $0x28] sm:$0xf] %vm5138, %v4636
        %5150 = vst.msk [vmem:[%s210 + $0x2c] sm:$0xf] %vm5138, %v4637
        %5151 = vst.msk [vmem:[%s210 + $0x30] sm:$0xf] %vm5138, %v4638
        %5152 = vst.msk [vmem:[%s210 + $0x34] sm:$0xf] %vm5138, %v4639
        %5153 = vst.msk [vmem:[%s210 + $0x38] sm:$0xf] %vm5138, %v4640
        %5154 = vst.msk [vmem:[%s210 + $0x3c] sm:$0xf] %vm5138, %v4641
        %5155 = vst.msk [vmem:[%s210 + $0x40] sm:$0xf] %vm5138, %v4642
        %5156 = vst.msk [vmem:[%s210 + $0x44] sm:$0xf] %vm5138, %v4643
        %5157 = vst.msk [vmem:[%s210 + $0x48] sm:$0xf] %vm5138, %v4644
        %5158 = vst.msk [vmem:[%s210 + $0x4c] sm:$0xf] %vm5138, %v4645
        %5159 = vst.msk [vmem:[%s210 + $0x50] sm:$0xf] %vm5138, %v4646
        %5160 = vst.msk [vmem:[%s210 + $0x54] sm:$0xf] %vm5138, %v4647
        %5161 = vst.msk [vmem:[%s210 + $0x58] sm:$0xf] %vm5138, %v4648
        %5162 = vst.msk [vmem:[%s210 + $0x5c] sm:$0xf] %vm5138, %v4649
        %5163 = vst.msk [vmem:[%s210 + $0x60] sm:$0xf] %vm5138, %v4650
        %5164 = vst.msk [vmem:[%s210 + $0x64] sm:$0xf] %vm5138, %v4651
        %5165 = vst.msk [vmem:[%s210 + $0x68] sm:$0xf] %vm5138, %v4652
        %5166 = vst.msk [vmem:[%s210 + $0x6c] sm:$0xf] %vm5138, %v4653
        %5167 = vst.msk [vmem:[%s210 + $0x70] sm:$0xf] %vm5138, %v4654
        %5168 = vst.msk [vmem:[%s210 + $0x74] sm:$0xf] %vm5138, %v4655
        %5169 = vst.msk [vmem:[%s210 + $0x78] sm:$0xf] %vm5138, %v4656
        %5170 = vst.msk [vmem:[%s210 + $0x7c] sm:$0xf] %vm5138, %v4657
        %5171 = vst.msk [vmem:[%s210 + $0x80] sm:$0xf] %vm5138, %v4658
        %5172 = vst.msk [vmem:[%s210 + $0x84] sm:$0xf] %vm5138, %v4659
        %5173 = vst.msk [vmem:[%s210 + $0x88] sm:$0xf] %vm5138, %v4660
        %5174 = vst.msk [vmem:[%s210 + $0x8c] sm:$0xf] %vm5138, %v4661
        %5175 = vst.msk [vmem:[%s210 + $0x90] sm:$0xf] %vm5138, %v4662
        %5176 = vst.msk [vmem:[%s210 + $0x94] sm:$0xf] %vm5138, %v4663
        %5177 = vst.msk [vmem:[%s210 + $0x98] sm:$0xf] %vm5138, %v4664
        %5178 = vst.msk [vmem:[%s210 + $0x9c] sm:$0xf] %vm5138, %v4665
        %5179 = vst.msk [vmem:[%s210 + $0xa0] sm:$0xf] %vm5138, %v4666
        %5180 = vst.msk [vmem:[%s210 + $0xa4] sm:$0xf] %vm5138, %v4667
        %5181 = vst.msk [vmem:[%s210 + $0xa8] sm:$0xf] %vm5138, %v4668
        %5182 = vst.msk [vmem:[%s210 + $0xac] sm:$0xf] %vm5138, %v4669
        %5183 = vst.msk [vmem:[%s210 + $0xb0] sm:$0xf] %vm5138, %v4670
        %5184 = vst.msk [vmem:[%s210 + $0xb4] sm:$0xf] %vm5138, %v4671
        %5185 = vst.msk [vmem:[%s210 + $0xb8] sm:$0xf] %vm5138, %v4672
        %5186 = vst.msk [vmem:[%s210 + $0xbc] sm:$0xf] %vm5138, %v4673
        %5187 = vst.msk [vmem:[%s210 + $0xc0] sm:$0xf] %vm5138, %v4674
        %5188 = vst.msk [vmem:[%s210 + $0xc4] sm:$0xf] %vm5138, %v4675
        %5189 = vst.msk [vmem:[%s210 + $0xc8] sm:$0xf] %vm5138, %v4676
        %5190 = vst.msk [vmem:[%s210 + $0xcc] sm:$0xf] %vm5138, %v4677
        %5191 = vst.msk [vmem:[%s210 + $0xd0] sm:$0xf] %vm5138, %v4678
        %5192 = vst.msk [vmem:[%s210 + $0xd4] sm:$0xf] %vm5138, %v4679
        %5193 = vst.msk [vmem:[%s210 + $0xd8] sm:$0xf] %vm5138, %v4680
        %5194 = vst.msk [vmem:[%s210 + $0xdc] sm:$0xf] %vm5138, %v4681
        %5195 = vst.msk [vmem:[%s210 + $0xe0] sm:$0xf] %vm5138, %v4682
        %5196 = vst.msk [vmem:[%s210 + $0xe4] sm:$0xf] %vm5138, %v4683
        %5197 = vst.msk [vmem:[%s210 + $0xe8] sm:$0xf] %vm5138, %v4684
        %5198 = vst.msk [vmem:[%s210 + $0xec] sm:$0xf] %vm5138, %v4685
        %5199 = vst.msk [vmem:[%s210 + $0xf0] sm:$0xf] %vm5138, %v4686
        %5200 = vst.msk [vmem:[%s210 + $0xf4] sm:$0xf] %vm5138, %v4687
        %5201 = vst.msk [vmem:[%s210 + $0xf8] sm:$0xf] %vm5138, %v4688
        %5202 = vst.msk [vmem:[%s210 + $0xfc] sm:$0xf] %vm5138, %v4689
        %5203 = vst.msk [vmem:[%s210 + $0x100] sm:$0xf] %vm5138, %v4690
        %5204 = vst.msk [vmem:[%s210 + $0x104] sm:$0xf] %vm5138, %v4691
        %5205 = vst.msk [vmem:[%s210 + $0x108] sm:$0xf] %vm5138, %v4692
        %5206 = vst.msk [vmem:[%s210 + $0x10c] sm:$0xf] %vm5138, %v4693
        %5207 = vst.msk [vmem:[%s210 + $0x110] sm:$0xf] %vm5138, %v4694
        %5208 = vst.msk [vmem:[%s210 + $0x114] sm:$0xf] %vm5138, %v4695
        %5209 = vst.msk [vmem:[%s210 + $0x118] sm:$0xf] %vm5138, %v4696
        %5210 = vst.msk [vmem:[%s210 + $0x11c] sm:$0xf] %vm5138, %v4697
        %5211 = vst.msk [vmem:[%s210 + $0x120] sm:$0xf] %vm5138, %v4698
        %5212 = vst.msk [vmem:[%s210 + $0x124] sm:$0xf] %vm5138, %v4699
        %5213 = vst.msk [vmem:[%s210 + $0x128] sm:$0xf] %vm5138, %v4700
        %5214 = vst.msk [vmem:[%s210 + $0x12c] sm:$0xf] %vm5138, %v4701
        %5215 = vst.msk [vmem:[%s210 + $0x130] sm:$0xf] %vm5138, %v4702
        %5216 = vst.msk [vmem:[%s210 + $0x134] sm:$0xf] %vm5138, %v4703
        %5217 = vst.msk [vmem:[%s210 + $0x138] sm:$0xf] %vm5138, %v4704
        %5218 = vst.msk [vmem:[%s210 + $0x13c] sm:$0xf] %vm5138, %v4705
        %5219 = vst.msk [vmem:[%s210 + $0x140] sm:$0xf] %vm5138, %v4706
        %5220 = vst.msk [vmem:[%s210 + $0x144] sm:$0xf] %vm5138, %v4707
        %5221 = vst.msk [vmem:[%s210 + $0x148] sm:$0xf] %vm5138, %v4708
        %5222 = vst.msk [vmem:[%s210 + $0x14c] sm:$0xf] %vm5138, %v4709
        %5223 = vst.msk [vmem:[%s210 + $0x150] sm:$0xf] %vm5138, %v4710
        %5224 = vst.msk [vmem:[%s210 + $0x154] sm:$0xf] %vm5138, %v4711
        %5225 = vst.msk [vmem:[%s210 + $0x158] sm:$0xf] %vm5138, %v4712
        %5226 = vst.msk [vmem:[%s210 + $0x15c] sm:$0xf] %vm5138, %v4713
        %5227 = vst.msk [vmem:[%s210 + $0x160] sm:$0xf] %vm5138, %v4714
        %5228 = vst.msk [vmem:[%s210 + $0x164] sm:$0xf] %vm5138, %v4715
        %5229 = vst.msk [vmem:[%s210 + $0x168] sm:$0xf] %vm5138, %v4716
        %5230 = vst.msk [vmem:[%s210 + $0x16c] sm:$0xf] %vm5138, %v4717
        %5231 = vst.msk [vmem:[%s210 + $0x170] sm:$0xf] %vm5138, %v4718
        %5232 = vst.msk [vmem:[%s210 + $0x174] sm:$0xf] %vm5138, %v4719
        %5233 = vst.msk [vmem:[%s210 + $0x178] sm:$0xf] %vm5138, %v4720
        %5234 = vst.msk [vmem:[%s210 + $0x17c] sm:$0xf] %vm5138, %v4721
        %5235 = vst.msk [vmem:[%s210 + $0x180] sm:$0xf] %vm5138, %v4722
        %5236 = vst.msk [vmem:[%s210 + $0x184] sm:$0xf] %vm5138, %v4723
        %5237 = vst.msk [vmem:[%s210 + $0x188] sm:$0xf] %vm5138, %v4724
        %5238 = vst.msk [vmem:[%s210 + $0x18c] sm:$0xf] %vm5138, %v4725
        %5239 = vst.msk [vmem:[%s210 + $0x190] sm:$0xf] %vm5138, %v4726
        %5240 = vst.msk [vmem:[%s210 + $0x194] sm:$0xf] %vm5138, %v4727
        %5241 = vst.msk [vmem:[%s210 + $0x198] sm:$0xf] %vm5138, %v4728
        %5242 = vst.msk [vmem:[%s210 + $0x19c] sm:$0xf] %vm5138, %v4729
        %5243 = vst.msk [vmem:[%s210 + $0x1a0] sm:$0xf] %vm5138, %v4730
        %5244 = vst.msk [vmem:[%s210 + $0x1a4] sm:$0xf] %vm5138, %v4731
        %5245 = vst.msk [vmem:[%s210 + $0x1a8] sm:$0xf] %vm5138, %v4732
        %5246 = vst.msk [vmem:[%s210 + $0x1ac] sm:$0xf] %vm5138, %v4733
        %5247 = vst.msk [vmem:[%s210 + $0x1b0] sm:$0xf] %vm5138, %v4734
        %5248 = vst.msk [vmem:[%s210 + $0x1b4] sm:$0xf] %vm5138, %v4735
        %5249 = vst.msk [vmem:[%s210 + $0x1b8] sm:$0xf] %vm5138, %v4736
        %5250 = vst.msk [vmem:[%s210 + $0x1bc] sm:$0xf] %vm5138, %v4737
        %5251 = vst.msk [vmem:[%s210 + $0x1c0] sm:$0xf] %vm5138, %v4738
        %5252 = vst.msk [vmem:[%s210 + $0x1c4] sm:$0xf] %vm5138, %v4739
        %5253 = vst.msk [vmem:[%s210 + $0x1c8] sm:$0xf] %vm5138, %v4740
        %5254 = vst.msk [vmem:[%s210 + $0x1cc] sm:$0xf] %vm5138, %v4741
        %5255 = vst.msk [vmem:[%s210 + $0x1d0] sm:$0xf] %vm5138, %v4742
        %5256 = vst.msk [vmem:[%s210 + $0x1d4] sm:$0xf] %vm5138, %v4743
        %5257 = vst.msk [vmem:[%s210 + $0x1d8] sm:$0xf] %vm5138, %v4744
        %5258 = vst.msk [vmem:[%s210 + $0x1dc] sm:$0xf] %vm5138, %v4745
        %5259 = vst.msk [vmem:[%s210 + $0x1e0] sm:$0xf] %vm5138, %v4746
        %5260 = vst.msk [vmem:[%s210 + $0x1e4] sm:$0xf] %vm5138, %v4747
        %5261 = vst.msk [vmem:[%s210 + $0x1e8] sm:$0xf] %vm5138, %v4748
        %5262 = vst.msk [vmem:[%s210 + $0x1ec] sm:$0xf] %vm5138, %v4749
        %5263 = vst.msk [vmem:[%s210 + $0x1f0] sm:$0xf] %vm5138, %v4750
        %5264 = vst.msk [vmem:[%s210 + $0x1f4] sm:$0xf] %vm5138, %v4751
        %5265 = vst.msk [vmem:[%s210 + $0x1f8] sm:$0xf] %vm5138, %v4752
        %5266 = vst.msk [vmem:[%s210 + $0x1fc] sm:$0xf] %vm5138, %v4753
        %5267 = vst.msk [vmem:[%s210 + $0x200] sm:$0xf] %vm5138, %v4754
        %5268 = vst.msk [vmem:[%s210 + $0x204] sm:$0xf] %vm5138, %v4755
        %5269 = vst.msk [vmem:[%s210 + $0x208] sm:$0xf] %vm5138, %v4756
        %5270 = vst.msk [vmem:[%s210 + $0x20c] sm:$0xf] %vm5138, %v4757
        %5271 = vst.msk [vmem:[%s210 + $0x210] sm:$0xf] %vm5138, %v4758
        %5272 = vst.msk [vmem:[%s210 + $0x214] sm:$0xf] %vm5138, %v4759
        %5273 = vst.msk [vmem:[%s210 + $0x218] sm:$0xf] %vm5138, %v4760
        %5274 = vst.msk [vmem:[%s210 + $0x21c] sm:$0xf] %vm5138, %v4761
        %5275 = vst.msk [vmem:[%s210 + $0x220] sm:$0xf] %vm5138, %v4762
        %5276 = vst.msk [vmem:[%s210 + $0x224] sm:$0xf] %vm5138, %v4763
        %5277 = vst.msk [vmem:[%s210 + $0x228] sm:$0xf] %vm5138, %v4764
        %5278 = vst.msk [vmem:[%s210 + $0x22c] sm:$0xf] %vm5138, %v4765
        %5279 = vst.msk [vmem:[%s210 + $0x230] sm:$0xf] %vm5138, %v4766
        %5280 = vst.msk [vmem:[%s210 + $0x234] sm:$0xf] %vm5138, %v4767
        %5281 = vst.msk [vmem:[%s210 + $0x238] sm:$0xf] %vm5138, %v4768
        %5282 = vst.msk [vmem:[%s210 + $0x23c] sm:$0xf] %vm5138, %v4769
        %5283 = vst.msk [vmem:[%s210 + $0x240] sm:$0xf] %vm5138, %v4770
        %5284 = vst.msk [vmem:[%s210 + $0x244] sm:$0xf] %vm5138, %v4771
        %5285 = vst.msk [vmem:[%s210 + $0x248] sm:$0xf] %vm5138, %v4772
        %5286 = vst.msk [vmem:[%s210 + $0x24c] sm:$0xf] %vm5138, %v4773
        %5287 = vst.msk [vmem:[%s210 + $0x250] sm:$0xf] %vm5138, %v4774
        %5288 = vst.msk [vmem:[%s210 + $0x254] sm:$0xf] %vm5138, %v4775
        %5289 = vst.msk [vmem:[%s210 + $0x258] sm:$0xf] %vm5138, %v4776
        %5290 = vst.msk [vmem:[%s210 + $0x25c] sm:$0xf] %vm5138, %v4777
        %5291 = vst.msk [vmem:[%s210 + $0x260] sm:$0xf] %vm5138, %v4778
        %5292 = vst.msk [vmem:[%s210 + $0x264] sm:$0xf] %vm5138, %v4779
        %5293 = vst.msk [vmem:[%s210 + $0x268] sm:$0xf] %vm5138, %v4780
        %5294 = vst.msk [vmem:[%s210 + $0x26c] sm:$0xf] %vm5138, %v4781
        %5295 = vst.msk [vmem:[%s210 + $0x270] sm:$0xf] %vm5138, %v4782
        %5296 = vst.msk [vmem:[%s210 + $0x274] sm:$0xf] %vm5138, %v4783
        %5297 = vst.msk [vmem:[%s210 + $0x278] sm:$0xf] %vm5138, %v4784
        %5298 = vst.msk [vmem:[%s210 + $0x27c] sm:$0xf] %vm5138, %v4785
        %5299 = vst.msk [vmem:[%s210 + $0x280] sm:$0xf] %vm5138, %v4786
        %5300 = vst.msk [vmem:[%s210 + $0x284] sm:$0xf] %vm5138, %v4787
        %5301 = vst.msk [vmem:[%s210 + $0x288] sm:$0xf] %vm5138, %v4788
        %5302 = vst.msk [vmem:[%s210 + $0x28c] sm:$0xf] %vm5138, %v4789
        %5303 = vst.msk [vmem:[%s210 + $0x290] sm:$0xf] %vm5138, %v4790
        %5304 = vst.msk [vmem:[%s210 + $0x294] sm:$0xf] %vm5138, %v4791
        %5305 = vst.msk [vmem:[%s210 + $0x298] sm:$0xf] %vm5138, %v4792
        %5306 = vst.msk [vmem:[%s210 + $0x29c] sm:$0xf] %vm5138, %v4793
        %5307 = vst.msk [vmem:[%s210 + $0x2a0] sm:$0xf] %vm5138, %v4794
        %5308 = vst.msk [vmem:[%s210 + $0x2a4] sm:$0xf] %vm5138, %v4795
        %5309 = vst.msk [vmem:[%s210 + $0x2a8] sm:$0xf] %vm5138, %v4796
        %5310 = vst.msk [vmem:[%s210 + $0x2ac] sm:$0xf] %vm5138, %v4797
        %5311 = vst.msk [vmem:[%s210 + $0x2b0] sm:$0xf] %vm5138, %v4798
        %5312 = vst.msk [vmem:[%s210 + $0x2b4] sm:$0xf] %vm5138, %v4799
        %5313 = vst.msk [vmem:[%s210 + $0x2b8] sm:$0xf] %vm5138, %v4800
        %5314 = vst.msk [vmem:[%s210 + $0x2bc] sm:$0xf] %vm5138, %v4801
        %5315 = vst.msk [vmem:[%s210 + $0x2c0] sm:$0xf] %vm5138, %v4802
        %5316 = vst.msk [vmem:[%s210 + $0x2c4] sm:$0xf] %vm5138, %v4803
        %5317 = vst.msk [vmem:[%s210 + $0x2c8] sm:$0xf] %vm5138, %v4804
        %5318 = vst.msk [vmem:[%s210 + $0x2cc] sm:$0xf] %vm5138, %v4805
        %5319 = vst.msk [vmem:[%s210 + $0x2d0] sm:$0xf] %vm5138, %v4806
        %5320 = vst.msk [vmem:[%s210 + $0x2d4] sm:$0xf] %vm5138, %v4807
        %5321 = vst.msk [vmem:[%s210 + $0x2d8] sm:$0xf] %vm5138, %v4808
        %5322 = vst.msk [vmem:[%s210 + $0x2dc] sm:$0xf] %vm5138, %v4809
        %5323 = vst.msk [vmem:[%s210 + $0x2e0] sm:$0xf] %vm5138, %v4810
        %5324 = vst.msk [vmem:[%s210 + $0x2e4] sm:$0xf] %vm5138, %v4811
        %5325 = vst.msk [vmem:[%s210 + $0x2e8] sm:$0xf] %vm5138, %v4812
        %5326 = vst.msk [vmem:[%s210 + $0x2ec] sm:$0xf] %vm5138, %v4813
        %5327 = vst.msk [vmem:[%s210 + $0x2f0] sm:$0xf] %vm5138, %v4814
        %5328 = vst.msk [vmem:[%s210 + $0x2f4] sm:$0xf] %vm5138, %v4815
        %5329 = vst.msk [vmem:[%s210 + $0x2f8] sm:$0xf] %vm5138, %v4816
        %5330 = vst.msk [vmem:[%s210 + $0x2fc] sm:$0xf] %vm5138, %v4817
        %5331 = vst.msk [vmem:[%s210 + $0x300] sm:$0xf] %vm5138, %v4818
        %5332 = vst.msk [vmem:[%s210 + $0x304] sm:$0xf] %vm5138, %v4819
        %5333 = vst.msk [vmem:[%s210 + $0x308] sm:$0xf] %vm5138, %v4820
        %5334 = vst.msk [vmem:[%s210 + $0x30c] sm:$0xf] %vm5138, %v4821
        %5335 = vst.msk [vmem:[%s210 + $0x310] sm:$0xf] %vm5138, %v4822
        %5336 = vst.msk [vmem:[%s210 + $0x314] sm:$0xf] %vm5138, %v4823
        %5337 = vst.msk [vmem:[%s210 + $0x318] sm:$0xf] %vm5138, %v4824
        %5338 = vst.msk [vmem:[%s210 + $0x31c] sm:$0xf] %vm5138, %v4825
        %5339 = vst.msk [vmem:[%s210 + $0x320] sm:$0xf] %vm5138, %v4826
        %5340 = vst.msk [vmem:[%s210 + $0x324] sm:$0xf] %vm5138, %v4827
        %5341 = vst.msk [vmem:[%s210 + $0x328] sm:$0xf] %vm5138, %v4828
        %5342 = vst.msk [vmem:[%s210 + $0x32c] sm:$0xf] %vm5138, %v4829
        %5343 = vst.msk [vmem:[%s210 + $0x330] sm:$0xf] %vm5138, %v4830
        %5344 = vst.msk [vmem:[%s210 + $0x334] sm:$0xf] %vm5138, %v4831
        %5345 = vst.msk [vmem:[%s210 + $0x338] sm:$0xf] %vm5138, %v4832
        %5346 = vst.msk [vmem:[%s210 + $0x33c] sm:$0xf] %vm5138, %v4833
        %5347 = vst.msk [vmem:[%s210 + $0x340] sm:$0xf] %vm5138, %v4834
        %5348 = vst.msk [vmem:[%s210 + $0x344] sm:$0xf] %vm5138, %v4835
        %5349 = vst.msk [vmem:[%s210 + $0x348] sm:$0xf] %vm5138, %v4836
        %5350 = vst.msk [vmem:[%s210 + $0x34c] sm:$0xf] %vm5138, %v4837
        %5351 = vst.msk [vmem:[%s210 + $0x350] sm:$0xf] %vm5138, %v4838
        %5352 = vst.msk [vmem:[%s210 + $0x354] sm:$0xf] %vm5138, %v4839
        %5353 = vst.msk [vmem:[%s210 + $0x358] sm:$0xf] %vm5138, %v4840
        %5354 = vst.msk [vmem:[%s210 + $0x35c] sm:$0xf] %vm5138, %v4841
        %5355 = vst.msk [vmem:[%s210 + $0x360] sm:$0xf] %vm5138, %v4842
        %5356 = vst.msk [vmem:[%s210 + $0x364] sm:$0xf] %vm5138, %v4843
        %5357 = vst.msk [vmem:[%s210 + $0x368] sm:$0xf] %vm5138, %v4844
        %5358 = vst.msk [vmem:[%s210 + $0x36c] sm:$0xf] %vm5138, %v4845
        %5359 = vst.msk [vmem:[%s210 + $0x370] sm:$0xf] %vm5138, %v4846
        %5360 = vst.msk [vmem:[%s210 + $0x374] sm:$0xf] %vm5138, %v4847
        %5361 = vst.msk [vmem:[%s210 + $0x378] sm:$0xf] %vm5138, %v4848
        %5362 = vst.msk [vmem:[%s210 + $0x37c] sm:$0xf] %vm5138, %v4849
        %5363 = vst.msk [vmem:[%s210 + $0x380] sm:$0xf] %vm5138, %v4850
        %5364 = vst.msk [vmem:[%s210 + $0x384] sm:$0xf] %vm5138, %v4851
        %5365 = vst.msk [vmem:[%s210 + $0x388] sm:$0xf] %vm5138, %v4852
        %5366 = vst.msk [vmem:[%s210 + $0x38c] sm:$0xf] %vm5138, %v4853
        %5367 = vst.msk [vmem:[%s210 + $0x390] sm:$0xf] %vm5138, %v4854
        %5368 = vst.msk [vmem:[%s210 + $0x394] sm:$0xf] %vm5138, %v4855
        %5369 = vst.msk [vmem:[%s210 + $0x398] sm:$0xf] %vm5138, %v4856
        %5370 = vst.msk [vmem:[%s210 + $0x39c] sm:$0xf] %vm5138, %v4857
        %5371 = vst.msk [vmem:[%s210 + $0x3a0] sm:$0xf] %vm5138, %v4858
        %5372 = vst.msk [vmem:[%s210 + $0x3a4] sm:$0xf] %vm5138, %v4859
        %5373 = vst.msk [vmem:[%s210 + $0x3a8] sm:$0xf] %vm5138, %v4860
        %5374 = vst.msk [vmem:[%s210 + $0x3ac] sm:$0xf] %vm5138, %v4861
        %5375 = vst.msk [vmem:[%s210 + $0x3b0] sm:$0xf] %vm5138, %v4862
        %5376 = vst.msk [vmem:[%s210 + $0x3b4] sm:$0xf] %vm5138, %v4863
        %5377 = vst.msk [vmem:[%s210 + $0x3b8] sm:$0xf] %vm5138, %v4864
        %5378 = vst.msk [vmem:[%s210 + $0x3bc] sm:$0xf] %vm5138, %v4865
        %5379 = vst.msk [vmem:[%s210 + $0x3c0] sm:$0xf] %vm5138, %v4866
        %5380 = vst.msk [vmem:[%s210 + $0x3c4] sm:$0xf] %vm5138, %v4867
        %5381 = vst.msk [vmem:[%s210 + $0x3c8] sm:$0xf] %vm5138, %v4868
        %5382 = vst.msk [vmem:[%s210 + $0x3cc] sm:$0xf] %vm5138, %v4869
        %5383 = vst.msk [vmem:[%s210 + $0x3d0] sm:$0xf] %vm5138, %v4870
        %5384 = vst.msk [vmem:[%s210 + $0x3d4] sm:$0xf] %vm5138, %v4871
        %5385 = vst.msk [vmem:[%s210 + $0x3d8] sm:$0xf] %vm5138, %v4872
        %5386 = vst.msk [vmem:[%s210 + $0x3dc] sm:$0xf] %vm5138, %v4873
        %5387 = vst.msk [vmem:[%s210 + $0x3e0] sm:$0xf] %vm5138, %v4874
        %5388 = vst.msk [vmem:[%s210 + $0x3e4] sm:$0xf] %vm5138, %v4875
        %5389 = vst.msk [vmem:[%s210 + $0x3e8] sm:$0xf] %vm5138, %v4876
        %5390 = vst.msk [vmem:[%s210 + $0x3ec] sm:$0xf] %vm5138, %v4877
        %5391 = vst.msk [vmem:[%s210 + $0x3f0] sm:$0xf] %vm5138, %v4878
        %5392 = vst.msk [vmem:[%s210 + $0x3f4] sm:$0xf] %vm5138, %v4879
        %5393 = vst.msk [vmem:[%s210 + $0x3f8] sm:$0xf] %vm5138, %v4880
        %5394 = vst.msk [vmem:[%s210 + $0x3fc] sm:$0xf] %vm5138, %v4881
        %5395 = vst.msk [vmem:[%s210 + $0x400] sm:$0xf] %vm5138, %v4882
        %5396 = vst.msk [vmem:[%s210 + $0x404] sm:$0xf] %vm5138, %v4883
        %5397 = vst.msk [vmem:[%s210 + $0x408] sm:$0xf] %vm5138, %v4884
        %5398 = vst.msk [vmem:[%s210 + $0x40c] sm:$0xf] %vm5138, %v4885
        %5399 = vst.msk [vmem:[%s210 + $0x410] sm:$0xf] %vm5138, %v4886
        %5400 = vst.msk [vmem:[%s210 + $0x414] sm:$0xf] %vm5138, %v4887
        %5401 = vst.msk [vmem:[%s210 + $0x418] sm:$0xf] %vm5138, %v4888
        %5402 = vst.msk [vmem:[%s210 + $0x41c] sm:$0xf] %vm5138, %v4889
        %5403 = vst.msk [vmem:[%s210 + $0x420] sm:$0xf] %vm5138, %v4890
        %5404 = vst.msk [vmem:[%s210 + $0x424] sm:$0xf] %vm5138, %v4891
        %5405 = vst.msk [vmem:[%s210 + $0x428] sm:$0xf] %vm5138, %v4892
        %5406 = vst.msk [vmem:[%s210 + $0x42c] sm:$0xf] %vm5138, %v4893
        %5407 = vst.msk [vmem:[%s210 + $0x430] sm:$0xf] %vm5138, %v4894
        %5408 = vst.msk [vmem:[%s210 + $0x434] sm:$0xf] %vm5138, %v4895
        %5409 = vst.msk [vmem:[%s210 + $0x438] sm:$0xf] %vm5138, %v4896
        %5410 = vst.msk [vmem:[%s210 + $0x43c] sm:$0xf] %vm5138, %v4897
        %5411 = vst.msk [vmem:[%s210 + $0x440] sm:$0xf] %vm5138, %v4898
        %5412 = vst.msk [vmem:[%s210 + $0x444] sm:$0xf] %vm5138, %v4899
        %5413 = vst.msk [vmem:[%s210 + $0x448] sm:$0xf] %vm5138, %v4900
        %5414 = vst.msk [vmem:[%s210 + $0x44c] sm:$0xf] %vm5138, %v4901
        %5415 = vst.msk [vmem:[%s210 + $0x450] sm:$0xf] %vm5138, %v4902
        %5416 = vst.msk [vmem:[%s210 + $0x454] sm:$0xf] %vm5138, %v4903
        %5417 = vst.msk [vmem:[%s210 + $0x458] sm:$0xf] %vm5138, %v4904
        %5418 = vst.msk [vmem:[%s210 + $0x45c] sm:$0xf] %vm5138, %v4905
        %5419 = vst.msk [vmem:[%s210 + $0x460] sm:$0xf] %vm5138, %v4906
        %5420 = vst.msk [vmem:[%s210 + $0x464] sm:$0xf] %vm5138, %v4907
        %5421 = vst.msk [vmem:[%s210 + $0x468] sm:$0xf] %vm5138, %v4908
        %5422 = vst.msk [vmem:[%s210 + $0x46c] sm:$0xf] %vm5138, %v4909
        %5423 = vst.msk [vmem:[%s210 + $0x470] sm:$0xf] %vm5138, %v4910
        %5424 = vst.msk [vmem:[%s210 + $0x474] sm:$0xf] %vm5138, %v4911
        %5425 = vst.msk [vmem:[%s210 + $0x478] sm:$0xf] %vm5138, %v4912
        %5426 = vst.msk [vmem:[%s210 + $0x47c] sm:$0xf] %vm5138, %v4913
        %5427 = vst.msk [vmem:[%s210 + $0x480] sm:$0xf] %vm5138, %v4914
        %5428 = vst.msk [vmem:[%s210 + $0x484] sm:$0xf] %vm5138, %v4915
        %5429 = vst.msk [vmem:[%s210 + $0x488] sm:$0xf] %vm5138, %v4916
        %5430 = vst.msk [vmem:[%s210 + $0x48c] sm:$0xf] %vm5138, %v4917
        %5431 = vst.msk [vmem:[%s210 + $0x490] sm:$0xf] %vm5138, %v4918
        %5432 = vst.msk [vmem:[%s210 + $0x494] sm:$0xf] %vm5138, %v4919
        %5433 = vst.msk [vmem:[%s210 + $0x498] sm:$0xf] %vm5138, %v4920
        %5434 = vst.msk [vmem:[%s210 + $0x49c] sm:$0xf] %vm5138, %v4921
        %5435 = vst.msk [vmem:[%s210 + $0x4a0] sm:$0xf] %vm5138, %v4922
        %5436 = vst.msk [vmem:[%s210 + $0x4a4] sm:$0xf] %vm5138, %v4923
        %5437 = vst.msk [vmem:[%s210 + $0x4a8] sm:$0xf] %vm5138, %v4924
        %5438 = vst.msk [vmem:[%s210 + $0x4ac] sm:$0xf] %vm5138, %v4925
        %5439 = vst.msk [vmem:[%s210 + $0x4b0] sm:$0xf] %vm5138, %v4926
        %5440 = vst.msk [vmem:[%s210 + $0x4b4] sm:$0xf] %vm5138, %v4927
        %5441 = vst.msk [vmem:[%s210 + $0x4b8] sm:$0xf] %vm5138, %v4928
        %5442 = vst.msk [vmem:[%s210 + $0x4bc] sm:$0xf] %vm5138, %v4929
        %5443 = vst.msk [vmem:[%s210 + $0x4c0] sm:$0xf] %vm5138, %v4930
        %5444 = vst.msk [vmem:[%s210 + $0x4c4] sm:$0xf] %vm5138, %v4931
        %5445 = vst.msk [vmem:[%s210 + $0x4c8] sm:$0xf] %vm5138, %v4932
        %5446 = vst.msk [vmem:[%s210 + $0x4cc] sm:$0xf] %vm5138, %v4933
        %5447 = vst.msk [vmem:[%s210 + $0x4d0] sm:$0xf] %vm5138, %v4934
        %5448 = vst.msk [vmem:[%s210 + $0x4d4] sm:$0xf] %vm5138, %v4935
        %5449 = vst.msk [vmem:[%s210 + $0x4d8] sm:$0xf] %vm5138, %v4936
        %5450 = vst.msk [vmem:[%s210 + $0x4dc] sm:$0xf] %vm5138, %v4937
        %5451 = vst.msk [vmem:[%s210 + $0x4e0] sm:$0xf] %vm5138, %v4938
        %5452 = vst.msk [vmem:[%s210 + $0x4e4] sm:$0xf] %vm5138, %v4939
        %5453 = vst.msk [vmem:[%s210 + $0x4e8] sm:$0xf] %vm5138, %v4940
        %5454 = vst.msk [vmem:[%s210 + $0x4ec] sm:$0xf] %vm5138, %v4941
        %5455 = vst.msk [vmem:[%s210 + $0x4f0] sm:$0xf] %vm5138, %v4942
        %5456 = vst.msk [vmem:[%s210 + $0x4f4] sm:$0xf] %vm5138, %v4943
        %5457 = vst.msk [vmem:[%s210 + $0x4f8] sm:$0xf] %vm5138, %v4944
        %5458 = vst.msk [vmem:[%s210 + $0x4fc] sm:$0xf] %vm5138, %v4945
        %5459 = vst.msk [vmem:[%s210 + $0x500] sm:$0xf] %vm5138, %v4946
        %5460 = vst.msk [vmem:[%s210 + $0x504] sm:$0xf] %vm5138, %v4947
        %5461 = vst.msk [vmem:[%s210 + $0x508] sm:$0xf] %vm5138, %v4948
        %5462 = vst.msk [vmem:[%s210 + $0x50c] sm:$0xf] %vm5138, %v4949
        %5463 = vst.msk [vmem:[%s210 + $0x510] sm:$0xf] %vm5138, %v4950
        %5464 = vst.msk [vmem:[%s210 + $0x514] sm:$0xf] %vm5138, %v4951
        %5465 = vst.msk [vmem:[%s210 + $0x518] sm:$0xf] %vm5138, %v4952
        %5466 = vst.msk [vmem:[%s210 + $0x51c] sm:$0xf] %vm5138, %v4953
        %5467 = vst.msk [vmem:[%s210 + $0x520] sm:$0xf] %vm5138, %v4954
        %5468 = vst.msk [vmem:[%s210 + $0x524] sm:$0xf] %vm5138, %v4955
        %5469 = vst.msk [vmem:[%s210 + $0x528] sm:$0xf] %vm5138, %v4956
        %5470 = vst.msk [vmem:[%s210 + $0x52c] sm:$0xf] %vm5138, %v4957
        %5471 = vst.msk [vmem:[%s210 + $0x530] sm:$0xf] %vm5138, %v4958
        %5472 = vst.msk [vmem:[%s210 + $0x534] sm:$0xf] %vm5138, %v4959
        %5473 = vst.msk [vmem:[%s210 + $0x538] sm:$0xf] %vm5138, %v4960
        %5474 = vst.msk [vmem:[%s210 + $0x53c] sm:$0xf] %vm5138, %v4961
        %5475 = vst.msk [vmem:[%s210 + $0x540] sm:$0xf] %vm5138, %v4962
        %5476 = vst.msk [vmem:[%s210 + $0x544] sm:$0xf] %vm5138, %v4963
        %5477 = vst.msk [vmem:[%s210 + $0x548] sm:$0xf] %vm5138, %v4964
        %5478 = vst.msk [vmem:[%s210 + $0x54c] sm:$0xf] %vm5138, %v4965
        %5479 = vst.msk [vmem:[%s210 + $0x550] sm:$0xf] %vm5138, %v4966
        %5480 = vst.msk [vmem:[%s210 + $0x554] sm:$0xf] %vm5138, %v4967
        %5481 = vst.msk [vmem:[%s210 + $0x558] sm:$0xf] %vm5138, %v4968
        %5482 = vst.msk [vmem:[%s210 + $0x55c] sm:$0xf] %vm5138, %v4969
        %5483 = vst.msk [vmem:[%s210 + $0x560] sm:$0xf] %vm5138, %v4970
        %5484 = vst.msk [vmem:[%s210 + $0x564] sm:$0xf] %vm5138, %v4971
        %5485 = vst.msk [vmem:[%s210 + $0x568] sm:$0xf] %vm5138, %v4972
        %5486 = vst.msk [vmem:[%s210 + $0x56c] sm:$0xf] %vm5138, %v4973
        %5487 = vst.msk [vmem:[%s210 + $0x570] sm:$0xf] %vm5138, %v4974
        %5488 = vst.msk [vmem:[%s210 + $0x574] sm:$0xf] %vm5138, %v4975
        %5489 = vst.msk [vmem:[%s210 + $0x578] sm:$0xf] %vm5138, %v4976
        %5490 = vst.msk [vmem:[%s210 + $0x57c] sm:$0xf] %vm5138, %v4977
        %5491 = vst.msk [vmem:[%s210 + $0x580] sm:$0xf] %vm5138, %v4978
        %5492 = vst.msk [vmem:[%s210 + $0x584] sm:$0xf] %vm5138, %v4979
        %5493 = vst.msk [vmem:[%s210 + $0x588] sm:$0xf] %vm5138, %v4980
        %5494 = vst.msk [vmem:[%s210 + $0x58c] sm:$0xf] %vm5138, %v4981
        %5495 = vst.msk [vmem:[%s210 + $0x590] sm:$0xf] %vm5138, %v4982
        %5496 = vst.msk [vmem:[%s210 + $0x594] sm:$0xf] %vm5138, %v4983
        %5497 = vst.msk [vmem:[%s210 + $0x598] sm:$0xf] %vm5138, %v4984
        %5498 = vst.msk [vmem:[%s210 + $0x59c] sm:$0xf] %vm5138, %v4985
        %5499 = vst.msk [vmem:[%s210 + $0x5a0] sm:$0xf] %vm5138, %v4986
        %5500 = vst.msk [vmem:[%s210 + $0x5a4] sm:$0xf] %vm5138, %v4987
        %5501 = vst.msk [vmem:[%s210 + $0x5a8] sm:$0xf] %vm5138, %v4988
        %5502 = vst.msk [vmem:[%s210 + $0x5ac] sm:$0xf] %vm5138, %v4989
        %5503 = vst.msk [vmem:[%s210 + $0x5b0] sm:$0xf] %vm5138, %v4990
        %5504 = vst.msk [vmem:[%s210 + $0x5b4] sm:$0xf] %vm5138, %v4991
        %5505 = vst.msk [vmem:[%s210 + $0x5b8] sm:$0xf] %vm5138, %v4992
        %5506 = vst.msk [vmem:[%s210 + $0x5bc] sm:$0xf] %vm5138, %v4993
        %5507 = vst.msk [vmem:[%s210 + $0x5c0] sm:$0xf] %vm5138, %v4994
        %5508 = vst.msk [vmem:[%s210 + $0x5c4] sm:$0xf] %vm5138, %v4995
        %5509 = vst.msk [vmem:[%s210 + $0x5c8] sm:$0xf] %vm5138, %v4996
        %5510 = vst.msk [vmem:[%s210 + $0x5cc] sm:$0xf] %vm5138, %v4997
        %5511 = vst.msk [vmem:[%s210 + $0x5d0] sm:$0xf] %vm5138, %v4998
        %5512 = vst.msk [vmem:[%s210 + $0x5d4] sm:$0xf] %vm5138, %v4999
        %5513 = vst.msk [vmem:[%s210 + $0x5d8] sm:$0xf] %vm5138, %v5000
        %5514 = vst.msk [vmem:[%s210 + $0x5dc] sm:$0xf] %vm5138, %v5001
        %5515 = vst.msk [vmem:[%s210 + $0x5e0] sm:$0xf] %vm5138, %v5002
        %5516 = vst.msk [vmem:[%s210 + $0x5e4] sm:$0xf] %vm5138, %v5003
        %5517 = vst.msk [vmem:[%s210 + $0x5e8] sm:$0xf] %vm5138, %v5004
        %5518 = vst.msk [vmem:[%s210 + $0x5ec] sm:$0xf] %vm5138, %v5005
        %5519 = vst.msk [vmem:[%s210 + $0x5f0] sm:$0xf] %vm5138, %v5006
        %5520 = vst.msk [vmem:[%s210 + $0x5f4] sm:$0xf] %vm5138, %v5007
        %5521 = vst.msk [vmem:[%s210 + $0x5f8] sm:$0xf] %vm5138, %v5008
        %5522 = vst.msk [vmem:[%s210 + $0x5fc] sm:$0xf] %vm5138, %v5009
        %5523 = vst.msk [vmem:[%s210 + $0x600] sm:$0xf] %vm5138, %v5010
        %5524 = vst.msk [vmem:[%s210 + $0x604] sm:$0xf] %vm5138, %v5011
        %5525 = vst.msk [vmem:[%s210 + $0x608] sm:$0xf] %vm5138, %v5012
        %5526 = vst.msk [vmem:[%s210 + $0x60c] sm:$0xf] %vm5138, %v5013
        %5527 = vst.msk [vmem:[%s210 + $0x610] sm:$0xf] %vm5138, %v5014
        %5528 = vst.msk [vmem:[%s210 + $0x614] sm:$0xf] %vm5138, %v5015
        %5529 = vst.msk [vmem:[%s210 + $0x618] sm:$0xf] %vm5138, %v5016
        %5530 = vst.msk [vmem:[%s210 + $0x61c] sm:$0xf] %vm5138, %v5017
        %5531 = vst.msk [vmem:[%s210 + $0x620] sm:$0xf] %vm5138, %v5018
        %5532 = vst.msk [vmem:[%s210 + $0x624] sm:$0xf] %vm5138, %v5019
        %5533 = vst.msk [vmem:[%s210 + $0x628] sm:$0xf] %vm5138, %v5020
        %5534 = vst.msk [vmem:[%s210 + $0x62c] sm:$0xf] %vm5138, %v5021
        %5535 = vst.msk [vmem:[%s210 + $0x630] sm:$0xf] %vm5138, %v5022
        %5536 = vst.msk [vmem:[%s210 + $0x634] sm:$0xf] %vm5138, %v5023
        %5537 = vst.msk [vmem:[%s210 + $0x638] sm:$0xf] %vm5138, %v5024
        %5538 = vst.msk [vmem:[%s210 + $0x63c] sm:$0xf] %vm5138, %v5025
        %5539 = vst.msk [vmem:[%s210 + $0x640] sm:$0xf] %vm5138, %v5026
        %5540 = vst.msk [vmem:[%s210 + $0x644] sm:$0xf] %vm5138, %v5027
        %5541 = vst.msk [vmem:[%s210 + $0x648] sm:$0xf] %vm5138, %v5028
        %5542 = vst.msk [vmem:[%s210 + $0x64c] sm:$0xf] %vm5138, %v5029
        %5543 = vst.msk [vmem:[%s210 + $0x650] sm:$0xf] %vm5138, %v5030
        %5544 = vst.msk [vmem:[%s210 + $0x654] sm:$0xf] %vm5138, %v5031
        %5545 = vst.msk [vmem:[%s210 + $0x658] sm:$0xf] %vm5138, %v5032
        %5546 = vst.msk [vmem:[%s210 + $0x65c] sm:$0xf] %vm5138, %v5033
        %5547 = vst.msk [vmem:[%s210 + $0x660] sm:$0xf] %vm5138, %v5034
        %5548 = vst.msk [vmem:[%s210 + $0x664] sm:$0xf] %vm5138, %v5035
        %5549 = vst.msk [vmem:[%s210 + $0x668] sm:$0xf] %vm5138, %v5036
        %5550 = vst.msk [vmem:[%s210 + $0x66c] sm:$0xf] %vm5138, %v5037
        %5551 = vst.msk [vmem:[%s210 + $0x670] sm:$0xf] %vm5138, %v5038
        %5552 = vst.msk [vmem:[%s210 + $0x674] sm:$0xf] %vm5138, %v5039
        %5553 = vst.msk [vmem:[%s210 + $0x678] sm:$0xf] %vm5138, %v5040
        %5554 = vst.msk [vmem:[%s210 + $0x67c] sm:$0xf] %vm5138, %v5041
        %5555 = vst.msk [vmem:[%s210 + $0x680] sm:$0xf] %vm5138, %v5042
        %5556 = vst.msk [vmem:[%s210 + $0x684] sm:$0xf] %vm5138, %v5043
        %5557 = vst.msk [vmem:[%s210 + $0x688] sm:$0xf] %vm5138, %v5044
        %5558 = vst.msk [vmem:[%s210 + $0x68c] sm:$0xf] %vm5138, %v5045
        %5559 = vst.msk [vmem:[%s210 + $0x690] sm:$0xf] %vm5138, %v5046
        %5560 = vst.msk [vmem:[%s210 + $0x694] sm:$0xf] %vm5138, %v5047
        %5561 = vst.msk [vmem:[%s210 + $0x698] sm:$0xf] %vm5138, %v5048
        %5562 = vst.msk [vmem:[%s210 + $0x69c] sm:$0xf] %vm5138, %v5049
        %5563 = vst.msk [vmem:[%s210 + $0x6a0] sm:$0xf] %vm5138, %v5050
        %5564 = vst.msk [vmem:[%s210 + $0x6a4] sm:$0xf] %vm5138, %v5051
        %5565 = vst.msk [vmem:[%s210 + $0x6a8] sm:$0xf] %vm5138, %v5052
        %5566 = vst.msk [vmem:[%s210 + $0x6ac] sm:$0xf] %vm5138, %v5053
        %5567 = vst.msk [vmem:[%s210 + $0x6b0] sm:$0xf] %vm5138, %v5054
        %5568 = vst.msk [vmem:[%s210 + $0x6b4] sm:$0xf] %vm5138, %v5055
        %5569 = vst.msk [vmem:[%s210 + $0x6b8] sm:$0xf] %vm5138, %v5056
        %5570 = vst.msk [vmem:[%s210 + $0x6bc] sm:$0xf] %vm5138, %v5057
        %5571 = vst.msk [vmem:[%s210 + $0x6c0] sm:$0xf] %vm5138, %v5058
        %5572 = vst.msk [vmem:[%s210 + $0x6c4] sm:$0xf] %vm5138, %v5059
        %5573 = vst.msk [vmem:[%s210 + $0x6c8] sm:$0xf] %vm5138, %v5060
        %5574 = vst.msk [vmem:[%s210 + $0x6cc] sm:$0xf] %vm5138, %v5061
        %5575 = vst.msk [vmem:[%s210 + $0x6d0] sm:$0xf] %vm5138, %v5062
        %5576 = vst.msk [vmem:[%s210 + $0x6d4] sm:$0xf] %vm5138, %v5063
        %5577 = vst.msk [vmem:[%s210 + $0x6d8] sm:$0xf] %vm5138, %v5064
        %5578 = vst.msk [vmem:[%s210 + $0x6dc] sm:$0xf] %vm5138, %v5065
        %5579 = vst.msk [vmem:[%s210 + $0x6e0] sm:$0xf] %vm5138, %v5066
        %5580 = vst.msk [vmem:[%s210 + $0x6e4] sm:$0xf] %vm5138, %v5067
        %5581 = vst.msk [vmem:[%s210 + $0x6e8] sm:$0xf] %vm5138, %v5068
        %5582 = vst.msk [vmem:[%s210 + $0x6ec] sm:$0xf] %vm5138, %v5069
        %5583 = vst.msk [vmem:[%s210 + $0x6f0] sm:$0xf] %vm5138, %v5070
        %5584 = vst.msk [vmem:[%s210 + $0x6f4] sm:$0xf] %vm5138, %v5071
        %5585 = vst.msk [vmem:[%s210 + $0x6f8] sm:$0xf] %vm5138, %v5072
        %5586 = vst.msk [vmem:[%s210 + $0x6fc] sm:$0xf] %vm5138, %v5073
        %5587 = vst.msk [vmem:[%s210 + $0x700] sm:$0xf] %vm5138, %v5074
        %5588 = vst.msk [vmem:[%s210 + $0x704] sm:$0xf] %vm5138, %v5075
        %5589 = vst.msk [vmem:[%s210 + $0x708] sm:$0xf] %vm5138, %v5076
        %5590 = vst.msk [vmem:[%s210 + $0x70c] sm:$0xf] %vm5138, %v5077
        %5591 = vst.msk [vmem:[%s210 + $0x710] sm:$0xf] %vm5138, %v5078
        %5592 = vst.msk [vmem:[%s210 + $0x714] sm:$0xf] %vm5138, %v5079
        %5593 = vst.msk [vmem:[%s210 + $0x718] sm:$0xf] %vm5138, %v5080
        %5594 = vst.msk [vmem:[%s210 + $0x71c] sm:$0xf] %vm5138, %v5081
        %5595 = vst.msk [vmem:[%s210 + $0x720] sm:$0xf] %vm5138, %v5082
        %5596 = vst.msk [vmem:[%s210 + $0x724] sm:$0xf] %vm5138, %v5083
        %5597 = vst.msk [vmem:[%s210 + $0x728] sm:$0xf] %vm5138, %v5084
        %5598 = vst.msk [vmem:[%s210 + $0x72c] sm:$0xf] %vm5138, %v5085
        %5599 = vst.msk [vmem:[%s210 + $0x730] sm:$0xf] %vm5138, %v5086
        %5600 = vst.msk [vmem:[%s210 + $0x734] sm:$0xf] %vm5138, %v5087
        %5601 = vst.msk [vmem:[%s210 + $0x738] sm:$0xf] %vm5138, %v5088
        %5602 = vst.msk [vmem:[%s210 + $0x73c] sm:$0xf] %vm5138, %v5089
        %5603 = vst.msk [vmem:[%s210 + $0x740] sm:$0xf] %vm5138, %v5090
        %5604 = vst.msk [vmem:[%s210 + $0x744] sm:$0xf] %vm5138, %v5091
        %5605 = vst.msk [vmem:[%s210 + $0x748] sm:$0xf] %vm5138, %v5092
        %5606 = vst.msk [vmem:[%s210 + $0x74c] sm:$0xf] %vm5138, %v5093
        %5607 = vst.msk [vmem:[%s210 + $0x750] sm:$0xf] %vm5138, %v5094
        %5608 = vst.msk [vmem:[%s210 + $0x754] sm:$0xf] %vm5138, %v5095
        %5609 = vst.msk [vmem:[%s210 + $0x758] sm:$0xf] %vm5138, %v5096
        %5610 = vst.msk [vmem:[%s210 + $0x75c] sm:$0xf] %vm5138, %v5097
        %5611 = vst.msk [vmem:[%s210 + $0x760] sm:$0xf] %vm5138, %v5098
        %5612 = vst.msk [vmem:[%s210 + $0x764] sm:$0xf] %vm5138, %v5099
        %5613 = vst.msk [vmem:[%s210 + $0x768] sm:$0xf] %vm5138, %v5100
        %5614 = vst.msk [vmem:[%s210 + $0x76c] sm:$0xf] %vm5138, %v5101
        %5615 = vst.msk [vmem:[%s210 + $0x770] sm:$0xf] %vm5138, %v5102
        %5616 = vst.msk [vmem:[%s210 + $0x774] sm:$0xf] %vm5138, %v5103
        %5617 = vst.msk [vmem:[%s210 + $0x778] sm:$0xf] %vm5138, %v5104
        %5618 = vst.msk [vmem:[%s210 + $0x77c] sm:$0xf] %vm5138, %v5105
        %5619 = vst.msk [vmem:[%s210 + $0x780] sm:$0xf] %vm5138, %v5106
        %5620 = vst.msk [vmem:[%s210 + $0x784] sm:$0xf] %vm5138, %v5107
        %5621 = vst.msk [vmem:[%s210 + $0x788] sm:$0xf] %vm5138, %v5108
        %5622 = vst.msk [vmem:[%s210 + $0x78c] sm:$0xf] %vm5138, %v5109
        %5623 = vst.msk [vmem:[%s210 + $0x790] sm:$0xf] %vm5138, %v5110
        %5624 = vst.msk [vmem:[%s210 + $0x794] sm:$0xf] %vm5138, %v5111
        %5625 = vst.msk [vmem:[%s210 + $0x798] sm:$0xf] %vm5138, %v5112
        %5626 = vst.msk [vmem:[%s210 + $0x79c] sm:$0xf] %vm5138, %v5113
        %5627 = vst.msk [vmem:[%s210 + $0x7a0] sm:$0xf] %vm5138, %v5114
        %5628 = vst.msk [vmem:[%s210 + $0x7a4] sm:$0xf] %vm5138, %v5115
        %5629 = vst.msk [vmem:[%s210 + $0x7a8] sm:$0xf] %vm5138, %v5116
        %5630 = vst.msk [vmem:[%s210 + $0x7ac] sm:$0xf] %vm5138, %v5117
        %5631 = vst.msk [vmem:[%s210 + $0x7b0] sm:$0xf] %vm5138, %v5118
        %5632 = vst.msk [vmem:[%s210 + $0x7b4] sm:$0xf] %vm5138, %v5119
        %5633 = vst.msk [vmem:[%s210 + $0x7b8] sm:$0xf] %vm5138, %v5120
        %5634 = vst.msk [vmem:[%s210 + $0x7bc] sm:$0xf] %vm5138, %v5121
        %5635 = vst.msk [vmem:[%s210 + $0x7c0] sm:$0xf] %vm5138, %v5122
        %5636 = vst.msk [vmem:[%s210 + $0x7c4] sm:$0xf] %vm5138, %v5123
        %5637 = vst.msk [vmem:[%s210 + $0x7c8] sm:$0xf] %vm5138, %v5124
        %5638 = vst.msk [vmem:[%s210 + $0x7cc] sm:$0xf] %vm5138, %v5125
        %5639 = vst.msk [vmem:[%s210 + $0x7d0] sm:$0xf] %vm5138, %v5126
        %5640 = vst.msk [vmem:[%s210 + $0x7d4] sm:$0xf] %vm5138, %v5127
        %5641 = vst.msk [vmem:[%s210 + $0x7d8] sm:$0xf] %vm5138, %v5128
        %5642 = vst.msk [vmem:[%s210 + $0x7dc] sm:$0xf] %vm5138, %v5129
        %5643 = vst.msk [vmem:[%s210 + $0x7e0] sm:$0xf] %vm5138, %v5130
        %5644 = vst.msk [vmem:[%s210 + $0x7e4] sm:$0xf] %vm5138, %v5131
        %5645 = vst.msk [vmem:[%s210 + $0x7e8] sm:$0xf] %vm5138, %v5132
        %5646 = vst.msk [vmem:[%s210 + $0x7ec] sm:$0xf] %vm5138, %v5133
        %5647 = vst.msk [vmem:[%s210 + $0x7f0] sm:$0xf] %vm5138, %v5134
        %5648 = vst.msk [vmem:[%s210 + $0x7f4] sm:$0xf] %vm5138, %v5135
        %5649 = vst.msk [vmem:[%s210 + $0x7f8] sm:$0xf] %vm5138, %v5136
        %5650 = vst.msk [vmem:[%s210 + $0x7fc] sm:$0xf] %vm5138, %v5137
        %s5651 = sand.u32 %s114, 1
        %s5652 = sand.u32 %s114, 1
        %s5653 = smul.addr %s5652, 2048
        %s5654 = scalar_lea.vmem [#allocation2], %s5653
        // Predicated region
        $region33: #{_conv_bn_relu.1} parent=31 // pred_check
          %p5655 = pneg %p124
        $region34: #{_conv_bn_relu.1} parent=31 // pred_check_branch
          %5657 = sbr.rel (%p5655) target = $region36
        $region35: #{_conv_bn_relu.1} parent=31 // pred_region
          %s5658 = smul.u32 512, %s18
          %s5659 = ssub.s32 2776, %s5658
          %p5660 = scmp.lt.s32.totalorder %s5659, 512
          %s5661 = scalar_select %p5660, %s5659, 512
          %s5662 = smul.u32 4, %s5661
          %p5663 = scmp.ne.s32.totalorder 0, %s5662
          %s5664 = sadd.s32 %s19, %s5658
          %s5665 = smul.addr %s5664, 4
          %s5666 = scalar_lea.vmem %s3, %s5665
          // Predicated region
          $region37: #{_conv_bn_relu.1} parent=35 // pred_check
            %p5667 = pneg %p5663
          $region38: #{_conv_bn_relu.1} parent=35 // pred_check_branch
            %5669 = sbr.rel (%p5667) target = $region40
          $region39: #{_conv_bn_relu.1} parent=35 // pred_region
            // Predicated region
            $region41: #{_conv_bn_relu.1} parent=39 // pred_check
              _
            $region42: #{_conv_bn_relu.1} parent=39 // pred_check_branch
              %5671 = sbr.rel target = $region44
            $region43: #{_conv_bn_relu.1} parent=39 // pred_region
              // Predicated region
              $region63: #{_conv_bn_relu.1} parent=43 // pred_check
                _
              $region64: #{_conv_bn_relu.1} parent=43 // pred_check_branch
                %5783 = sbr.rel (0) target = $region66
              $region65: #{_conv_bn_relu.1} parent=43 // pred_region
                %s5785 = ssub.s32 16, 1
                %s5786 = sshrl.u32 %s5661, 5
                // While loop
                $region67: #{_conv_bn_relu.1} parent=65 // loop_pre_header
                  _
                $region68: #{_conv_bn_relu.1} parent=65 // loop_header
                  %s5788 = sphi 0, %s5790
                  %p5789 = scmp.ge.s32.totalorder %s5788, %s5786
                  %s5793 = sphi 0, %s5862
                  %s5794 = sphi %s5654, %s5865
                  %s5795 = sphi %s5666, %s5866
                $region69: #{_conv_bn_relu.1} parent=65 // loop_header_branch
                  %5792 = sbr.rel (%p5789) target = $region73
                $region70: #{_conv_bn_relu.1} parent=65 // loop_body
                  %v5796 = vld [vmem:[%s5794] sm:%s5785]
                  %5797 = vst [vmem:[%s5795] sm:%s5785] %v5796
                  %v5798 = vld [vmem:[%s5794 + $0x4] sm:%s5785]
                  %5799 = vst [vmem:[%s5795 + $0x4] sm:%s5785] %v5798
                  %v5800 = vld [vmem:[%s5794 + $0x8] sm:%s5785]
                  %5801 = vst [vmem:[%s5795 + $0x8] sm:%s5785] %v5800
                  %v5802 = vld [vmem:[%s5794 + $0xc] sm:%s5785]
                  %5803 = vst [vmem:[%s5795 + $0xc] sm:%s5785] %v5802
                  %v5804 = vld [vmem:[%s5794 + $0x10] sm:%s5785]
                  %5805 = vst [vmem:[%s5795 + $0x10] sm:%s5785] %v5804
                  %v5806 = vld [vmem:[%s5794 + $0x14] sm:%s5785]
                  %5807 = vst [vmem:[%s5795 + $0x14] sm:%s5785] %v5806
                  %v5808 = vld [vmem:[%s5794 + $0x18] sm:%s5785]
                  %5809 = vst [vmem:[%s5795 + $0x18] sm:%s5785] %v5808
                  %v5810 = vld [vmem:[%s5794 + $0x1c] sm:%s5785]
                  %5811 = vst [vmem:[%s5795 + $0x1c] sm:%s5785] %v5810
                  %v5812 = vld [vmem:[%s5794 + $0x20] sm:%s5785]
                  %5813 = vst [vmem:[%s5795 + $0x20] sm:%s5785] %v5812
                  %v5814 = vld [vmem:[%s5794 + $0x24] sm:%s5785]
                  %5815 = vst [vmem:[%s5795 + $0x24] sm:%s5785] %v5814
                  %v5816 = vld [vmem:[%s5794 + $0x28] sm:%s5785]
                  %5817 = vst [vmem:[%s5795 + $0x28] sm:%s5785] %v5816
                  %v5818 = vld [vmem:[%s5794 + $0x2c] sm:%s5785]
                  %5819 = vst [vmem:[%s5795 + $0x2c] sm:%s5785] %v5818
                  %v5820 = vld [vmem:[%s5794 + $0x30] sm:%s5785]
                  %5821 = vst [vmem:[%s5795 + $0x30] sm:%s5785] %v5820
                  %v5822 = vld [vmem:[%s5794 + $0x34] sm:%s5785]
                  %5823 = vst [vmem:[%s5795 + $0x34] sm:%s5785] %v5822
                  %v5824 = vld [vmem:[%s5794 + $0x38] sm:%s5785]
                  %5825 = vst [vmem:[%s5795 + $0x38] sm:%s5785] %v5824
                  %v5826 = vld [vmem:[%s5794 + $0x3c] sm:%s5785]
                  %5827 = vst [vmem:[%s5795 + $0x3c] sm:%s5785] %v5826
                  %v5828 = vld [vmem:[%s5794 + $0x40] sm:%s5785]
                  %5829 = vst [vmem:[%s5795 + $0x40] sm:%s5785] %v5828
                  %v5830 = vld [vmem:[%s5794 + $0x44] sm:%s5785]
                  %5831 = vst [vmem:[%s5795 + $0x44] sm:%s5785] %v5830
                  %v5832 = vld [vmem:[%s5794 + $0x48] sm:%s5785]
                  %5833 = vst [vmem:[%s5795 + $0x48] sm:%s5785] %v5832
                  %v5834 = vld [vmem:[%s5794 + $0x4c] sm:%s5785]
                  %5835 = vst [vmem:[%s5795 + $0x4c] sm:%s5785] %v5834
                  %v5836 = vld [vmem:[%s5794 + $0x50] sm:%s5785]
                  %5837 = vst [vmem:[%s5795 + $0x50] sm:%s5785] %v5836
                  %v5838 = vld [vmem:[%s5794 + $0x54] sm:%s5785]
                  %5839 = vst [vmem:[%s5795 + $0x54] sm:%s5785] %v5838
                  %v5840 = vld [vmem:[%s5794 + $0x58] sm:%s5785]
                  %5841 = vst [vmem:[%s5795 + $0x58] sm:%s5785] %v5840
                  %v5842 = vld [vmem:[%s5794 + $0x5c] sm:%s5785]
                  %5843 = vst [vmem:[%s5795 + $0x5c] sm:%s5785] %v5842
                  %v5844 = vld [vmem:[%s5794 + $0x60] sm:%s5785]
                  %5845 = vst [vmem:[%s5795 + $0x60] sm:%s5785] %v5844
                  %v5846 = vld [vmem:[%s5794 + $0x64] sm:%s5785]
                  %5847 = vst [vmem:[%s5795 + $0x64] sm:%s5785] %v5846
                  %v5848 = vld [vmem:[%s5794 + $0x68] sm:%s5785]
                  %5849 = vst [vmem:[%s5795 + $0x68] sm:%s5785] %v5848
                  %v5850 = vld [vmem:[%s5794 + $0x6c] sm:%s5785]
                  %5851 = vst [vmem:[%s5795 + $0x6c] sm:%s5785] %v5850
                  %v5852 = vld [vmem:[%s5794 + $0x70] sm:%s5785]
                  %5853 = vst [vmem:[%s5795 + $0x70] sm:%s5785] %v5852
                  %v5854 = vld [vmem:[%s5794 + $0x74] sm:%s5785]
                  %5855 = vst [vmem:[%s5795 + $0x74] sm:%s5785] %v5854
                  %v5856 = vld [vmem:[%s5794 + $0x78] sm:%s5785]
                  %5857 = vst [vmem:[%s5795 + $0x78] sm:%s5785] %v5856
                  %v5858 = vld [vmem:[%s5794 + $0x7c] sm:%s5785]
                  %5859 = vst [vmem:[%s5795 + $0x7c] sm:%s5785] %v5858
                  %s5860 = sadd.s32 1, %s5793
                  %p5861 = scmp.ge.s32.totalorder %s5860, %s5786
                  %s5862 = scalar_select %p5861, 0, %s5860
                  %s5863 = smul.u32 %s5862, 128
                  %s5864 = smul.u32 %s5862, 128
                  %s5865 = scalar_lea.vmem %s5654, %s5863 [#allocation2]
                  %s5866 = scalar_lea.vmem %s5666, %s5864
                $region71: #{_conv_bn_relu.1} parent=65 // loop_footer
                  %s5790 = sadd.s32 %s5788, 1
                $region72: #{_conv_bn_relu.1} parent=65 // loop_footer_branch
                  %5787 = sbr.rel target = $region68
                $region73: #{_conv_bn_relu.1} parent=65 // loop_exit
                  _
                %s5867 = sshrl.u32 %s5661, 5
                %s5868 = sand.u32 %s5661, 31
                %s5869 = smul.u32 %s5867, 32
                %s5870 = smul.u32 4, %s5869
                %s5871 = scalar_lea.vmem %s5654, %s5870 [#allocation2]
                %s5872 = smul.u32 4, %s5869
                %s5873 = scalar_lea.vmem %s5666, %s5872
                // While loop
                $region74: #{_conv_bn_relu.1} parent=65 // loop_pre_header
                  _
                $region75: #{_conv_bn_relu.1} parent=65 // loop_header
                  %s5875 = sphi 0, %s5877
                  %p5876 = scmp.ge.s32.totalorder %s5875, %s5868
                  %s5880 = sphi 0, %s5887
                  %s5881 = sphi %s5871, %s5890
                  %s5882 = sphi %s5873, %s5891
                $region76: #{_conv_bn_relu.1} parent=65 // loop_header_branch
                  %5879 = sbr.rel (%p5876) target = $region80
                $region77: #{_conv_bn_relu.1} parent=65 // loop_body
                  %v5883 = vld [vmem:[%s5881] sm:%s5785]
                  %5884 = vst [vmem:[%s5882] sm:%s5785] %v5883
                  %s5885 = sadd.s32 1, %s5880
                  %p5886 = scmp.ge.s32.totalorder %s5885, %s5868
                  %s5887 = scalar_select %p5886, 0, %s5885
                  %s5888 = smul.u32 %s5887, 4
                  %s5889 = smul.u32 %s5887, 4
                  %s5890 = scalar_lea.vmem %s5871, %s5888 [#allocation2]
                  %s5891 = scalar_lea.vmem %s5873, %s5889
                $region78: #{_conv_bn_relu.1} parent=65 // loop_footer
                  %s5877 = sadd.s32 %s5875, 1
                $region79: #{_conv_bn_relu.1} parent=65 // loop_footer_branch
                  %5874 = sbr.rel target = $region75
                $region80: #{_conv_bn_relu.1} parent=65 // loop_exit
                  _
              $region66: #{_conv_bn_relu.1} parent=43 // pred_fallthru
                _
            $region44: #{_conv_bn_relu.1} parent=39 // pred_fallthru
              _
            // Predicated region
            $region45: #{_conv_bn_relu.1} parent=39 // pred_check
              _
            $region46: #{_conv_bn_relu.1} parent=39 // pred_check_branch
              %5673 = sbr.rel (0) target = $region48
            $region47: #{_conv_bn_relu.1} parent=39 // pred_region
              %s5675 = ssub.s32 16, 1
              %s5676 = sshrl.u32 %s5661, 5
              // While loop
              $region49: #{_conv_bn_relu.1} parent=47 // loop_pre_header
                _
              $region50: #{_conv_bn_relu.1} parent=47 // loop_header
                %s5678 = sphi 0, %s5680
                %p5679 = scmp.ge.s32.totalorder %s5678, %s5676
                %s5683 = sphi 0, %s5752
                %s5684 = sphi %s5654, %s5755
                %s5685 = sphi %s5666, %s5756
              $region51: #{_conv_bn_relu.1} parent=47 // loop_header_branch
                %5682 = sbr.rel (%p5679) target = $region55
              $region52: #{_conv_bn_relu.1} parent=47 // loop_body
                %v5686 = vld [vmem:[%s5684] sm:%s5675]
                %5687 = vst [vmem:[%s5685] sm:%s5675] %v5686
                %v5688 = vld [vmem:[%s5684 + $0x4] sm:%s5675]
                %5689 = vst [vmem:[%s5685 + $0x4] sm:%s5675] %v5688
                %v5690 = vld [vmem:[%s5684 + $0x8] sm:%s5675]
                %5691 = vst [vmem:[%s5685 + $0x8] sm:%s5675] %v5690
                %v5692 = vld [vmem:[%s5684 + $0xc] sm:%s5675]
                %5693 = vst [vmem:[%s5685 + $0xc] sm:%s5675] %v5692
                %v5694 = vld [vmem:[%s5684 + $0x10] sm:%s5675]
                %5695 = vst [vmem:[%s5685 + $0x10] sm:%s5675] %v5694
                %v5696 = vld [vmem:[%s5684 + $0x14] sm:%s5675]
                %5697 = vst [vmem:[%s5685 + $0x14] sm:%s5675] %v5696
                %v5698 = vld [vmem:[%s5684 + $0x18] sm:%s5675]
                %5699 = vst [vmem:[%s5685 + $0x18] sm:%s5675] %v5698
                %v5700 = vld [vmem:[%s5684 + $0x1c] sm:%s5675]
                %5701 = vst [vmem:[%s5685 + $0x1c] sm:%s5675] %v5700
                %v5702 = vld [vmem:[%s5684 + $0x20] sm:%s5675]
                %5703 = vst [vmem:[%s5685 + $0x20] sm:%s5675] %v5702
                %v5704 = vld [vmem:[%s5684 + $0x24] sm:%s5675]
                %5705 = vst [vmem:[%s5685 + $0x24] sm:%s5675] %v5704
                %v5706 = vld [vmem:[%s5684 + $0x28] sm:%s5675]
                %5707 = vst [vmem:[%s5685 + $0x28] sm:%s5675] %v5706
                %v5708 = vld [vmem:[%s5684 + $0x2c] sm:%s5675]
                %5709 = vst [vmem:[%s5685 + $0x2c] sm:%s5675] %v5708
                %v5710 = vld [vmem:[%s5684 + $0x30] sm:%s5675]
                %5711 = vst [vmem:[%s5685 + $0x30] sm:%s5675] %v5710
                %v5712 = vld [vmem:[%s5684 + $0x34] sm:%s5675]
                %5713 = vst [vmem:[%s5685 + $0x34] sm:%s5675] %v5712
                %v5714 = vld [vmem:[%s5684 + $0x38] sm:%s5675]
                %5715 = vst [vmem:[%s5685 + $0x38] sm:%s5675] %v5714
                %v5716 = vld [vmem:[%s5684 + $0x3c] sm:%s5675]
                %5717 = vst [vmem:[%s5685 + $0x3c] sm:%s5675] %v5716
                %v5718 = vld [vmem:[%s5684 + $0x40] sm:%s5675]
                %5719 = vst [vmem:[%s5685 + $0x40] sm:%s5675] %v5718
                %v5720 = vld [vmem:[%s5684 + $0x44] sm:%s5675]
                %5721 = vst [vmem:[%s5685 + $0x44] sm:%s5675] %v5720
                %v5722 = vld [vmem:[%s5684 + $0x48] sm:%s5675]
                %5723 = vst [vmem:[%s5685 + $0x48] sm:%s5675] %v5722
                %v5724 = vld [vmem:[%s5684 + $0x4c] sm:%s5675]
                %5725 = vst [vmem:[%s5685 + $0x4c] sm:%s5675] %v5724
                %v5726 = vld [vmem:[%s5684 + $0x50] sm:%s5675]
                %5727 = vst [vmem:[%s5685 + $0x50] sm:%s5675] %v5726
                %v5728 = vld [vmem:[%s5684 + $0x54] sm:%s5675]
                %5729 = vst [vmem:[%s5685 + $0x54] sm:%s5675] %v5728
                %v5730 = vld [vmem:[%s5684 + $0x58] sm:%s5675]
                %5731 = vst [vmem:[%s5685 + $0x58] sm:%s5675] %v5730
                %v5732 = vld [vmem:[%s5684 + $0x5c] sm:%s5675]
                %5733 = vst [vmem:[%s5685 + $0x5c] sm:%s5675] %v5732
                %v5734 = vld [vmem:[%s5684 + $0x60] sm:%s5675]
                %5735 = vst [vmem:[%s5685 + $0x60] sm:%s5675] %v5734
                %v5736 = vld [vmem:[%s5684 + $0x64] sm:%s5675]
                %5737 = vst [vmem:[%s5685 + $0x64] sm:%s5675] %v5736
                %v5738 = vld [vmem:[%s5684 + $0x68] sm:%s5675]
                %5739 = vst [vmem:[%s5685 + $0x68] sm:%s5675] %v5738
                %v5740 = vld [vmem:[%s5684 + $0x6c] sm:%s5675]
                %5741 = vst [vmem:[%s5685 + $0x6c] sm:%s5675] %v5740
                %v5742 = vld [vmem:[%s5684 + $0x70] sm:%s5675]
                %5743 = vst [vmem:[%s5685 + $0x70] sm:%s5675] %v5742
                %v5744 = vld [vmem:[%s5684 + $0x74] sm:%s5675]
                %5745 = vst [vmem:[%s5685 + $0x74] sm:%s5675] %v5744
                %v5746 = vld [vmem:[%s5684 + $0x78] sm:%s5675]
                %5747 = vst [vmem:[%s5685 + $0x78] sm:%s5675] %v5746
                %v5748 = vld [vmem:[%s5684 + $0x7c] sm:%s5675]
                %5749 = vst [vmem:[%s5685 + $0x7c] sm:%s5675] %v5748
                %s5750 = sadd.s32 1, %s5683
                %p5751 = scmp.ge.s32.totalorder %s5750, %s5676
                %s5752 = scalar_select %p5751, 0, %s5750
                %s5753 = smul.u32 %s5752, 128
                %s5754 = smul.u32 %s5752, 128
                %s5755 = scalar_lea.vmem %s5654, %s5753 [#allocation2]
                %s5756 = scalar_lea.vmem %s5666, %s5754
              $region53: #{_conv_bn_relu.1} parent=47 // loop_footer
                %s5680 = sadd.s32 %s5678, 1
              $region54: #{_conv_bn_relu.1} parent=47 // loop_footer_branch
                %5677 = sbr.rel target = $region50
              $region55: #{_conv_bn_relu.1} parent=47 // loop_exit
                _
              %s5757 = sshrl.u32 %s5661, 5
              %s5758 = sand.u32 %s5661, 31
              %s5759 = smul.u32 %s5757, 32
              %s5760 = smul.u32 4, %s5759
              %s5761 = scalar_lea.vmem %s5654, %s5760 [#allocation2]
              %s5762 = smul.u32 4, %s5759
              %s5763 = scalar_lea.vmem %s5666, %s5762
              // While loop
              $region56: #{_conv_bn_relu.1} parent=47 // loop_pre_header
                _
              $region57: #{_conv_bn_relu.1} parent=47 // loop_header
                %s5765 = sphi 0, %s5767
                %p5766 = scmp.ge.s32.totalorder %s5765, %s5758
                %s5770 = sphi 0, %s5777
                %s5771 = sphi %s5761, %s5780
                %s5772 = sphi %s5763, %s5781
              $region58: #{_conv_bn_relu.1} parent=47 // loop_header_branch
                %5769 = sbr.rel (%p5766) target = $region62
              $region59: #{_conv_bn_relu.1} parent=47 // loop_body
                %v5773 = vld [vmem:[%s5771] sm:%s5675]
                %5774 = vst [vmem:[%s5772] sm:%s5675] %v5773
                %s5775 = sadd.s32 1, %s5770
                %p5776 = scmp.ge.s32.totalorder %s5775, %s5758
                %s5777 = scalar_select %p5776, 0, %s5775
                %s5778 = smul.u32 %s5777, 4
                %s5779 = smul.u32 %s5777, 4
                %s5780 = scalar_lea.vmem %s5761, %s5778 [#allocation2]
                %s5781 = scalar_lea.vmem %s5763, %s5779
              $region60: #{_conv_bn_relu.1} parent=47 // loop_footer
                %s5767 = sadd.s32 %s5765, 1
              $region61: #{_conv_bn_relu.1} parent=47 // loop_footer_branch
                %5764 = sbr.rel target = $region57
              $region62: #{_conv_bn_relu.1} parent=47 // loop_exit
                _
            $region48: #{_conv_bn_relu.1} parent=39 // pred_fallthru
              _
          $region40: #{_conv_bn_relu.1} parent=35 // pred_fallthru
            _
          %5892 = vnop
        $region36: #{_conv_bn_relu.1} parent=31 // pred_fallthru
          _
      $region32: #{_conv_bn_relu.1} parent=5 // pred_fallthru
        _
      %p5893 = scmp.le.s32.totalorder 2, %s9
      // Predicated region
      $region81: #{_conv_bn_relu.1} parent=5 // pred_check
        %p5894 = pneg %p5893
      $region82: #{_conv_bn_relu.1} parent=5 // pred_check_branch
        %5896 = sbr.rel (%p5894) target = $region84
      $region83: #{_conv_bn_relu.1} parent=5 // pred_region
        %s5897 = ssub.s32 %s9, 2
        // Predicated region
        $region85: #{_conv_bn_relu.1} parent=83 // pred_check
          %p5898 = pneg %p130
        $region86: #{_conv_bn_relu.1} parent=83 // pred_check_branch
          %5900 = sbr.rel (%p5898) target = $region88
        $region87: #{_conv_bn_relu.1} parent=83 // pred_region
          %s5901 = sand.u32 %s115, 1
          %s5902 = sand.u32 %s115, 1
          %s5903 = smul.addr %s5902, 2048
          %s5904 = scalar_lea.vmem [#allocation2], %s5903
        $region88: #{_conv_bn_relu.1} parent=83 // pred_fallthru
          _
      $region84: #{_conv_bn_relu.1} parent=5 // pred_fallthru
        _
    $region6: #{_conv_bn_relu.1} parent=1 // loop_footer
      %s13 = sadd.s32 1, %s9
    $region7: #{_conv_bn_relu.1} parent=1 // loop_footer_branch
      %8 = sbr.rel target = $region3
    $region8: #{_conv_bn_relu.1} parent=1 // loop_exit
      _

</llo_original>
